<compile_context>
chip_gen: v7x
topology: tpu7x:2x2x1
jax: 0.10.0
libtpu: 0.0.40
codegen_flags: <defaults>
</compile_context>

<pallas_src>
import functools

import jax
import jax.numpy as jnp
from jax import lax
from jax.experimental import pallas as pl
from jax.experimental.pallas import tpu as pltpu


# ---------------------------------------------------------------------------
# Graph setup glue (plain JAX — mirrors calculate_laplacian_with_self_loop)
# ---------------------------------------------------------------------------
def calculate_laplacian_with_self_loop(adj):
    n = adj.shape[0]
    m = adj + jnp.eye(n, dtype=adj.dtype)
    row_sum = m.sum(axis=1)
    d_inv_sqrt = jnp.power(row_sum, -0.5)
    d_inv_sqrt = jnp.where(jnp.isinf(d_inv_sqrt), 0.0, d_inv_sqrt)
    d_mat_inv_sqrt = jnp.diag(d_inv_sqrt)
    return (m @ d_mat_inv_sqrt).T @ d_mat_inv_sqrt


# ---------------------------------------------------------------------------
# Fused recurrence kernel: one grid step = one batch element's full T-step GRU.
#   xz_ref : (1, T, N, 3H)  precomputed x contributions [rx | ux | cx] (bias included)
#   lru_ref: (2N, N)        row-gathered Laplacian [L[n//2] ; L[N//2 + n//2]]
#   lap_ref: (N, N)         Laplacian (for conv2's L @ (r*h))
#   w1h_ref: (H, 2H)        hidden-state rows of conv1 weights (kept fused)
#   w2h_ref: (H, H)         hidden-state rows of conv2 weights
#   o_ref  : (1, N, H)      final hidden state (single store per batch element)
# ---------------------------------------------------------------------------
def _tgcn_recurrence_kernel(xz_ref, lru_ref, lap_ref, w1h_ref, w2h_ref, o_ref):
    _, T, N, threeH = xz_ref.shape
    H = threeH // 3
    f32 = jnp.float32

    lru = lru_ref[...]
    lap = lap_ref[...]
    w1h = w1h_ref[...]
    w2h = w2h_ref[...]

    # Row-parity mask implementing the reference's chunk-on-flattened-(N*2H) column select.
    even = (lax.broadcasted_iota(jnp.int32, (N, H), 0) % 2) == 0

    def step(t, h):
        xz = xz_ref[0, t]                                   # (N, 3H)
        rx, ux, cx = xz[:, :H], xz[:, H:2 * H], xz[:, 2 * H:]

        # h-contribution to both gates: one (2N,N)@(N,H) + one (2N,H)@(H,2H) matmul.
        lh = jnp.dot(lru, h, preferred_element_type=f32)    # (2N, H)
        gh = jnp.dot(lh, w1h, preferred_element_type=f32)   # (2N, 2H)
        gh_r, gh_u = gh[:N], gh[N:]

        r = jax.nn.sigmoid(rx + jnp.where(even, gh_r[:, :H], gh_r[:, H:]))
        u = jax.nn.sigmoid(ux + jnp.where(even, gh_u[:, :H], gh_u[:, H:]))

        # conv2 (h-dependent part): c = tanh(cx + (L @ (r*h)) @ W2h)
        lrh = jnp.dot(lap, r * h, preferred_element_type=f32)               # (N, H)
        c = jnp.tanh(cx + jnp.dot(lrh, w2h, preferred_element_type=f32))    # (N, H)

        return u * h + (1.0 - u) * c

    h0 = jnp.zeros((N, H), dtype=f32)
    h_final = lax.fori_loop(0, T, step, h0, unroll=True)
    o_ref[0] = h_final.astype(o_ref.dtype)


# ---------------------------------------------------------------------------
# Forward wrapper: hoists all x-only work into one batched GEMM, builds the
# row-gathered Laplacian, and launches a single pallas_call over grid (B,).
# ---------------------------------------------------------------------------
def tgcn_forward(params, laplacian, inputs, hidden_dim):
    B, T, N, C = inputs.shape
    H = hidden_dim
    assert N % 2 == 0, "even node count required by the flattened-chunk gate split"
    w1, b1 = params["w1"], params["b1"]
    w2, b2 = params["w2"], params["b2"]
    assert w1.shape == (C + H, 2 * H) and w2.shape == (C + H, H)

    f32 = jnp.float32
    lap = laplacian.astype(f32)
    w1x, w1h = w1[:C], w1[C:]          # (C, 2H), (H, 2H)
    w2x, w2h = w2[:C], w2[C:]          # (C, H),  (H, H)

    # --- x-only path hoisted out of the recurrence: one batched GEMM over all (B,T) ---
    lx = jnp.einsum('ij,btjc->btic', lap, inputs.astype(f32))      # (B, T, N, C)
    gx = jnp.einsum('btnc,cd->btnd', lx, w1x) + b1                 # (B, T, N, 2H) (+bias once)
    cx = jnp.einsum('btnc,cd->btnd', lx, w2x) + b2                 # (B, T, N, H)

    # Gather gx into the reference's flattened-chunk layout:
    #   r[n,h] = G[n//2, (n%2)*H + h],  u[n,h] = G[N//2 + n//2, (n%2)*H + h]
    n_idx = jnp.arange(N)
    rows_r = n_idx // 2
    rows_u = N // 2 + n_idx // 2
    even = (n_idx % 2 == 0)[:, None]                               # (N, 1)
    gx_r = gx[:, :, rows_r, :]                                     # (B, T, N, 2H)
    gx_u = gx[:, :, rows_u, :]
    rx = jnp.where(even, gx_r[..., :H], gx_r[..., H:])             # (B, T, N, H)
    ux = jnp.where(even, gx_u[..., :H], gx_u[..., H:])
    xz = jnp.concatenate([rx, ux, cx], axis=-1).astype(f32)        # (B, T, N, 3H) lane-dense

    # Row-gathered Laplacian so the h-contribution to r/u is a single matmul per step.
    lru = jnp.concatenate([lap[rows_r], lap[rows_u]], axis=0)      # (2N, N)

    return pl.pallas_call(
        _tgcn_recurrence_kernel,
        out_shape=jax.ShapeDtypeStruct((B, N, H), f32),
        grid=(B,),
        in_specs=[
            pl.BlockSpec((1, T, N, 3 * H), lambda b: (b, 0, 0, 0)),  # whole sequence per b
            pl.BlockSpec((2 * N, N), lambda b: (0, 0)),              # lru (VMEM resident)
            pl.BlockSpec((N, N), lambda b: (0, 0)),                  # laplacian
            pl.BlockSpec((H, 2 * H), lambda b: (0, 0)),              # w1h (fused halves)
            pl.BlockSpec((H, H), lambda b: (0, 0)),                  # w2h
        ],
        out_specs=pl.BlockSpec((1, N, H), lambda b: (b, 0, 0)),
        compiler_params=pltpu.CompilerParams(
            # B is the only parallel axis -> lets v7x's 2 TensorCores split the batch.
            dimension_semantics=("parallel",)),
    )(xz, lru, lap, w1h.astype(f32), w2h.astype(f32))


# ---------------------------------------------------------------------------
# Pure-JAX reference mirroring the PyTorch module exactly (for validation).
# ---------------------------------------------------------------------------
def tgcn_reference(params, laplacian, inputs, hidden_dim):
    B, T, N, C = inputs.shape
    H = hidden_dim

    def graph_conv(x, h_flat, w, b):
        h3 = h_flat.reshape(B, N, H)
        cat = jnp.concatenate([x, h3], axis=-1)                      # (B, N, C+H)
        a = jnp.einsum('ij,bjf->bif', laplacian, cat)                # (B, N, C+H)
        out = a.reshape(B * N, C + H) @ w + b
        return out.reshape(B, N * w.shape[1])

    hidden = jnp.zeros((B, N * H), dtype=inputs.dtype)
    output = None
    for t in range(T):
        x_t = inputs[:, t]
        g1 = jax.nn.sigmoid(graph_conv(x_t, hidden, params["w1"], params["b1"]))
        r, u = g1[:, :N * H], g1[:, N * H:]
        c = jnp.tanh(graph_conv(x_t, r * hidden, params["w2"], params["b2"]))
        hidden = u * hidden + (1.0 - u) * c
        output = hidden.reshape(B, N, H)
    return output


# ---------------------------------------------------------------------------
# Deterministic parameter init (xavier_uniform for weights, constants for bias)
# ---------------------------------------------------------------------------
def init_params(key, num_nodes, hidden_dim, input_feat):
    H = hidden_dim
    assert input_feat == 2, "TGCN graph conv weights are (H+2, D) -> input feature dim must be 2"
    k1, k2 = jax.random.split(key)

    def xavier(k, fan_in, fan_out):
        bound = (6.0 / (fan_in + fan_out)) ** 0.5
        return jax.random.uniform(k, (fan_in, fan_out), jnp.float32, -bound, bound)

    return {
        "w1": xavier(k1, H + 2, 2 * H),
        "b1": jnp.full((2 * H,), 1.0, dtype=jnp.float32),
        "w2": xavier(k2, H + 2, H),
        "b2": jnp.zeros((H,), dtype=jnp.float32),
    }


if __name__ == "__main__":
    B, T, N, C, H = 2, 8, 16, 2, 32   # batch, seq, num_nodes, feat (=2), hidden

    key = jax.random.PRNGKey(0)
    k_adj, k_x, k_p = jax.random.split(key, 3)

    # deterministic symmetric binary adjacency
    a = (jax.random.uniform(k_adj, (N, N)) > 0.6).astype(jnp.float32)
    adj = jnp.maximum(a, a.T) * (1.0 - jnp.eye(N, dtype=jnp.float32))

    laplacian = calculate_laplacian_with_self_loop(adj)
    params = init_params(k_p, N, H, C)
    inputs = jax.random.normal(k_x, (B, T, N, C), dtype=jnp.float32)

    fwd = jax.jit(functools.partial(tgcn_forward, hidden_dim=H))
    out = fwd(params, laplacian, inputs)
    jax.block_until_ready(out)
    assert out.shape == (B, N, H)

    ref = tgcn_reference(params, laplacian, inputs, H)
    max_err = float(jnp.max(jnp.abs(out - ref)))
    assert max_err < 1e-3, f"mismatch vs reference: {max_err}"

    print("KERNEL_OK")
</pallas_src>

<mosaic_0001>
module attributes {stable_mosaic.version = 11 : i64} {
  func.func @_tgcn_recurrence_kernel(%arg0: i32, %arg1: memref<1x8x16x96xf32, #tpu.memory_space<vmem>>, %arg2: memref<32x16xf32, #tpu.memory_space<vmem>>, %arg3: memref<16x16xf32, #tpu.memory_space<vmem>>, %arg4: memref<32x64xf32, #tpu.memory_space<vmem>>, %arg5: memref<32x32xf32, #tpu.memory_space<vmem>>, %arg6: memref<1x16x32xf32, #tpu.memory_space<vmem>>) attributes {dimension_semantics = [#tpu.dimension_semantics<parallel>], iteration_bounds = array<i64: 2>, scalar_prefetch = 0 : i64, scratch_operands = 0 : i64, tpu.core_type = #tpu.core_type<tc>, window_params = [{transform_indices = @transform_0, window_bounds = array<i64: 1, 8, 16, 96>}, {pipeline_mode = #tpu.pipeline_mode<synchronous>, transform_indices = @transform_1, window_bounds = array<i64: 32, 16>}, {pipeline_mode = #tpu.pipeline_mode<synchronous>, transform_indices = @transform_2, window_bounds = array<i64: 16, 16>}, {pipeline_mode = #tpu.pipeline_mode<synchronous>, transform_indices = @transform_3, window_bounds = array<i64: 32, 64>}, {pipeline_mode = #tpu.pipeline_mode<synchronous>, transform_indices = @transform_4, window_bounds = array<i64: 32, 32>}, {transform_indices = @transform_5, window_bounds = array<i64: 1, 16, 32>}]} {
    %c0 = arith.constant 0 : index
    %c0_0 = arith.constant 0 : index
    %0 = vector.load %arg2[%c0, %c0_0] : memref<32x16xf32, #tpu.memory_space<vmem>>, vector<32x16xf32>
    %c0_1 = arith.constant 0 : index
    %c0_2 = arith.constant 0 : index
    %1 = vector.load %arg3[%c0_1, %c0_2] : memref<16x16xf32, #tpu.memory_space<vmem>>, vector<16x16xf32>
    %c0_3 = arith.constant 0 : index
    %c0_4 = arith.constant 0 : index
    %2 = vector.load %arg4[%c0_3, %c0_4] : memref<32x64xf32, #tpu.memory_space<vmem>>, vector<32x64xf32>
    %c0_5 = arith.constant 0 : index
    %c0_6 = arith.constant 0 : index
    %3 = vector.load %arg5[%c0_5, %c0_6] : memref<32x32xf32, #tpu.memory_space<vmem>>, vector<32x32xf32>
    %4 = tpu.iota {dimensions = array<i32: 0>} : vector<16x32xi32>
    %c2_i32 = arith.constant 2 : i32
    %c0_i32 = arith.constant 0 : i32
    %5 = arith.cmpi eq, %c2_i32, %c0_i32 : i32
    %c1_i32 = arith.constant 1 : i32
    %6 = arith.select %5, %c1_i32, %c2_i32 : i32
    %7 = vector.broadcast %6 : i32 to vector<16x32xi32>
    %8 = arith.remsi %4, %7 : vector<16x32xi32>
    %c0_i32_7 = arith.constant 0 : i32
    %9 = vector.broadcast %c0_i32_7 : i32 to vector<16x32xi32>
    %10 = arith.cmpi ne, %8, %9 : vector<16x32xi32>
    %c0_i32_8 = arith.constant 0 : i32
    %11 = vector.broadcast %c0_i32_8 : i32 to vector<16x32xi32>
    %12 = arith.cmpi slt, %8, %11 : vector<16x32xi32>
    %c0_i32_9 = arith.constant 0 : i32
    %13 = arith.cmpi slt, %6, %c0_i32_9 : i32
    %14 = vector.broadcast %13 : i1 to vector<16x32xi1>
    %15 = vector.broadcast %14 : vector<16x32xi1> to vector<16x32xi1>
    %16 = arith.xori %12, %15 : vector<16x32xi1>
    %17 = arith.andi %16, %10 : vector<16x32xi1>
    %18 = vector.broadcast %6 : i32 to vector<16x32xi32>
    %19 = arith.addi %8, %18 : vector<16x32xi32>
    %20 = arith.select %17, %19, %8 : vector<16x32xi1>, vector<16x32xi32>
    %c0_i32_10 = arith.constant 0 : i32
    %21 = vector.broadcast %c0_i32_10 : i32 to vector<16x32xi32>
    %22 = arith.cmpi eq, %20, %21 : vector<16x32xi32>
    %cst = arith.constant 0.000000e+00 : f32
    %23 = vector.broadcast %cst : f32 to vector<16x32xf32>
    %c0_i32_11 = arith.constant 0 : i32
    %c0_12 = arith.constant 0 : index
    %24 = arith.index_cast %c0_i32_11 : i32 to index
    %c0_13 = arith.constant 0 : index
    %c0_14 = arith.constant 0 : index
    %25 = vector.load %arg1[%c0_12, %24, %c0_13, %c0_14] : memref<1x8x16x96xf32, #tpu.memory_space<vmem>>, vector<1x1x16x96xf32>
    %26 = vector.shape_cast %25 : vector<1x1x16x96xf32> to vector<16x96xf32>
    %27 = vector.extract_strided_slice %26 {offsets = [0, 0], sizes = [16, 32], strides = [1, 1]} : vector<16x96xf32> to vector<16x32xf32>
    %28 = vector.extract_strided_slice %26 {offsets = [0, 32], sizes = [16, 32], strides = [1, 1]} : vector<16x96xf32> to vector<16x32xf32>
    %29 = vector.extract_strided_slice %26 {offsets = [0, 64], sizes = [16, 32], strides = [1, 1]} : vector<16x96xf32> to vector<16x32xf32>
    %cst_15 = arith.constant dense<0.000000e+00> : vector<32x32xf32>
    %30 = tpu.matmul %0, %23, %cst_15 {dimension_numbers = #tpu.dot_dimension_numbers<[1], [0], [0], [1], [0, 0, 1, 1], [], []>} : vector<32x16xf32>, vector<16x32xf32>, vector<32x32xf32> -> vector<32x32xf32>
    %cst_16 = arith.constant dense<0.000000e+00> : vector<32x64xf32>
    %31 = tpu.matmul %30, %2, %cst_16 {dimension_numbers = #tpu.dot_dimension_numbers<[1], [0], [0], [1], [0, 0, 1, 1], [], []>} : vector<32x32xf32>, vector<32x64xf32>, vector<32x64xf32> -> vector<32x64xf32>
    %32 = vector.extract_strided_slice %31 {offsets = [0, 0], sizes = [16, 64], strides = [1, 1]} : vector<32x64xf32> to vector<16x64xf32>
    %33 = vector.extract_strided_slice %31 {offsets = [16, 0], sizes = [16, 64], strides = [1, 1]} : vector<32x64xf32> to vector<16x64xf32>
    %34 = vector.extract_strided_slice %32 {offsets = [0, 0], sizes = [16, 32], strides = [1, 1]} : vector<16x64xf32> to vector<16x32xf32>
    %35 = vector.extract_strided_slice %32 {offsets = [0, 32], sizes = [16, 32], strides = [1, 1]} : vector<16x64xf32> to vector<16x32xf32>
    %36 = arith.select %22, %34, %35 : vector<16x32xi1>, vector<16x32xf32>
    %37 = arith.addf %27, %36 : vector<16x32xf32>
    %38 = arith.negf %37 : vector<16x32xf32>
    %39 = math.exp %38 : vector<16x32xf32>
    %cst_17 = arith.constant 1.000000e+00 : f32
    %40 = vector.broadcast %cst_17 : f32 to vector<16x32xf32>
    %41 = arith.addf %40, %39 : vector<16x32xf32>
    %42 = arith.divf %40, %41 : vector<16x32xf32>
    %43 = vector.extract_strided_slice %33 {offsets = [0, 0], sizes = [16, 32], strides = [1, 1]} : vector<16x64xf32> to vector<16x32xf32>
    %44 = vector.extract_strided_slice %33 {offsets = [0, 32], sizes = [16, 32], strides = [1, 1]} : vector<16x64xf32> to vector<16x32xf32>
    %45 = arith.select %22, %43, %44 : vector<16x32xi1>, vector<16x32xf32>
    %46 = arith.addf %28, %45 : vector<16x32xf32>
    %47 = arith.negf %46 : vector<16x32xf32>
    %48 = math.exp %47 : vector<16x32xf32>
    %cst_18 = arith.constant 1.000000e+00 : f32
    %49 = vector.broadcast %cst_18 : f32 to vector<16x32xf32>
    %50 = arith.addf %49, %48 : vector<16x32xf32>
    %51 = arith.divf %49, %50 : vector<16x32xf32>
    %52 = arith.mulf %42, %23 : vector<16x32xf32>
    %cst_19 = arith.constant dense<0.000000e+00> : vector<16x32xf32>
    %53 = tpu.matmul %1, %52, %cst_19 {dimension_numbers = #tpu.dot_dimension_numbers<[1], [0], [0], [1], [0, 0, 1, 1], [], []>} : vector<16x16xf32>, vector<16x32xf32>, vector<16x32xf32> -> vector<16x32xf32>
    %cst_20 = arith.constant dense<0.000000e+00> : vector<16x32xf32>
    %54 = tpu.matmul %53, %3, %cst_20 {dimension_numbers = #tpu.dot_dimension_numbers<[1], [0], [0], [1], [0, 0, 1, 1], [], []>} : vector<16x32xf32>, vector<32x32xf32>, vector<16x32xf32> -> vector<16x32xf32>
    %55 = arith.addf %29, %54 : vector<16x32xf32>
    %56 = math.tanh %55 : vector<16x32xf32>
    %57 = arith.mulf %51, %23 : vector<16x32xf32>
    %cst_21 = arith.constant 1.000000e+00 : f32
    %58 = vector.broadcast %cst_21 : f32 to vector<16x32xf32>
    %59 = arith.subf %58, %51 : vector<16x32xf32>
    %60 = arith.mulf %59, %56 : vector<16x32xf32>
    %61 = arith.addf %57, %60 : vector<16x32xf32>
    %c1_i32_22 = arith.constant 1 : i32
    %c0_23 = arith.constant 0 : index
    %62 = arith.index_cast %c1_i32_22 : i32 to index
    %c0_24 = arith.constant 0 : index
    %c0_25 = arith.constant 0 : index
    %63 = vector.load %arg1[%c0_23, %62, %c0_24, %c0_25] : memref<1x8x16x96xf32, #tpu.memory_space<vmem>>, vector<1x1x16x96xf32>
    %64 = vector.shape_cast %63 : vector<1x1x16x96xf32> to vector<16x96xf32>
    %65 = vector.extract_strided_slice %64 {offsets = [0, 0], sizes = [16, 32], strides = [1, 1]} : vector<16x96xf32> to vector<16x32xf32>
    %66 = vector.extract_strided_slice %64 {offsets = [0, 32], sizes = [16, 32], strides = [1, 1]} : vector<16x96xf32> to vector<16x32xf32>
    %67 = vector.extract_strided_slice %64 {offsets = [0, 64], sizes = [16, 32], strides = [1, 1]} : vector<16x96xf32> to vector<16x32xf32>
    %cst_26 = arith.constant dense<0.000000e+00> : vector<32x32xf32>
    %68 = tpu.matmul %0, %61, %cst_26 {dimension_numbers = #tpu.dot_dimension_numbers<[1], [0], [0], [1], [0, 0, 1, 1], [], []>} : vector<32x16xf32>, vector<16x32xf32>, vector<32x32xf32> -> vector<32x32xf32>
    %cst_27 = arith.constant dense<0.000000e+00> : vector<32x64xf32>
    %69 = tpu.matmul %68, %2, %cst_27 {dimension_numbers = #tpu.dot_dimension_numbers<[1], [0], [0], [1], [0, 0, 1, 1], [], []>} : vector<32x32xf32>, vector<32x64xf32>, vector<32x64xf32> -> vector<32x64xf32>
    %70 = vector.extract_strided_slice %69 {offsets = [0, 0], sizes = [16, 64], strides = [1, 1]} : vector<32x64xf32> to vector<16x64xf32>
    %71 = vector.extract_strided_slice %69 {offsets = [16, 0], sizes = [16, 64], strides = [1, 1]} : vector<32x64xf32> to vector<16x64xf32>
    %72 = vector.extract_strided_slice %70 {offsets = [0, 0], sizes = [16, 32], strides = [1, 1]} : vector<16x64xf32> to vector<16x32xf32>
    %73 = vector.extract_strided_slice %70 {offsets = [0, 32], sizes = [16, 32], strides = [1, 1]} : vector<16x64xf32> to vector<16x32xf32>
    %74 = arith.select %22, %72, %73 : vector<16x32xi1>, vector<16x32xf32>
    %75 = arith.addf %65, %74 : vector<16x32xf32>
    %76 = arith.negf %75 : vector<16x32xf32>
    %77 = math.exp %76 : vector<16x32xf32>
    %cst_28 = arith.constant 1.000000e+00 : f32
    %78 = vector.broadcast %cst_28 : f32 to vector<16x32xf32>
    %79 = arith.addf %78, %77 : vector<16x32xf32>
    %80 = arith.divf %78, %79 : vector<16x32xf32>
    %81 = vector.extract_strided_slice %71 {offsets = [0, 0], sizes = [16, 32], strides = [1, 1]} : vector<16x64xf32> to vector<16x32xf32>
    %82 = vector.extract_strided_slice %71 {offsets = [0, 32], sizes = [16, 32], strides = [1, 1]} : vector<16x64xf32> to vector<16x32xf32>
    %83 = arith.select %22, %81, %82 : vector<16x32xi1>, vector<16x32xf32>
    %84 = arith.addf %66, %83 : vector<16x32xf32>
    %85 = arith.negf %84 : vector<16x32xf32>
    %86 = math.exp %85 : vector<16x32xf32>
    %cst_29 = arith.constant 1.000000e+00 : f32
    %87 = vector.broadcast %cst_29 : f32 to vector<16x32xf32>
    %88 = arith.addf %87, %86 : vector<16x32xf32>
    %89 = arith.divf %87, %88 : vector<16x32xf32>
    %90 = arith.mulf %80, %61 : vector<16x32xf32>
    %cst_30 = arith.constant dense<0.000000e+00> : vector<16x32xf32>
    %91 = tpu.matmul %1, %90, %cst_30 {dimension_numbers = #tpu.dot_dimension_numbers<[1], [0], [0], [1], [0, 0, 1, 1], [], []>} : vector<16x16xf32>, vector<16x32xf32>, vector<16x32xf32> -> vector<16x32xf32>
    %cst_31 = arith.constant dense<0.000000e+00> : vector<16x32xf32>
    %92 = tpu.matmul %91, %3, %cst_31 {dimension_numbers = #tpu.dot_dimension_numbers<[1], [0], [0], [1], [0, 0, 1, 1], [], []>} : vector<16x32xf32>, vector<32x32xf32>, vector<16x32xf32> -> vector<16x32xf32>
    %93 = arith.addf %67, %92 : vector<16x32xf32>
    %94 = math.tanh %93 : vector<16x32xf32>
    %95 = arith.mulf %89, %61 : vector<16x32xf32>
    %cst_32 = arith.constant 1.000000e+00 : f32
    %96 = vector.broadcast %cst_32 : f32 to vector<16x32xf32>
    %97 = arith.subf %96, %89 : vector<16x32xf32>
    %98 = arith.mulf %97, %94 : vector<16x32xf32>
    %99 = arith.addf %95, %98 : vector<16x32xf32>
    %c2_i32_33 = arith.constant 2 : i32
    %c0_34 = arith.constant 0 : index
    %100 = arith.index_cast %c2_i32_33 : i32 to index
    %c0_35 = arith.constant 0 : index
    %c0_36 = arith.constant 0 : index
    %101 = vector.load %arg1[%c0_34, %100, %c0_35, %c0_36] : memref<1x8x16x96xf32, #tpu.memory_space<vmem>>, vector<1x1x16x96xf32>
    %102 = vector.shape_cast %101 : vector<1x1x16x96xf32> to vector<16x96xf32>
    %103 = vector.extract_strided_slice %102 {offsets = [0, 0], sizes = [16, 32], strides = [1, 1]} : vector<16x96xf32> to vector<16x32xf32>
    %104 = vector.extract_strided_slice %102 {offsets = [0, 32], sizes = [16, 32], strides = [1, 1]} : vector<16x96xf32> to vector<16x32xf32>
    %105 = vector.extract_strided_slice %102 {offsets = [0, 64], sizes = [16, 32], strides = [1, 1]} : vector<16x96xf32> to vector<16x32xf32>
    %cst_37 = arith.constant dense<0.000000e+00> : vector<32x32xf32>
    %106 = tpu.matmul %0, %99, %cst_37 {dimension_numbers = #tpu.dot_dimension_numbers<[1], [0], [0], [1], [0, 0, 1, 1], [], []>} : vector<32x16xf32>, vector<16x32xf32>, vector<32x32xf32> -> vector<32x32xf32>
    %cst_38 = arith.constant dense<0.000000e+00> : vector<32x64xf32>
    %107 = tpu.matmul %106, %2, %cst_38 {dimension_numbers = #tpu.dot_dimension_numbers<[1], [0], [0], [1], [0, 0, 1, 1], [], []>} : vector<32x32xf32>, vector<32x64xf32>, vector<32x64xf32> -> vector<32x64xf32>
    %108 = vector.extract_strided_slice %107 {offsets = [0, 0], sizes = [16, 64], strides = [1, 1]} : vector<32x64xf32> to vector<16x64xf32>
    %109 = vector.extract_strided_slice %107 {offsets = [16, 0], sizes = [16, 64], strides = [1, 1]} : vector<32x64xf32> to vector<16x64xf32>
    %110 = vector.extract_strided_slice %108 {offsets = [0, 0], sizes = [16, 32], strides = [1, 1]} : vector<16x64xf32> to vector<16x32xf32>
    %111 = vector.extract_strided_slice %108 {offsets = [0, 32], sizes = [16, 32], strides = [1, 1]} : vector<16x64xf32> to vector<16x32xf32>
    %112 = arith.select %22, %110, %111 : vector<16x32xi1>, vector<16x32xf32>
    %113 = arith.addf %103, %112 : vector<16x32xf32>
    %114 = arith.negf %113 : vector<16x32xf32>
    %115 = math.exp %114 : vector<16x32xf32>
    %cst_39 = arith.constant 1.000000e+00 : f32
    %116 = vector.broadcast %cst_39 : f32 to vector<16x32xf32>
    %117 = arith.addf %116, %115 : vector<16x32xf32>
    %118 = arith.divf %116, %117 : vector<16x32xf32>
    %119 = vector.extract_strided_slice %109 {offsets = [0, 0], sizes = [16, 32], strides = [1, 1]} : vector<16x64xf32> to vector<16x32xf32>
    %120 = vector.extract_strided_slice %109 {offsets = [0, 32], sizes = [16, 32], strides = [1, 1]} : vector<16x64xf32> to vector<16x32xf32>
    %121 = arith.select %22, %119, %120 : vector<16x32xi1>, vector<16x32xf32>
    %122 = arith.addf %104, %121 : vector<16x32xf32>
    %123 = arith.negf %122 : vector<16x32xf32>
    %124 = math.exp %123 : vector<16x32xf32>
    %cst_40 = arith.constant 1.000000e+00 : f32
    %125 = vector.broadcast %cst_40 : f32 to vector<16x32xf32>
    %126 = arith.addf %125, %124 : vector<16x32xf32>
    %127 = arith.divf %125, %126 : vector<16x32xf32>
    %128 = arith.mulf %118, %99 : vector<16x32xf32>
    %cst_41 = arith.constant dense<0.000000e+00> : vector<16x32xf32>
    %129 = tpu.matmul %1, %128, %cst_41 {dimension_numbers = #tpu.dot_dimension_numbers<[1], [0], [0], [1], [0, 0, 1, 1], [], []>} : vector<16x16xf32>, vector<16x32xf32>, vector<16x32xf32> -> vector<16x32xf32>
    %cst_42 = arith.constant dense<0.000000e+00> : vector<16x32xf32>
    %130 = tpu.matmul %129, %3, %cst_42 {dimension_numbers = #tpu.dot_dimension_numbers<[1], [0], [0], [1], [0, 0, 1, 1], [], []>} : vector<16x32xf32>, vector<32x32xf32>, vector<16x32xf32> -> vector<16x32xf32>
    %131 = arith.addf %105, %130 : vector<16x32xf32>
    %132 = math.tanh %131 : vector<16x32xf32>
    %133 = arith.mulf %127, %99 : vector<16x32xf32>
    %cst_43 = arith.constant 1.000000e+00 : f32
    %134 = vector.broadcast %cst_43 : f32 to vector<16x32xf32>
    %135 = arith.subf %134, %127 : vector<16x32xf32>
    %136 = arith.mulf %135, %132 : vector<16x32xf32>
    %137 = arith.addf %133, %136 : vector<16x32xf32>
    %c3_i32 = arith.constant 3 : i32
    %c0_44 = arith.constant 0 : index
    %138 = arith.index_cast %c3_i32 : i32 to index
    %c0_45 = arith.constant 0 : index
    %c0_46 = arith.constant 0 : index
    %139 = vector.load %arg1[%c0_44, %138, %c0_45, %c0_46] : memref<1x8x16x96xf32, #tpu.memory_space<vmem>>, vector<1x1x16x96xf32>
    %140 = vector.shape_cast %139 : vector<1x1x16x96xf32> to vector<16x96xf32>
    %141 = vector.extract_strided_slice %140 {offsets = [0, 0], sizes = [16, 32], strides = [1, 1]} : vector<16x96xf32> to vector<16x32xf32>
    %142 = vector.extract_strided_slice %140 {offsets = [0, 32], sizes = [16, 32], strides = [1, 1]} : vector<16x96xf32> to vector<16x32xf32>
    %143 = vector.extract_strided_slice %140 {offsets = [0, 64], sizes = [16, 32], strides = [1, 1]} : vector<16x96xf32> to vector<16x32xf32>
    %cst_47 = arith.constant dense<0.000000e+00> : vector<32x32xf32>
    %144 = tpu.matmul %0, %137, %cst_47 {dimension_numbers = #tpu.dot_dimension_numbers<[1], [0], [0], [1], [0, 0, 1, 1], [], []>} : vector<32x16xf32>, vector<16x32xf32>, vector<32x32xf32> -> vector<32x32xf32>
    %cst_48 = arith.constant dense<0.000000e+00> : vector<32x64xf32>
    %145 = tpu.matmul %144, %2, %cst_48 {dimension_numbers = #tpu.dot_dimension_numbers<[1], [0], [0], [1], [0, 0, 1, 1], [], []>} : vector<32x32xf32>, vector<32x64xf32>, vector<32x64xf32> -> vector<32x64xf32>
    %146 = vector.extract_strided_slice %145 {offsets = [0, 0], sizes = [16, 64], strides = [1, 1]} : vector<32x64xf32> to vector<16x64xf32>
    %147 = vector.extract_strided_slice %145 {offsets = [16, 0], sizes = [16, 64], strides = [1, 1]} : vector<32x64xf32> to vector<16x64xf32>
    %148 = vector.extract_strided_slice %146 {offsets = [0, 0], sizes = [16, 32], strides = [1, 1]} : vector<16x64xf32> to vector<16x32xf32>
    %149 = vector.extract_strided_slice %146 {offsets = [0, 32], sizes = [16, 32], strides = [1, 1]} : vector<16x64xf32> to vector<16x32xf32>
    %150 = arith.select %22, %148, %149 : vector<16x32xi1>, vector<16x32xf32>
    %151 = arith.addf %141, %150 : vector<16x32xf32>
    %152 = arith.negf %151 : vector<16x32xf32>
    %153 = math.exp %152 : vector<16x32xf32>
    %cst_49 = arith.constant 1.000000e+00 : f32
    %154 = vector.broadcast %cst_49 : f32 to vector<16x32xf32>
    %155 = arith.addf %154, %153 : vector<16x32xf32>
    %156 = arith.divf %154, %155 : vector<16x32xf32>
    %157 = vector.extract_strided_slice %147 {offsets = [0, 0], sizes = [16, 32], strides = [1, 1]} : vector<16x64xf32> to vector<16x32xf32>
    %158 = vector.extract_strided_slice %147 {offsets = [0, 32], sizes = [16, 32], strides = [1, 1]} : vector<16x64xf32> to vector<16x32xf32>
    %159 = arith.select %22, %157, %158 : vector<16x32xi1>, vector<16x32xf32>
    %160 = arith.addf %142, %159 : vector<16x32xf32>
    %161 = arith.negf %160 : vector<16x32xf32>
    %162 = math.exp %161 : vector<16x32xf32>
    %cst_50 = arith.constant 1.000000e+00 : f32
    %163 = vector.broadcast %cst_50 : f32 to vector<16x32xf32>
    %164 = arith.addf %163, %162 : vector<16x32xf32>
    %165 = arith.divf %163, %164 : vector<16x32xf32>
    %166 = arith.mulf %156, %137 : vector<16x32xf32>
    %cst_51 = arith.constant dense<0.000000e+00> : vector<16x32xf32>
    %167 = tpu.matmul %1, %166, %cst_51 {dimension_numbers = #tpu.dot_dimension_numbers<[1], [0], [0], [1], [0, 0, 1, 1], [], []>} : vector<16x16xf32>, vector<16x32xf32>, vector<16x32xf32> -> vector<16x32xf32>
    %cst_52 = arith.constant dense<0.000000e+00> : vector<16x32xf32>
    %168 = tpu.matmul %167, %3, %cst_52 {dimension_numbers = #tpu.dot_dimension_numbers<[1], [0], [0], [1], [0, 0, 1, 1], [], []>} : vector<16x32xf32>, vector<32x32xf32>, vector<16x32xf32> -> vector<16x32xf32>
    %169 = arith.addf %143, %168 : vector<16x32xf32>
    %170 = math.tanh %169 : vector<16x32xf32>
    %171 = arith.mulf %165, %137 : vector<16x32xf32>
    %cst_53 = arith.constant 1.000000e+00 : f32
    %172 = vector.broadcast %cst_53 : f32 to vector<16x32xf32>
    %173 = arith.subf %172, %165 : vector<16x32xf32>
    %174 = arith.mulf %173, %170 : vector<16x32xf32>
    %175 = arith.addf %171, %174 : vector<16x32xf32>
    %c4_i32 = arith.constant 4 : i32
    %c0_54 = arith.constant 0 : index
    %176 = arith.index_cast %c4_i32 : i32 to index
    %c0_55 = arith.constant 0 : index
    %c0_56 = arith.constant 0 : index
    %177 = vector.load %arg1[%c0_54, %176, %c0_55, %c0_56] : memref<1x8x16x96xf32, #tpu.memory_space<vmem>>, vector<1x1x16x96xf32>
    %178 = vector.shape_cast %177 : vector<1x1x16x96xf32> to vector<16x96xf32>
    %179 = vector.extract_strided_slice %178 {offsets = [0, 0], sizes = [16, 32], strides = [1, 1]} : vector<16x96xf32> to vector<16x32xf32>
    %180 = vector.extract_strided_slice %178 {offsets = [0, 32], sizes = [16, 32], strides = [1, 1]} : vector<16x96xf32> to vector<16x32xf32>
    %181 = vector.extract_strided_slice %178 {offsets = [0, 64], sizes = [16, 32], strides = [1, 1]} : vector<16x96xf32> to vector<16x32xf32>
    %cst_57 = arith.constant dense<0.000000e+00> : vector<32x32xf32>
    %182 = tpu.matmul %0, %175, %cst_57 {dimension_numbers = #tpu.dot_dimension_numbers<[1], [0], [0], [1], [0, 0, 1, 1], [], []>} : vector<32x16xf32>, vector<16x32xf32>, vector<32x32xf32> -> vector<32x32xf32>
    %cst_58 = arith.constant dense<0.000000e+00> : vector<32x64xf32>
    %183 = tpu.matmul %182, %2, %cst_58 {dimension_numbers = #tpu.dot_dimension_numbers<[1], [0], [0], [1], [0, 0, 1, 1], [], []>} : vector<32x32xf32>, vector<32x64xf32>, vector<32x64xf32> -> vector<32x64xf32>
    %184 = vector.extract_strided_slice %183 {offsets = [0, 0], sizes = [16, 64], strides = [1, 1]} : vector<32x64xf32> to vector<16x64xf32>
    %185 = vector.extract_strided_slice %183 {offsets = [16, 0], sizes = [16, 64], strides = [1, 1]} : vector<32x64xf32> to vector<16x64xf32>
    %186 = vector.extract_strided_slice %184 {offsets = [0, 0], sizes = [16, 32], strides = [1, 1]} : vector<16x64xf32> to vector<16x32xf32>
    %187 = vector.extract_strided_slice %184 {offsets = [0, 32], sizes = [16, 32], strides = [1, 1]} : vector<16x64xf32> to vector<16x32xf32>
    %188 = arith.select %22, %186, %187 : vector<16x32xi1>, vector<16x32xf32>
    %189 = arith.addf %179, %188 : vector<16x32xf32>
    %190 = arith.negf %189 : vector<16x32xf32>
    %191 = math.exp %190 : vector<16x32xf32>
    %cst_59 = arith.constant 1.000000e+00 : f32
    %192 = vector.broadcast %cst_59 : f32 to vector<16x32xf32>
    %193 = arith.addf %192, %191 : vector<16x32xf32>
    %194 = arith.divf %192, %193 : vector<16x32xf32>
    %195 = vector.extract_strided_slice %185 {offsets = [0, 0], sizes = [16, 32], strides = [1, 1]} : vector<16x64xf32> to vector<16x32xf32>
    %196 = vector.extract_strided_slice %185 {offsets = [0, 32], sizes = [16, 32], strides = [1, 1]} : vector<16x64xf32> to vector<16x32xf32>
    %197 = arith.select %22, %195, %196 : vector<16x32xi1>, vector<16x32xf32>
    %198 = arith.addf %180, %197 : vector<16x32xf32>
    %199 = arith.negf %198 : vector<16x32xf32>
    %200 = math.exp %199 : vector<16x32xf32>
    %cst_60 = arith.constant 1.000000e+00 : f32
    %201 = vector.broadcast %cst_60 : f32 to vector<16x32xf32>
    %202 = arith.addf %201, %200 : vector<16x32xf32>
    %203 = arith.divf %201, %202 : vector<16x32xf32>
    %204 = arith.mulf %194, %175 : vector<16x32xf32>
    %cst_61 = arith.constant dense<0.000000e+00> : vector<16x32xf32>
    %205 = tpu.matmul %1, %204, %cst_61 {dimension_numbers = #tpu.dot_dimension_numbers<[1], [0], [0], [1], [0, 0, 1, 1], [], []>} : vector<16x16xf32>, vector<16x32xf32>, vector<16x32xf32> -> vector<16x32xf32>
    %cst_62 = arith.constant dense<0.000000e+00> : vector<16x32xf32>
    %206 = tpu.matmul %205, %3, %cst_62 {dimension_numbers = #tpu.dot_dimension_numbers<[1], [0], [0], [1], [0, 0, 1, 1], [], []>} : vector<16x32xf32>, vector<32x32xf32>, vector<16x32xf32> -> vector<16x32xf32>
    %207 = arith.addf %181, %206 : vector<16x32xf32>
    %208 = math.tanh %207 : vector<16x32xf32>
    %209 = arith.mulf %203, %175 : vector<16x32xf32>
    %cst_63 = arith.constant 1.000000e+00 : f32
    %210 = vector.broadcast %cst_63 : f32 to vector<16x32xf32>
    %211 = arith.subf %210, %203 : vector<16x32xf32>
    %212 = arith.mulf %211, %208 : vector<16x32xf32>
    %213 = arith.addf %209, %212 : vector<16x32xf32>
    %c5_i32 = arith.constant 5 : i32
    %c0_64 = arith.constant 0 : index
    %214 = arith.index_cast %c5_i32 : i32 to index
    %c0_65 = arith.constant 0 : index
    %c0_66 = arith.constant 0 : index
    %215 = vector.load %arg1[%c0_64, %214, %c0_65, %c0_66] : memref<1x8x16x96xf32, #tpu.memory_space<vmem>>, vector<1x1x16x96xf32>
    %216 = vector.shape_cast %215 : vector<1x1x16x96xf32> to vector<16x96xf32>
    %217 = vector.extract_strided_slice %216 {offsets = [0, 0], sizes = [16, 32], strides = [1, 1]} : vector<16x96xf32> to vector<16x32xf32>
    %218 = vector.extract_strided_slice %216 {offsets = [0, 32], sizes = [16, 32], strides = [1, 1]} : vector<16x96xf32> to vector<16x32xf32>
    %219 = vector.extract_strided_slice %216 {offsets = [0, 64], sizes = [16, 32], strides = [1, 1]} : vector<16x96xf32> to vector<16x32xf32>
    %cst_67 = arith.constant dense<0.000000e+00> : vector<32x32xf32>
    %220 = tpu.matmul %0, %213, %cst_67 {dimension_numbers = #tpu.dot_dimension_numbers<[1], [0], [0], [1], [0, 0, 1, 1], [], []>} : vector<32x16xf32>, vector<16x32xf32>, vector<32x32xf32> -> vector<32x32xf32>
    %cst_68 = arith.constant dense<0.000000e+00> : vector<32x64xf32>
    %221 = tpu.matmul %220, %2, %cst_68 {dimension_numbers = #tpu.dot_dimension_numbers<[1], [0], [0], [1], [0, 0, 1, 1], [], []>} : vector<32x32xf32>, vector<32x64xf32>, vector<32x64xf32> -> vector<32x64xf32>
    %222 = vector.extract_strided_slice %221 {offsets = [0, 0], sizes = [16, 64], strides = [1, 1]} : vector<32x64xf32> to vector<16x64xf32>
    %223 = vector.extract_strided_slice %221 {offsets = [16, 0], sizes = [16, 64], strides = [1, 1]} : vector<32x64xf32> to vector<16x64xf32>
    %224 = vector.extract_strided_slice %222 {offsets = [0, 0], sizes = [16, 32], strides = [1, 1]} : vector<16x64xf32> to vector<16x32xf32>
    %225 = vector.extract_strided_slice %222 {offsets = [0, 32], sizes = [16, 32], strides = [1, 1]} : vector<16x64xf32> to vector<16x32xf32>
    %226 = arith.select %22, %224, %225 : vector<16x32xi1>, vector<16x32xf32>
    %227 = arith.addf %217, %226 : vector<16x32xf32>
    %228 = arith.negf %227 : vector<16x32xf32>
    %229 = math.exp %228 : vector<16x32xf32>
    %cst_69 = arith.constant 1.000000e+00 : f32
    %230 = vector.broadcast %cst_69 : f32 to vector<16x32xf32>
    %231 = arith.addf %230, %229 : vector<16x32xf32>
    %232 = arith.divf %230, %231 : vector<16x32xf32>
    %233 = vector.extract_strided_slice %223 {offsets = [0, 0], sizes = [16, 32], strides = [1, 1]} : vector<16x64xf32> to vector<16x32xf32>
    %234 = vector.extract_strided_slice %223 {offsets = [0, 32], sizes = [16, 32], strides = [1, 1]} : vector<16x64xf32> to vector<16x32xf32>
    %235 = arith.select %22, %233, %234 : vector<16x32xi1>, vector<16x32xf32>
    %236 = arith.addf %218, %235 : vector<16x32xf32>
    %237 = arith.negf %236 : vector<16x32xf32>
    %238 = math.exp %237 : vector<16x32xf32>
    %cst_70 = arith.constant 1.000000e+00 : f32
    %239 = vector.broadcast %cst_70 : f32 to vector<16x32xf32>
    %240 = arith.addf %239, %238 : vector<16x32xf32>
    %241 = arith.divf %239, %240 : vector<16x32xf32>
    %242 = arith.mulf %232, %213 : vector<16x32xf32>
    %cst_71 = arith.constant dense<0.000000e+00> : vector<16x32xf32>
    %243 = tpu.matmul %1, %242, %cst_71 {dimension_numbers = #tpu.dot_dimension_numbers<[1], [0], [0], [1], [0, 0, 1, 1], [], []>} : vector<16x16xf32>, vector<16x32xf32>, vector<16x32xf32> -> vector<16x32xf32>
    %cst_72 = arith.constant dense<0.000000e+00> : vector<16x32xf32>
    %244 = tpu.matmul %243, %3, %cst_72 {dimension_numbers = #tpu.dot_dimension_numbers<[1], [0], [0], [1], [0, 0, 1, 1], [], []>} : vector<16x32xf32>, vector<32x32xf32>, vector<16x32xf32> -> vector<16x32xf32>
    %245 = arith.addf %219, %244 : vector<16x32xf32>
    %246 = math.tanh %245 : vector<16x32xf32>
    %247 = arith.mulf %241, %213 : vector<16x32xf32>
    %cst_73 = arith.constant 1.000000e+00 : f32
    %248 = vector.broadcast %cst_73 : f32 to vector<16x32xf32>
    %249 = arith.subf %248, %241 : vector<16x32xf32>
    %250 = arith.mulf %249, %246 : vector<16x32xf32>
    %251 = arith.addf %247, %250 : vector<16x32xf32>
    %c6_i32 = arith.constant 6 : i32
    %c0_74 = arith.constant 0 : index
    %252 = arith.index_cast %c6_i32 : i32 to index
    %c0_75 = arith.constant 0 : index
    %c0_76 = arith.constant 0 : index
    %253 = vector.load %arg1[%c0_74, %252, %c0_75, %c0_76] : memref<1x8x16x96xf32, #tpu.memory_space<vmem>>, vector<1x1x16x96xf32>
    %254 = vector.shape_cast %253 : vector<1x1x16x96xf32> to vector<16x96xf32>
    %255 = vector.extract_strided_slice %254 {offsets = [0, 0], sizes = [16, 32], strides = [1, 1]} : vector<16x96xf32> to vector<16x32xf32>
    %256 = vector.extract_strided_slice %254 {offsets = [0, 32], sizes = [16, 32], strides = [1, 1]} : vector<16x96xf32> to vector<16x32xf32>
    %257 = vector.extract_strided_slice %254 {offsets = [0, 64], sizes = [16, 32], strides = [1, 1]} : vector<16x96xf32> to vector<16x32xf32>
    %cst_77 = arith.constant dense<0.000000e+00> : vector<32x32xf32>
    %258 = tpu.matmul %0, %251, %cst_77 {dimension_numbers = #tpu.dot_dimension_numbers<[1], [0], [0], [1], [0, 0, 1, 1], [], []>} : vector<32x16xf32>, vector<16x32xf32>, vector<32x32xf32> -> vector<32x32xf32>
    %cst_78 = arith.constant dense<0.000000e+00> : vector<32x64xf32>
    %259 = tpu.matmul %258, %2, %cst_78 {dimension_numbers = #tpu.dot_dimension_numbers<[1], [0], [0], [1], [0, 0, 1, 1], [], []>} : vector<32x32xf32>, vector<32x64xf32>, vector<32x64xf32> -> vector<32x64xf32>
    %260 = vector.extract_strided_slice %259 {offsets = [0, 0], sizes = [16, 64], strides = [1, 1]} : vector<32x64xf32> to vector<16x64xf32>
    %261 = vector.extract_strided_slice %259 {offsets = [16, 0], sizes = [16, 64], strides = [1, 1]} : vector<32x64xf32> to vector<16x64xf32>
    %262 = vector.extract_strided_slice %260 {offsets = [0, 0], sizes = [16, 32], strides = [1, 1]} : vector<16x64xf32> to vector<16x32xf32>
    %263 = vector.extract_strided_slice %260 {offsets = [0, 32], sizes = [16, 32], strides = [1, 1]} : vector<16x64xf32> to vector<16x32xf32>
    %264 = arith.select %22, %262, %263 : vector<16x32xi1>, vector<16x32xf32>
    %265 = arith.addf %255, %264 : vector<16x32xf32>
    %266 = arith.negf %265 : vector<16x32xf32>
    %267 = math.exp %266 : vector<16x32xf32>
    %cst_79 = arith.constant 1.000000e+00 : f32
    %268 = vector.broadcast %cst_79 : f32 to vector<16x32xf32>
    %269 = arith.addf %268, %267 : vector<16x32xf32>
    %270 = arith.divf %268, %269 : vector<16x32xf32>
    %271 = vector.extract_strided_slice %261 {offsets = [0, 0], sizes = [16, 32], strides = [1, 1]} : vector<16x64xf32> to vector<16x32xf32>
    %272 = vector.extract_strided_slice %261 {offsets = [0, 32], sizes = [16, 32], strides = [1, 1]} : vector<16x64xf32> to vector<16x32xf32>
    %273 = arith.select %22, %271, %272 : vector<16x32xi1>, vector<16x32xf32>
    %274 = arith.addf %256, %273 : vector<16x32xf32>
    %275 = arith.negf %274 : vector<16x32xf32>
    %276 = math.exp %275 : vector<16x32xf32>
    %cst_80 = arith.constant 1.000000e+00 : f32
    %277 = vector.broadcast %cst_80 : f32 to vector<16x32xf32>
    %278 = arith.addf %277, %276 : vector<16x32xf32>
    %279 = arith.divf %277, %278 : vector<16x32xf32>
    %280 = arith.mulf %270, %251 : vector<16x32xf32>
    %cst_81 = arith.constant dense<0.000000e+00> : vector<16x32xf32>
    %281 = tpu.matmul %1, %280, %cst_81 {dimension_numbers = #tpu.dot_dimension_numbers<[1], [0], [0], [1], [0, 0, 1, 1], [], []>} : vector<16x16xf32>, vector<16x32xf32>, vector<16x32xf32> -> vector<16x32xf32>
    %cst_82 = arith.constant dense<0.000000e+00> : vector<16x32xf32>
    %282 = tpu.matmul %281, %3, %cst_82 {dimension_numbers = #tpu.dot_dimension_numbers<[1], [0], [0], [1], [0, 0, 1, 1], [], []>} : vector<16x32xf32>, vector<32x32xf32>, vector<16x32xf32> -> vector<16x32xf32>
    %283 = arith.addf %257, %282 : vector<16x32xf32>
    %284 = math.tanh %283 : vector<16x32xf32>
    %285 = arith.mulf %279, %251 : vector<16x32xf32>
    %cst_83 = arith.constant 1.000000e+00 : f32
    %286 = vector.broadcast %cst_83 : f32 to vector<16x32xf32>
    %287 = arith.subf %286, %279 : vector<16x32xf32>
    %288 = arith.mulf %287, %284 : vector<16x32xf32>
    %289 = arith.addf %285, %288 : vector<16x32xf32>
    %c7_i32 = arith.constant 7 : i32
    %c0_84 = arith.constant 0 : index
    %290 = arith.index_cast %c7_i32 : i32 to index
    %c0_85 = arith.constant 0 : index
    %c0_86 = arith.constant 0 : index
    %291 = vector.load %arg1[%c0_84, %290, %c0_85, %c0_86] : memref<1x8x16x96xf32, #tpu.memory_space<vmem>>, vector<1x1x16x96xf32>
    %292 = vector.shape_cast %291 : vector<1x1x16x96xf32> to vector<16x96xf32>
    %293 = vector.extract_strided_slice %292 {offsets = [0, 0], sizes = [16, 32], strides = [1, 1]} : vector<16x96xf32> to vector<16x32xf32>
    %294 = vector.extract_strided_slice %292 {offsets = [0, 32], sizes = [16, 32], strides = [1, 1]} : vector<16x96xf32> to vector<16x32xf32>
    %295 = vector.extract_strided_slice %292 {offsets = [0, 64], sizes = [16, 32], strides = [1, 1]} : vector<16x96xf32> to vector<16x32xf32>
    %cst_87 = arith.constant dense<0.000000e+00> : vector<32x32xf32>
    %296 = tpu.matmul %0, %289, %cst_87 {dimension_numbers = #tpu.dot_dimension_numbers<[1], [0], [0], [1], [0, 0, 1, 1], [], []>} : vector<32x16xf32>, vector<16x32xf32>, vector<32x32xf32> -> vector<32x32xf32>
    %cst_88 = arith.constant dense<0.000000e+00> : vector<32x64xf32>
    %297 = tpu.matmul %296, %2, %cst_88 {dimension_numbers = #tpu.dot_dimension_numbers<[1], [0], [0], [1], [0, 0, 1, 1], [], []>} : vector<32x32xf32>, vector<32x64xf32>, vector<32x64xf32> -> vector<32x64xf32>
    %298 = vector.extract_strided_slice %297 {offsets = [0, 0], sizes = [16, 64], strides = [1, 1]} : vector<32x64xf32> to vector<16x64xf32>
    %299 = vector.extract_strided_slice %297 {offsets = [16, 0], sizes = [16, 64], strides = [1, 1]} : vector<32x64xf32> to vector<16x64xf32>
    %300 = vector.extract_strided_slice %298 {offsets = [0, 0], sizes = [16, 32], strides = [1, 1]} : vector<16x64xf32> to vector<16x32xf32>
    %301 = vector.extract_strided_slice %298 {offsets = [0, 32], sizes = [16, 32], strides = [1, 1]} : vector<16x64xf32> to vector<16x32xf32>
    %302 = arith.select %22, %300, %301 : vector<16x32xi1>, vector<16x32xf32>
    %303 = arith.addf %293, %302 : vector<16x32xf32>
    %304 = arith.negf %303 : vector<16x32xf32>
    %305 = math.exp %304 : vector<16x32xf32>
    %cst_89 = arith.constant 1.000000e+00 : f32
    %306 = vector.broadcast %cst_89 : f32 to vector<16x32xf32>
    %307 = arith.addf %306, %305 : vector<16x32xf32>
    %308 = arith.divf %306, %307 : vector<16x32xf32>
    %309 = vector.extract_strided_slice %299 {offsets = [0, 0], sizes = [16, 32], strides = [1, 1]} : vector<16x64xf32> to vector<16x32xf32>
    %310 = vector.extract_strided_slice %299 {offsets = [0, 32], sizes = [16, 32], strides = [1, 1]} : vector<16x64xf32> to vector<16x32xf32>
    %311 = arith.select %22, %309, %310 : vector<16x32xi1>, vector<16x32xf32>
    %312 = arith.addf %294, %311 : vector<16x32xf32>
    %313 = arith.negf %312 : vector<16x32xf32>
    %314 = math.exp %313 : vector<16x32xf32>
    %cst_90 = arith.constant 1.000000e+00 : f32
    %315 = vector.broadcast %cst_90 : f32 to vector<16x32xf32>
    %316 = arith.addf %315, %314 : vector<16x32xf32>
    %317 = arith.divf %315, %316 : vector<16x32xf32>
    %318 = arith.mulf %308, %289 : vector<16x32xf32>
    %cst_91 = arith.constant dense<0.000000e+00> : vector<16x32xf32>
    %319 = tpu.matmul %1, %318, %cst_91 {dimension_numbers = #tpu.dot_dimension_numbers<[1], [0], [0], [1], [0, 0, 1, 1], [], []>} : vector<16x16xf32>, vector<16x32xf32>, vector<16x32xf32> -> vector<16x32xf32>
    %cst_92 = arith.constant dense<0.000000e+00> : vector<16x32xf32>
    %320 = tpu.matmul %319, %3, %cst_92 {dimension_numbers = #tpu.dot_dimension_numbers<[1], [0], [0], [1], [0, 0, 1, 1], [], []>} : vector<16x32xf32>, vector<32x32xf32>, vector<16x32xf32> -> vector<16x32xf32>
    %321 = arith.addf %295, %320 : vector<16x32xf32>
    %322 = math.tanh %321 : vector<16x32xf32>
    %323 = arith.mulf %317, %289 : vector<16x32xf32>
    %cst_93 = arith.constant 1.000000e+00 : f32
    %324 = vector.broadcast %cst_93 : f32 to vector<16x32xf32>
    %325 = arith.subf %324, %317 : vector<16x32xf32>
    %326 = arith.mulf %325, %322 : vector<16x32xf32>
    %327 = arith.addf %323, %326 : vector<16x32xf32>
    %c8_i32 = arith.constant 8 : i32
    %c0_94 = arith.constant 0 : index
    %c0_95 = arith.constant 0 : index
    %c0_96 = arith.constant 0 : index
    %328 = vector.load %arg6[%c0_94, %c0_95, %c0_96] : memref<1x16x32xf32, #tpu.memory_space<vmem>>, vector<1x16x32xf32>
    %329 = vector.shape_cast %328 : vector<1x16x32xf32> to vector<16x32xf32>
    %330 = vector.shape_cast %327 : vector<16x32xf32> to vector<1x16x32xf32>
    tpu.vector_store %arg6[%c0_94, %c0_95, %c0_96], %330 {strides = array<i32>} : memref<1x16x32xf32, #tpu.memory_space<vmem>>, vector<1x16x32xf32>,
    return
  }
  func.func @transform_0(%arg0: i32) -> (i32, i32, i32, i32) {
    %c0_i32 = arith.constant 0 : i32
    %c0_i32_0 = arith.constant 0 : i32
    %c0_i32_1 = arith.constant 0 : i32
    %c0_i32_2 = arith.constant 0 : i32
    return %arg0, %c0_i32, %c0_i32_0, %c0_i32_1 : i32, i32, i32, i32
  }
  func.func @transform_1(%arg0: i32) -> (i32, i32) {
    %c0_i32 = arith.constant 0 : i32
    %c0_i32_0 = arith.constant 0 : i32
    %c0_i32_1 = arith.constant 0 : i32
    return %c0_i32, %c0_i32_0 : i32, i32
  }
  func.func @transform_2(%arg0: i32) -> (i32, i32) {
    %c0_i32 = arith.constant 0 : i32
    %c0_i32_0 = arith.constant 0 : i32
    %c0_i32_1 = arith.constant 0 : i32
    return %c0_i32, %c0_i32_0 : i32, i32
  }
  func.func @transform_3(%arg0: i32) -> (i32, i32) {
    %c0_i32 = arith.constant 0 : i32
    %c0_i32_0 = arith.constant 0 : i32
    %c0_i32_1 = arith.constant 0 : i32
    return %c0_i32, %c0_i32_0 : i32, i32
  }
  func.func @transform_4(%arg0: i32) -> (i32, i32) {
    %c0_i32 = arith.constant 0 : i32
    %c0_i32_0 = arith.constant 0 : i32
    %c0_i32_1 = arith.constant 0 : i32
    return %c0_i32, %c0_i32_0 : i32, i32
  }
  func.func @transform_5(%arg0: i32) -> (i32, i32, i32) {
    %c0_i32 = arith.constant 0 : i32
    %c0_i32_0 = arith.constant 0 : i32
    %c0_i32_1 = arith.constant 0 : i32
    return %arg0, %c0_i32, %c0_i32_0 : i32, i32, i32
  }
}

</mosaic_0001>

<llo_original>
// kernel: tgcn_forward.1
$region0: #{tgcn_forward.1}
  #allocation0 [shape = 'u32[]', space=smem, size = 0x4, offset = 0x4, fixed_abs, tag = 'smem constant byte address 0x4 - core index']
  #allocation1 [shape = 'u32[144,128]{1,0:T(1,128)}', space=vmem, size = 0x12000, scoped, tag = 'internal scratch']
  %s0 = inlined_call_operand.vmem [shape: f32[2,8,16,96], index: 0, kind: input, shape index: {}]
  %s1 = inlined_call_operand.vmem [shape: f32[32,16], index: 1, kind: input, shape index: {}]
  %s2 = inlined_call_operand.vmem [shape: f32[16,16], index: 2, kind: input, shape index: {}]
  %s3 = inlined_call_operand.vmem [shape: f32[32,64], index: 3, kind: input, shape index: {}]
  %s4 = inlined_call_operand.vmem [shape: f32[32,32], index: 4, kind: input, shape index: {}]
  %s5 = inlined_call_operand.hbm [shape: f32[2,16,32], index: 5, kind: output, shape index: {}]
  %s6 = sld [smem:[#allocation0]]
  $region53: #{tgcn_forward.1} parent=0
    _
  %s8 = ssub.s32 1, %s6
  %s9 = scalar_select 0, %s8, %s6
  $region1: #{tgcn_forward.1} parent=0
    #allocation2 [shape = 'u8[16384]{0}', space=vmem, size = 0x4000, scoped, tag = 'output window, operand 0']
    #allocation3 [shape = 's32[2]{0}', space=sflag, size = 0x8, scoped, tag = 'scoped memory for tgcn_forward.1']
    %10 = vsyncpa [#allocation3], 0
    %s11 = scalar_lea.sflag [#allocation3], 1
    %12 = vsyncpa %s11, 0
    loop: start=0, step=1, limit=4
    $region2: #{tgcn_forward.1} parent=1 // loop_pre_header
      _
    $region3: #{tgcn_forward.1} parent=1 // loop_header
      %s14 = sphi 0, %s18
      %p15 = scmp.ge.s32.totalorder %s14, 4
      %s24 = sphi 0, %s26
      %s27 = sphi 0, %s24
      %s28 = sphi 0, %s27
      %s44 = sphi 0, %s28
      %s48 = sphi 0, %s48
      %s50 = sphi 0, %s48
      %s51 = sphi 0, %s50
      %s65 = sphi 0, %s51
      %s69 = sphi 0, %s69
      %s71 = sphi 0, %s69
      %s72 = sphi 0, %s71
      %s86 = sphi 0, %s72
      %s90 = sphi 0, %s90
      %s92 = sphi 0, %s90
      %s93 = sphi 0, %s92
      %s107 = sphi 0, %s93
      %s111 = sphi 0, %s111
      %s113 = sphi 0, %s111
      %s114 = sphi 0, %s113
      %s128 = sphi 0, %s114
      %s134 = sphi 0, %s136
      %s137 = sphi 0, %s134
      %s138 = sphi 0, %s137
      %s154 = sphi 0, %s138
    $region4: #{tgcn_forward.1} parent=1 // loop_header_branch
      %17 = sbr.rel (%p15) target = $region8
    $region5: #{tgcn_forward.1} parent=1 // loop_body
      %s19 = ssub.s32 %s14, 1
      %s20 = ssub.s32 %s14, 2
      %s21 = sadd.s32 %s14, 1
      %s22 = ssub.s32 %s14, %s21
      %p23 = scmp.eq.s32.totalorder %s22, 0
      %s25 = sadd.s32 %s24, 1
      %s26 = scalar_select %p23, %s24, %s25
      %p29 = pneg %p23
      %p30 = scmp.eq.s32.totalorder %s14, 1
      %p31 = por %p29, %p30
      %p32 = scmp.ne.s32.totalorder %s24, %s27
      %p33 = scmp.eq.s32.totalorder %s14, 0
      %p34 = por %p32, %p33
      %p35 = scmp.ne.s32.totalorder %s24, %s27
      %p36 = scmp.eq.s32.totalorder %s19, 1
      %p37 = por %p35, %p36
      %p38 = scmp.ne.s32.totalorder %s27, %s28
      %p39 = scmp.eq.s32.totalorder %s19, 0
      %p40 = por %p38, %p39
      %p41 = scmp.ne.s32.totalorder %s27, %s28
      %p42 = scmp.eq.s32.totalorder %s20, 1
      %p43 = por %p41, %p42
      %p45 = scmp.ne.s32.totalorder %s28, %s44
      %p46 = scmp.eq.s32.totalorder %s20, 0
      %p47 = por %p45, %p46
      %s49 = sadd.s32 %s48, 1
      %p52 = scmp.eq.s32.totalorder %s14, 1
      %p53 = scmp.ne.s32.totalorder %s48, %s50
      %p54 = scmp.eq.s32.totalorder %s14, 0
      %p55 = por %p53, %p54
      %p56 = scmp.ne.s32.totalorder %s48, %s50
      %p57 = scmp.eq.s32.totalorder %s19, 1
      %p58 = por %p56, %p57
      %p59 = scmp.ne.s32.totalorder %s50, %s51
      %p60 = scmp.eq.s32.totalorder %s19, 0
      %p61 = por %p59, %p60
      %p62 = scmp.ne.s32.totalorder %s50, %s51
      %p63 = scmp.eq.s32.totalorder %s20, 1
      %p64 = por %p62, %p63
      %p66 = scmp.ne.s32.totalorder %s51, %s65
      %p67 = scmp.eq.s32.totalorder %s20, 0
      %p68 = por %p66, %p67
      %s70 = sadd.s32 %s69, 1
      %p73 = scmp.eq.s32.totalorder %s14, 1
      %p74 = scmp.ne.s32.totalorder %s69, %s71
      %p75 = scmp.eq.s32.totalorder %s14, 0
      %p76 = por %p74, %p75
      %p77 = scmp.ne.s32.totalorder %s69, %s71
      %p78 = scmp.eq.s32.totalorder %s19, 1
      %p79 = por %p77, %p78
      %p80 = scmp.ne.s32.totalorder %s71, %s72
      %p81 = scmp.eq.s32.totalorder %s19, 0
      %p82 = por %p80, %p81
      %p83 = scmp.ne.s32.totalorder %s71, %s72
      %p84 = scmp.eq.s32.totalorder %s20, 1
      %p85 = por %p83, %p84
      %p87 = scmp.ne.s32.totalorder %s72, %s86
      %p88 = scmp.eq.s32.totalorder %s20, 0
      %p89 = por %p87, %p88
      %s91 = sadd.s32 %s90, 1
      %p94 = scmp.eq.s32.totalorder %s14, 1
      %p95 = scmp.ne.s32.totalorder %s90, %s92
      %p96 = scmp.eq.s32.totalorder %s14, 0
      %p97 = por %p95, %p96
      %p98 = scmp.ne.s32.totalorder %s90, %s92
      %p99 = scmp.eq.s32.totalorder %s19, 1
      %p100 = por %p98, %p99
      %p101 = scmp.ne.s32.totalorder %s92, %s93
      %p102 = scmp.eq.s32.totalorder %s19, 0
      %p103 = por %p101, %p102
      %p104 = scmp.ne.s32.totalorder %s92, %s93
      %p105 = scmp.eq.s32.totalorder %s20, 1
      %p106 = por %p104, %p105
      %p108 = scmp.ne.s32.totalorder %s93, %s107
      %p109 = scmp.eq.s32.totalorder %s20, 0
      %p110 = por %p108, %p109
      %s112 = sadd.s32 %s111, 1
      %p115 = scmp.eq.s32.totalorder %s14, 1
      %p116 = scmp.ne.s32.totalorder %s111, %s113
      %p117 = scmp.eq.s32.totalorder %s14, 0
      %p118 = por %p116, %p117
      %p119 = scmp.ne.s32.totalorder %s111, %s113
      %p120 = scmp.eq.s32.totalorder %s19, 1
      %p121 = por %p119, %p120
      %p122 = scmp.ne.s32.totalorder %s113, %s114
      %p123 = scmp.eq.s32.totalorder %s19, 0
      %p124 = por %p122, %p123
      %p125 = scmp.ne.s32.totalorder %s113, %s114
      %p126 = scmp.eq.s32.totalorder %s20, 1
      %p127 = por %p125, %p126
      %p129 = scmp.ne.s32.totalorder %s114, %s128
      %p130 = scmp.eq.s32.totalorder %s20, 0
      %p131 = por %p129, %p130
      %s132 = ssub.s32 %s14, %s21
      %p133 = scmp.eq.s32.totalorder %s132, 0
      %s135 = sadd.s32 %s134, 1
      %s136 = scalar_select %p133, %s134, %s135
      %p139 = pneg %p133
      %p140 = scmp.eq.s32.totalorder %s14, 1
      %p141 = por %p139, %p140
      %p142 = scmp.ne.s32.totalorder %s134, %s137
      %p143 = scmp.eq.s32.totalorder %s14, 0
      %p144 = por %p142, %p143
      %p145 = scmp.ne.s32.totalorder %s134, %s137
      %p146 = scmp.eq.s32.totalorder %s19, 1
      %p147 = por %p145, %p146
      %p148 = scmp.ne.s32.totalorder %s137, %s138
      %p149 = scmp.eq.s32.totalorder %s19, 0
      %p150 = por %p148, %p149
      %p151 = scmp.ne.s32.totalorder %s137, %s138
      %p152 = scmp.eq.s32.totalorder %s20, 1
      %p153 = por %p151, %p152
      %p155 = scmp.ne.s32.totalorder %s138, %s154
      %p156 = scmp.eq.s32.totalorder %s20, 0
      %p157 = por %p155, %p156
      %p158 = scmp.le.s32.totalorder 1, %s14
      %p159 = scmp.lt.s32.totalorder %s14, 3
      %p160 = pnand %p158, %p159
      %p161 = pneg %p160
      // Predicated region
      $region9: #{tgcn_forward.1} parent=5 // pred_check
        _
      $region10: #{tgcn_forward.1} parent=5 // pred_check_branch
        %163 = sbr.rel (%p160) target = $region12
      $region11: #{tgcn_forward.1} parent=5 // pred_region
        %s164 = ssub.s32 %s14, 1
        // Predicated region
        $region13: #{tgcn_forward.1} parent=11 // pred_check
          %p165 = pneg %p61
        $region14: #{tgcn_forward.1} parent=11 // pred_check_branch
          %167 = sbr.rel (%p165) target = $region16
        $region15: #{tgcn_forward.1} parent=11 // pred_region
          _
        $region16: #{tgcn_forward.1} parent=11 // pred_fallthru
          _
        // Predicated region
        $region17: #{tgcn_forward.1} parent=11 // pred_check
          %p168 = pneg %p82
        $region18: #{tgcn_forward.1} parent=11 // pred_check_branch
          %170 = sbr.rel (%p168) target = $region20
        $region19: #{tgcn_forward.1} parent=11 // pred_region
          _
        $region20: #{tgcn_forward.1} parent=11 // pred_fallthru
          _
        // Predicated region
        $region21: #{tgcn_forward.1} parent=11 // pred_check
          %p171 = pneg %p103
        $region22: #{tgcn_forward.1} parent=11 // pred_check_branch
          %173 = sbr.rel (%p171) target = $region24
        $region23: #{tgcn_forward.1} parent=11 // pred_region
          _
        $region24: #{tgcn_forward.1} parent=11 // pred_fallthru
          _
        // Predicated region
        $region25: #{tgcn_forward.1} parent=11 // pred_check
          %p174 = pneg %p124
        $region26: #{tgcn_forward.1} parent=11 // pred_check_branch
          %176 = sbr.rel (%p174) target = $region28
        $region27: #{tgcn_forward.1} parent=11 // pred_region
          _
        $region28: #{tgcn_forward.1} parent=11 // pred_fallthru
          _
      $region12: #{tgcn_forward.1} parent=5 // pred_fallthru
        _
      %p177 = scmp.lt.s32.totalorder %s14, 2
      // Predicated region
      $region29: #{tgcn_forward.1} parent=5 // pred_check
        %p178 = pneg %p177
      $region30: #{tgcn_forward.1} parent=5 // pred_check_branch
        %180 = sbr.rel (%p178) target = $region32
      $region31: #{tgcn_forward.1} parent=5 // pred_region
        // Predicated region
        $region33: #{tgcn_forward.1} parent=31 // pred_check
          %p181 = pneg %p34
        $region34: #{tgcn_forward.1} parent=31 // pred_check_branch
          %183 = sbr.rel (%p181) target = $region36
        $region35: #{tgcn_forward.1} parent=31 // pred_region
          %p184 = scmp.lt.s32.totalorder %s14, 1
          %s185 = scalar_select %p184, %s14, 1
          %s186 = smul.addr %s185, 16
          %s187 = smul.addr %s186, 8
          %s188 = scalar_lea.vmem %s0, %s187
        $region36: #{tgcn_forward.1} parent=31 // pred_fallthru
          _
      $region32: #{tgcn_forward.1} parent=5 // pred_fallthru
        _
      %p189 = scmp.le.s32.totalorder 1, %s14
      %p190 = scmp.lt.s32.totalorder %s14, 3
      %p191 = pnand %p189, %p190
      %p192 = pneg %p191
      // Predicated region
      $region37: #{tgcn_forward.1} parent=5 // pred_check
        _
      $region38: #{tgcn_forward.1} parent=5 // pred_check_branch
        %194 = sbr.rel (%p191) target = $region40
      $region39: #{tgcn_forward.1} parent=5 // pred_region
        %s195 = ssub.s32 %s14, 1
        %p196 = scmp.lt.s32.totalorder %s19, 1
        %s197 = scalar_select %p196, %s19, 1
        %s198 = smul.addr %s197, 16
        %s199 = smul.addr %s198, 8
        %s200 = scalar_lea.vmem %s0, %s199
        %p201 = pneg %p40
        %p202 = pneg %p37
        %p203 = pneg %p61
        %p204 = pneg %p58
        %p205 = pneg %p82
        %p206 = pneg %p79
        %p207 = pneg %p103
        %p208 = pneg %p100
        %p209 = pneg %p124
        %p210 = pneg %p121
        %p211 = pneg %p150
        %p212 = pneg %p147
        %s213 = sand.u32 %s137, 1
        %s214 = scalar_lea.sflag [#allocation3], %s213
        %s215 = sand.u32 %s137, 1
        %s216 = smul.addr %s215, 16
        %s217 = scalar_lea.vmem [#allocation2], %s216
        %p218 = scmp.lt.s32.totalorder %s19, 1
        %s219 = scalar_select %p218, %s19, 1
        %s220 = smul.addr %s219, 16
        %s221 = smul.addr %s220, 8
        %s222 = scalar_lea.vmem %s0, %s221
        %v223 = vld [vmem:[%s1] sm:$0xff]
        %v224 = vld [vmem:[%s1 + $0x8] sm:$0xff]
        %v225 = vld [vmem:[%s1 + $0x10] sm:$0xff]
        %v226 = vld [vmem:[%s1 + $0x18] sm:$0xff]
        %v227 = vld [vmem:[%s2] sm:$0xff]
        %v228 = vld [vmem:[%s2 + $0x8] sm:$0xff]
        %v229 = vld [vmem:[%s3] sm:$0xff]
        %v230 = vld [vmem:[%s3 + $0x8] sm:$0xff]
        %v231 = vld [vmem:[%s3 + $0x10] sm:$0xff]
        %v232 = vld [vmem:[%s3 + $0x18] sm:$0xff]
        %v233 = vld [vmem:[%s4] sm:$0xff]
        %v234 = vld [vmem:[%s4 + $0x8] sm:$0xff]
        %v235 = vld [vmem:[%s4 + $0x10] sm:$0xff]
        %v236 = vld [vmem:[%s4 + $0x18] sm:$0xff]
        %v237 = vlaneseq
        %v238 = vshrl.u32 %v237, 7
        %v239 = vadd.s32 %v238, 8
        %vm240 = vcmp.lt.s32.totalorder %v238, 0
        %v241 = vsub.s32 0, %v238
        %v242 = vsel %vm240, %v241, %v238
        %v243 = vshrl.u32 %v242, 1
        %v244 = vand.u32 %v242, 1
        %v245 = vsub.s32 0, %v244
        %v246 = vsel %vm240, %v245, %v244
        %vm247 = vcmp.lt.s32.totalorder %v239, 0
        %v248 = vsub.s32 0, %v239
        %v249 = vsel %vm247, %v248, %v239
        %v250 = vshrl.u32 %v249, 1
        %v251 = vand.u32 %v249, 1
        %v252 = vsub.s32 0, %v251
        %v253 = vsel %vm247, %v252, %v251
        %vm254 = vcmp.ne.s32.totalorder %v246, 0
        %vm255 = vcmp.ne.s32.totalorder %v253, 0
        %vm256 = vcmp.lt.s32.totalorder %v246, 0
        %vm257 = vcmp.lt.s32.totalorder %v253, 0
        %vm258 = vmand %vm256, %vm254
        %vm259 = vmand %vm257, %vm255
        %v260 = vadd.s32 %v246, 2
        %v261 = vadd.s32 %v253, 2
        %v262 = vsel %vm258, %v260, %v246
        %v263 = vsel %vm259, %v261, %v253
        %vm264 = vcmp.eq.s32.totalorder %v262, 0
        %vm265 = vcmp.eq.s32.totalorder %v263, 0
        %v266 = vld [vmem:[%s222] sm:$0xff]
        %v267 = vld [vmem:[%s222 + $0x8] sm:$0xff]
        %vm268 = vcmask 130048
        %v270 = vsel %vm268, %v223, 0
        %v273 = vsel %vm268, %v224, 0
        %v276 = vsel %vm268, %v225, 0
        %v279 = vsel %vm268, %v226, 0
        %281 = vmatprep.subr.mxu0 0.0
        %282 = vmatpush1.msra.mxu0 0.0
        %283 = vmatprep.subr.mxu0 0.0
        %284 = vmatpush1.msra.mxu0 0.0
        %285 = vmatprep.subr.mxu0 0.0
        %286 = vmatpush1.msra.mxu0 0.0
        %287 = vmatprep.subr.mxu0 0.0
        %288 = vmatpush1.msra.mxu0 0.0
        %289 = vmatprep.subr.mxu0 0.0
        %290 = vmatpush1.msra.mxu0 0.0
        %291 = vmatprep.subr.mxu0 0.0
        %292 = vmatpush1.msra.mxu0 0.0
        %293 = vmatprep.subr.mxu0 0.0
        %294 = vmatpush1.msra.mxu0 0.0
        %295 = vmatprep.subr.mxu0 0.0
        %296 = vmatpush1.msra.mxu0 0.0
        %297 = vmatprep.subr.mxu0 0.0
        %298 = vmatpush1.msra.mxu0 0.0
        %299 = vmatprep.subr.mxu0 0.0
        %300 = vmatpush1.msra.mxu0 0.0
        %301 = vmatprep.subr.mxu0 0.0
        %302 = vmatpush1.msra.mxu0 0.0
        %303 = vmatprep.subr.mxu0 0.0
        %304 = vmatpush1.msra.mxu0 0.0
        %305 = vmatprep.subr.mxu0 0.0
        %306 = vmatpush1.msra.mxu0 0.0
        %307 = vmatprep.subr.mxu0 0.0
        %308 = vmatpush1.msra.mxu0 0.0
        %309 = vmatprep.subr.mxu0 0.0
        %310 = vmatpush1.msra.mxu0 0.0
        %311 = vmatprep.subr.mxu0 0.0
        %312 = vmatpush1.msra.mxu0 0.0
        %313 = vmatprep.subr.mxu0 0.0
        %314 = vmatpush1.msra.mxu0 0.0
        %315 = vmatprep.subr.mxu0 0.0
        %316 = vmatpush1.msra.mxu0 0.0
        %317 = vmatprep.subr.mxu0 0.0
        %318 = vmatpush1.msra.mxu0 0.0
        %319 = vmatprep.subr.mxu0 0.0
        %320 = vmatpush1.msra.mxu0 0.0
        %321 = vmatprep.subr.mxu0 0.0
        %322 = vmatpush1.msra.mxu0 0.0
        %323 = vmatprep.subr.mxu0 0.0
        %324 = vmatpush1.msra.mxu0 0.0
        %325 = vmatprep.subr.mxu0 0.0
        %326 = vmatpush1.msra.mxu0 0.0
        %327 = vmatprep.subr.mxu0 0.0
        %328 = vmatpush1.msra.mxu0 0.0
        %329 = vmatprep.subr.mxu0 0.0
        %330 = vmatpush1.msra.mxu0 0.0
        %331 = vmatprep.subr.mxu0 0.0
        %332 = vmatpush1.msra.mxu0 0.0
        %333 = vmatprep.subr.mxu0 0.0
        %334 = vmatpush1.msra.mxu0 0.0
        %335 = vmatprep.subr.mxu0 0.0
        %336 = vmatpush1.msra.mxu0 0.0
        %337 = vmatprep.subr.mxu0 0.0
        %338 = vmatpush1.msra.mxu0 0.0
        %339 = vmatprep.subr.mxu0 0.0
        %340 = vmatpush1.msra.mxu0 0.0
        %341 = vmatprep.subr.mxu0 0.0
        %342 = vmatpush1.msra.mxu0 0.0
        %343 = vmatprep.subr.mxu0 0.0
        %344 = vmatpush1.msra.mxu0 0.0
        %345 = vmatprep.mubr.f32.mxu0 0.0
        %346 = vmatmul.mubr.f32.gmra.mrb[0].mxu0 %v270
        %v347 = vpop.f32.mrb[0].mxu0
        %v348 = vadd.f32 0.0, %v347
        %v349 = vpop.f32.mrb[0].mxu0
        %350 = vmatprep.mubr.f32.mxu0 0.0
        %351 = vmatmul.mubr.f32.gmra.mrb[0].mxu0 %v273
        %v352 = vpop.f32.mrb[0].mxu0
        %v353 = vadd.f32 0.0, %v352
        %v354 = vpop.f32.mrb[0].mxu0
        %355 = vmatprep.mubr.f32.mxu0 0.0
        %356 = vmatmul.mubr.f32.gmra.mrb[0].mxu0 %v276
        %v357 = vpop.f32.mrb[0].mxu0
        %v358 = vadd.f32 0.0, %v357
        %v359 = vpop.f32.mrb[0].mxu0
        %360 = vmatprep.mubr.f32.mxu0 0.0
        %361 = vmatmul.mubr.f32.gmra.mrb[0].mxu0 %v279
        %v362 = vpop.f32.mrb[0].mxu0
        %v363 = vadd.f32 0.0, %v362
        %v364 = vpop.f32.mrb[0].mxu0
        %365 = vdwg.mxu0
        %vm366 = vcmask 261120
        %v368 = vsel %vm366, %v348, 0
        %v371 = vsel %vm366, %v353, 0
        %v374 = vsel %vm366, %v358, 0
        %v377 = vsel %vm366, %v363, 0
        %379 = vmatprep.subr.mxu0 0.0
        %380 = vmatpush1.msra.mxu0 %v229
        %381 = vmatprep.subr.mxu0 0.0
        %382 = vmatpush1.msra.mxu0 %v230
        %383 = vmatprep.subr.mxu0 0.0
        %384 = vmatpush1.msra.mxu0 %v231
        %385 = vmatprep.subr.mxu0 0.0
        %386 = vmatpush1.msra.mxu0 %v232
        %387 = vmatprep.subr.mxu0 0.0
        %388 = vmatpush1.msra.mxu0 0.0
        %389 = vmatprep.subr.mxu0 0.0
        %390 = vmatpush1.msra.mxu0 0.0
        %391 = vmatprep.subr.mxu0 0.0
        %392 = vmatpush1.msra.mxu0 0.0
        %393 = vmatprep.subr.mxu0 0.0
        %394 = vmatpush1.msra.mxu0 0.0
        %395 = vmatprep.subr.mxu0 0.0
        %396 = vmatpush1.msra.mxu0 0.0
        %397 = vmatprep.subr.mxu0 0.0
        %398 = vmatpush1.msra.mxu0 0.0
        %399 = vmatprep.subr.mxu0 0.0
        %400 = vmatpush1.msra.mxu0 0.0
        %401 = vmatprep.subr.mxu0 0.0
        %402 = vmatpush1.msra.mxu0 0.0
        %403 = vmatprep.subr.mxu0 0.0
        %404 = vmatpush1.msra.mxu0 0.0
        %405 = vmatprep.subr.mxu0 0.0
        %406 = vmatpush1.msra.mxu0 0.0
        %407 = vmatprep.subr.mxu0 0.0
        %408 = vmatpush1.msra.mxu0 0.0
        %409 = vmatprep.subr.mxu0 0.0
        %410 = vmatpush1.msra.mxu0 0.0
        %411 = vmatprep.subr.mxu0 0.0
        %412 = vmatpush1.msra.mxu0 0.0
        %413 = vmatprep.subr.mxu0 0.0
        %414 = vmatpush1.msra.mxu0 0.0
        %415 = vmatprep.subr.mxu0 0.0
        %416 = vmatpush1.msra.mxu0 0.0
        %417 = vmatprep.subr.mxu0 0.0
        %418 = vmatpush1.msra.mxu0 0.0
        %419 = vmatprep.subr.mxu0 0.0
        %420 = vmatpush1.msra.mxu0 0.0
        %421 = vmatprep.subr.mxu0 0.0
        %422 = vmatpush1.msra.mxu0 0.0
        %423 = vmatprep.subr.mxu0 0.0
        %424 = vmatpush1.msra.mxu0 0.0
        %425 = vmatprep.subr.mxu0 0.0
        %426 = vmatpush1.msra.mxu0 0.0
        %427 = vmatprep.subr.mxu0 0.0
        %428 = vmatpush1.msra.mxu0 0.0
        %429 = vmatprep.subr.mxu0 0.0
        %430 = vmatpush1.msra.mxu0 0.0
        %431 = vmatprep.subr.mxu0 0.0
        %432 = vmatpush1.msra.mxu0 0.0
        %433 = vmatprep.subr.mxu0 0.0
        %434 = vmatpush1.msra.mxu0 0.0
        %435 = vmatprep.subr.mxu0 0.0
        %436 = vmatpush1.msra.mxu0 0.0
        %437 = vmatprep.subr.mxu0 0.0
        %438 = vmatpush1.msra.mxu0 0.0
        %439 = vmatprep.subr.mxu0 0.0
        %440 = vmatpush1.msra.mxu0 0.0
        %441 = vmatprep.subr.mxu0 0.0
        %442 = vmatpush1.msra.mxu0 0.0
        %443 = vmatprep.mubr.f32.mxu0 0.0
        %444 = vmatmul.mubr.f32.gmra.mrb[0].mxu0 %v368
        %v445 = vpop.f32.mrb[0].mxu0
        %v446 = vadd.f32 0.0, %v445
        %v447 = vpop.f32.mrb[0].mxu0
        %448 = vmatprep.mubr.f32.mxu0 0.0
        %449 = vmatmul.mubr.f32.gmra.mrb[0].mxu0 %v371
        %v450 = vpop.f32.mrb[0].mxu0
        %v451 = vadd.f32 0.0, %v450
        %v452 = vpop.f32.mrb[0].mxu0
        %453 = vmatprep.mubr.f32.mxu0 0.0
        %454 = vmatmul.mubr.f32.gmra.mrb[0].mxu0 %v374
        %v455 = vpop.f32.mrb[0].mxu0
        %v456 = vadd.f32 0.0, %v455
        %v457 = vpop.f32.mrb[0].mxu0
        %458 = vmatprep.mubr.f32.mxu0 0.0
        %459 = vmatmul.mubr.f32.gmra.mrb[0].mxu0 %v377
        %v460 = vpop.f32.mrb[0].mxu0
        %v461 = vadd.f32 0.0, %v460
        %v462 = vpop.f32.mrb[0].mxu0
        %463 = vdwg.mxu0
        %466 = vrot.lane.b32.xlu0 %v446, 96
        %v467 = vpop.permute.xlu0 %466
        %468 = vrot.lane.b32.xlu0 %v451, 96
        %v469 = vpop.permute.xlu0 %468
        %v472 = vsel %vm264, %v446, %v467
        %v473 = vsel %vm265, %v451, %v469
        %v474 = vadd.f32 %v266, %v472
        %v475 = vadd.f32 %v267, %v473
        %v476 = vxor.u32 %v474, 2147483648
        %v477 = vxor.u32 %v475, 2147483648
        %v478 = vmul.f32 %v476, 1.442695
        %v479 = vpow.pop %v478
        %v480 = vmul.f32 %v477, 1.442695
        %v481 = vpow.pop %v480
        %v482 = vadd.f32 %v479, 1.0
        %v483 = vadd.f32 %v481, 1.0
        %v484 = vrcp.pop %v482
        %v485 = vmul.f32 1.0, %v484
        %v486 = vrcp.pop %v483
        %v487 = vmul.f32 1.0, %v486
        %490 = vrot.lane.b32.xlu0 %v456, 96
        %v491 = vpop.permute.xlu0 %490
        %492 = vrot.lane.b32.xlu0 %v461, 96
        %v493 = vpop.permute.xlu0 %492
        %v496 = vsel %vm264, %v456, %v491
        %v497 = vsel %vm265, %v461, %v493
        %500 = vrot.lane.b32.xlu0 %v496, 32
        %v501 = vpop.permute.xlu0 %500
        %502 = vrot.lane.b32.xlu0 %v497, 32
        %v503 = vpop.permute.xlu0 %502
        %v506 = vadd.f32 %v266, %v501
        %v507 = vadd.f32 %v267, %v503
        %v508 = vxor.u32 %v506, 2147483648
        %v509 = vxor.u32 %v507, 2147483648
        %v510 = vmul.f32 %v508, 1.442695
        %v511 = vpow.pop %v510
        %v512 = vmul.f32 %v509, 1.442695
        %v513 = vpow.pop %v512
        %v514 = vadd.f32 %v511, 1.0
        %v515 = vadd.f32 %v513, 1.0
        %v516 = vrcp.pop %v514
        %v517 = vmul.f32 1.0, %v516
        %v518 = vrcp.pop %v515
        %v519 = vmul.f32 1.0, %v518
        %v520 = vmul.f32 %v485, 0.0
        %v521 = vmul.f32 %v487, 0.0
        %v523 = vsel %vm268, %v227, 0
        %v526 = vsel %vm268, %v228, 0
        %528 = vmatprep.subr.mxu0 0.0
        %529 = vmatpush1.msra.mxu0 %v520
        %530 = vmatprep.subr.mxu0 0.0
        %531 = vmatpush1.msra.mxu0 %v521
        %532 = vmatprep.subr.mxu0 0.0
        %533 = vmatpush1.msra.mxu0 0.0
        %534 = vmatprep.subr.mxu0 0.0
        %535 = vmatpush1.msra.mxu0 0.0
        %536 = vmatprep.subr.mxu0 0.0
        %537 = vmatpush1.msra.mxu0 0.0
        %538 = vmatprep.subr.mxu0 0.0
        %539 = vmatpush1.msra.mxu0 0.0
        %540 = vmatprep.subr.mxu0 0.0
        %541 = vmatpush1.msra.mxu0 0.0
        %542 = vmatprep.subr.mxu0 0.0
        %543 = vmatpush1.msra.mxu0 0.0
        %544 = vmatprep.subr.mxu0 0.0
        %545 = vmatpush1.msra.mxu0 0.0
        %546 = vmatprep.subr.mxu0 0.0
        %547 = vmatpush1.msra.mxu0 0.0
        %548 = vmatprep.subr.mxu0 0.0
        %549 = vmatpush1.msra.mxu0 0.0
        %550 = vmatprep.subr.mxu0 0.0
        %551 = vmatpush1.msra.mxu0 0.0
        %552 = vmatprep.subr.mxu0 0.0
        %553 = vmatpush1.msra.mxu0 0.0
        %554 = vmatprep.subr.mxu0 0.0
        %555 = vmatpush1.msra.mxu0 0.0
        %556 = vmatprep.subr.mxu0 0.0
        %557 = vmatpush1.msra.mxu0 0.0
        %558 = vmatprep.subr.mxu0 0.0
        %559 = vmatpush1.msra.mxu0 0.0
        %560 = vmatprep.subr.mxu0 0.0
        %561 = vmatpush1.msra.mxu0 0.0
        %562 = vmatprep.subr.mxu0 0.0
        %563 = vmatpush1.msra.mxu0 0.0
        %564 = vmatprep.subr.mxu0 0.0
        %565 = vmatpush1.msra.mxu0 0.0
        %566 = vmatprep.subr.mxu0 0.0
        %567 = vmatpush1.msra.mxu0 0.0
        %568 = vmatprep.subr.mxu0 0.0
        %569 = vmatpush1.msra.mxu0 0.0
        %570 = vmatprep.subr.mxu0 0.0
        %571 = vmatpush1.msra.mxu0 0.0
        %572 = vmatprep.subr.mxu0 0.0
        %573 = vmatpush1.msra.mxu0 0.0
        %574 = vmatprep.subr.mxu0 0.0
        %575 = vmatpush1.msra.mxu0 0.0
        %576 = vmatprep.subr.mxu0 0.0
        %577 = vmatpush1.msra.mxu0 0.0
        %578 = vmatprep.subr.mxu0 0.0
        %579 = vmatpush1.msra.mxu0 0.0
        %580 = vmatprep.subr.mxu0 0.0
        %581 = vmatpush1.msra.mxu0 0.0
        %582 = vmatprep.subr.mxu0 0.0
        %583 = vmatpush1.msra.mxu0 0.0
        %584 = vmatprep.subr.mxu0 0.0
        %585 = vmatpush1.msra.mxu0 0.0
        %586 = vmatprep.subr.mxu0 0.0
        %587 = vmatpush1.msra.mxu0 0.0
        %588 = vmatprep.subr.mxu0 0.0
        %589 = vmatpush1.msra.mxu0 0.0
        %590 = vmatprep.subr.mxu0 0.0
        %591 = vmatpush1.msra.mxu0 0.0
        %592 = vmatprep.mubr.f32.mxu0 0.0
        %593 = vmatmul.mubr.f32.gmra.mrb[0].mxu0 %v523
        %v594 = vpop.f32.mrb[0].mxu0
        %v595 = vadd.f32 0.0, %v594
        %v596 = vpop.f32.mrb[0].mxu0
        %597 = vmatprep.mubr.f32.mxu0 0.0
        %598 = vmatmul.mubr.f32.gmra.mrb[0].mxu0 %v526
        %v599 = vpop.f32.mrb[0].mxu0
        %v600 = vadd.f32 0.0, %v599
        %v601 = vpop.f32.mrb[0].mxu0
        %602 = vdwg.mxu0
        %v604 = vsel %vm366, %v595, 0
        %v607 = vsel %vm366, %v600, 0
        %609 = vmatprep.subr.mxu0 0.0
        %610 = vmatpush1.msra.mxu0 %v233
        %611 = vmatprep.subr.mxu0 0.0
        %612 = vmatpush1.msra.mxu0 %v234
        %613 = vmatprep.subr.mxu0 0.0
        %614 = vmatpush1.msra.mxu0 %v235
        %615 = vmatprep.subr.mxu0 0.0
        %616 = vmatpush1.msra.mxu0 %v236
        %617 = vmatprep.subr.mxu0 0.0
        %618 = vmatpush1.msra.mxu0 0.0
        %619 = vmatprep.subr.mxu0 0.0
        %620 = vmatpush1.msra.mxu0 0.0
        %621 = vmatprep.subr.mxu0 0.0
        %622 = vmatpush1.msra.mxu0 0.0
        %623 = vmatprep.subr.mxu0 0.0
        %624 = vmatpush1.msra.mxu0 0.0
        %625 = vmatprep.subr.mxu0 0.0
        %626 = vmatpush1.msra.mxu0 0.0
        %627 = vmatprep.subr.mxu0 0.0
        %628 = vmatpush1.msra.mxu0 0.0
        %629 = vmatprep.subr.mxu0 0.0
        %630 = vmatpush1.msra.mxu0 0.0
        %631 = vmatprep.subr.mxu0 0.0
        %632 = vmatpush1.msra.mxu0 0.0
        %633 = vmatprep.subr.mxu0 0.0
        %634 = vmatpush1.msra.mxu0 0.0
        %635 = vmatprep.subr.mxu0 0.0
        %636 = vmatpush1.msra.mxu0 0.0
        %637 = vmatprep.subr.mxu0 0.0
        %638 = vmatpush1.msra.mxu0 0.0
        %639 = vmatprep.subr.mxu0 0.0
        %640 = vmatpush1.msra.mxu0 0.0
        %641 = vmatprep.subr.mxu0 0.0
        %642 = vmatpush1.msra.mxu0 0.0
        %643 = vmatprep.subr.mxu0 0.0
        %644 = vmatpush1.msra.mxu0 0.0
        %645 = vmatprep.subr.mxu0 0.0
        %646 = vmatpush1.msra.mxu0 0.0
        %647 = vmatprep.subr.mxu0 0.0
        %648 = vmatpush1.msra.mxu0 0.0
        %649 = vmatprep.subr.mxu0 0.0
        %650 = vmatpush1.msra.mxu0 0.0
        %651 = vmatprep.subr.mxu0 0.0
        %652 = vmatpush1.msra.mxu0 0.0
        %653 = vmatprep.subr.mxu0 0.0
        %654 = vmatpush1.msra.mxu0 0.0
        %655 = vmatprep.subr.mxu0 0.0
        %656 = vmatpush1.msra.mxu0 0.0
        %657 = vmatprep.subr.mxu0 0.0
        %658 = vmatpush1.msra.mxu0 0.0
        %659 = vmatprep.subr.mxu0 0.0
        %660 = vmatpush1.msra.mxu0 0.0
        %661 = vmatprep.subr.mxu0 0.0
        %662 = vmatpush1.msra.mxu0 0.0
        %663 = vmatprep.subr.mxu0 0.0
        %664 = vmatpush1.msra.mxu0 0.0
        %665 = vmatprep.subr.mxu0 0.0
        %666 = vmatpush1.msra.mxu0 0.0
        %667 = vmatprep.subr.mxu0 0.0
        %668 = vmatpush1.msra.mxu0 0.0
        %669 = vmatprep.subr.mxu0 0.0
        %670 = vmatpush1.msra.mxu0 0.0
        %671 = vmatprep.subr.mxu0 0.0
        %672 = vmatpush1.msra.mxu0 0.0
        %673 = vmatprep.mubr.f32.mxu0 0.0
        %674 = vmatmul.mubr.f32.gmra.mrb[0].mxu0 %v604
        %v675 = vpop.f32.mrb[0].mxu0
        %v676 = vadd.f32 0.0, %v675
        %v677 = vpop.f32.mrb[0].mxu0
        %678 = vmatprep.mubr.f32.mxu0 0.0
        %679 = vmatmul.mubr.f32.gmra.mrb[0].mxu0 %v607
        %v680 = vpop.f32.mrb[0].mxu0
        %v681 = vadd.f32 0.0, %v680
        %v682 = vpop.f32.mrb[0].mxu0
        %683 = vdwg.mxu0
        %686 = vrot.lane.b32.xlu0 %v676, 64
        %v687 = vpop.permute.xlu0 %686
        %688 = vrot.lane.b32.xlu0 %v681, 64
        %v689 = vpop.permute.xlu0 %688
        %v692 = vadd.f32 %v266, %v687
        %v693 = vadd.f32 %v267, %v689
        %v694 = vtanh.pop %v692
        %v695 = vtanh.pop %v693
        %v696 = vmul.f32 %v517, 0.0
        %v697 = vmul.f32 %v519, 0.0
        %v698 = vsub.f32 1.0, %v517
        %v699 = vsub.f32 1.0, %v519
        %702 = vrot.lane.b32.xlu0 %v694, 96
        %v703 = vpop.permute.xlu0 %702
        %704 = vrot.lane.b32.xlu0 %v695, 96
        %v705 = vpop.permute.xlu0 %704
        %v708 = vmul.f32 %v698, %v703
        %v709 = vmul.f32 %v699, %v705
        %v710 = vadd.f32 %v696, %v708
        %v711 = vadd.f32 %v697, %v709
        %s712 = scalar_lea.vmem %s222, 16
        %v713 = vld [vmem:[%s712] sm:$0xff]
        %v714 = vld [vmem:[%s712 + $0x8] sm:$0xff]
        %717 = vrot.lane.b32.xlu0 %v710, 96
        %v718 = vpop.permute.xlu0 %717
        %719 = vrot.lane.b32.xlu0 %v711, 96
        %v720 = vpop.permute.xlu0 %719
        %723 = vmatprep.subr.mxu0 0.0
        %724 = vmatpush1.msra.mxu0 %v718
        %725 = vmatprep.subr.mxu0 0.0
        %726 = vmatpush1.msra.mxu0 %v720
        %727 = vmatprep.subr.mxu0 0.0
        %728 = vmatpush1.msra.mxu0 0.0
        %729 = vmatprep.subr.mxu0 0.0
        %730 = vmatpush1.msra.mxu0 0.0
        %731 = vmatprep.subr.mxu0 0.0
        %732 = vmatpush1.msra.mxu0 0.0
        %733 = vmatprep.subr.mxu0 0.0
        %734 = vmatpush1.msra.mxu0 0.0
        %735 = vmatprep.subr.mxu0 0.0
        %736 = vmatpush1.msra.mxu0 0.0
        %737 = vmatprep.subr.mxu0 0.0
        %738 = vmatpush1.msra.mxu0 0.0
        %739 = vmatprep.subr.mxu0 0.0
        %740 = vmatpush1.msra.mxu0 0.0
        %741 = vmatprep.subr.mxu0 0.0
        %742 = vmatpush1.msra.mxu0 0.0
        %743 = vmatprep.subr.mxu0 0.0
        %744 = vmatpush1.msra.mxu0 0.0
        %745 = vmatprep.subr.mxu0 0.0
        %746 = vmatpush1.msra.mxu0 0.0
        %747 = vmatprep.subr.mxu0 0.0
        %748 = vmatpush1.msra.mxu0 0.0
        %749 = vmatprep.subr.mxu0 0.0
        %750 = vmatpush1.msra.mxu0 0.0
        %751 = vmatprep.subr.mxu0 0.0
        %752 = vmatpush1.msra.mxu0 0.0
        %753 = vmatprep.subr.mxu0 0.0
        %754 = vmatpush1.msra.mxu0 0.0
        %755 = vmatprep.subr.mxu0 0.0
        %756 = vmatpush1.msra.mxu0 0.0
        %757 = vmatprep.subr.mxu0 0.0
        %758 = vmatpush1.msra.mxu0 0.0
        %759 = vmatprep.subr.mxu0 0.0
        %760 = vmatpush1.msra.mxu0 0.0
        %761 = vmatprep.subr.mxu0 0.0
        %762 = vmatpush1.msra.mxu0 0.0
        %763 = vmatprep.subr.mxu0 0.0
        %764 = vmatpush1.msra.mxu0 0.0
        %765 = vmatprep.subr.mxu0 0.0
        %766 = vmatpush1.msra.mxu0 0.0
        %767 = vmatprep.subr.mxu0 0.0
        %768 = vmatpush1.msra.mxu0 0.0
        %769 = vmatprep.subr.mxu0 0.0
        %770 = vmatpush1.msra.mxu0 0.0
        %771 = vmatprep.subr.mxu0 0.0
        %772 = vmatpush1.msra.mxu0 0.0
        %773 = vmatprep.subr.mxu0 0.0
        %774 = vmatpush1.msra.mxu0 0.0
        %775 = vmatprep.subr.mxu0 0.0
        %776 = vmatpush1.msra.mxu0 0.0
        %777 = vmatprep.subr.mxu0 0.0
        %778 = vmatpush1.msra.mxu0 0.0
        %779 = vmatprep.subr.mxu0 0.0
        %780 = vmatpush1.msra.mxu0 0.0
        %781 = vmatprep.subr.mxu0 0.0
        %782 = vmatpush1.msra.mxu0 0.0
        %783 = vmatprep.subr.mxu0 0.0
        %784 = vmatpush1.msra.mxu0 0.0
        %785 = vmatprep.subr.mxu0 0.0
        %786 = vmatpush1.msra.mxu0 0.0
        %787 = vmatprep.mubr.f32.mxu0 0.0
        %788 = vmatmul.mubr.f32.gmra.mrb[0].mxu0 %v270
        %v789 = vpop.f32.mrb[0].mxu0
        %v790 = vadd.f32 0.0, %v789
        %v791 = vpop.f32.mrb[0].mxu0
        %792 = vmatprep.mubr.f32.mxu0 0.0
        %793 = vmatmul.mubr.f32.gmra.mrb[0].mxu0 %v273
        %v794 = vpop.f32.mrb[0].mxu0
        %v795 = vadd.f32 0.0, %v794
        %v796 = vpop.f32.mrb[0].mxu0
        %797 = vmatprep.mubr.f32.mxu0 0.0
        %798 = vmatmul.mubr.f32.gmra.mrb[0].mxu0 %v276
        %v799 = vpop.f32.mrb[0].mxu0
        %v800 = vadd.f32 0.0, %v799
        %v801 = vpop.f32.mrb[0].mxu0
        %802 = vmatprep.mubr.f32.mxu0 0.0
        %803 = vmatmul.mubr.f32.gmra.mrb[0].mxu0 %v279
        %v804 = vpop.f32.mrb[0].mxu0
        %v805 = vadd.f32 0.0, %v804
        %v806 = vpop.f32.mrb[0].mxu0
        %807 = vdwg.mxu0
        %v809 = vsel %vm366, %v790, 0
        %v812 = vsel %vm366, %v795, 0
        %v815 = vsel %vm366, %v800, 0
        %v818 = vsel %vm366, %v805, 0
        %820 = vmatprep.subr.mxu0 0.0
        %821 = vmatpush1.msra.mxu0 %v229
        %822 = vmatprep.subr.mxu0 0.0
        %823 = vmatpush1.msra.mxu0 %v230
        %824 = vmatprep.subr.mxu0 0.0
        %825 = vmatpush1.msra.mxu0 %v231
        %826 = vmatprep.subr.mxu0 0.0
        %827 = vmatpush1.msra.mxu0 %v232
        %828 = vmatprep.subr.mxu0 0.0
        %829 = vmatpush1.msra.mxu0 0.0
        %830 = vmatprep.subr.mxu0 0.0
        %831 = vmatpush1.msra.mxu0 0.0
        %832 = vmatprep.subr.mxu0 0.0
        %833 = vmatpush1.msra.mxu0 0.0
        %834 = vmatprep.subr.mxu0 0.0
        %835 = vmatpush1.msra.mxu0 0.0
        %836 = vmatprep.subr.mxu0 0.0
        %837 = vmatpush1.msra.mxu0 0.0
        %838 = vmatprep.subr.mxu0 0.0
        %839 = vmatpush1.msra.mxu0 0.0
        %840 = vmatprep.subr.mxu0 0.0
        %841 = vmatpush1.msra.mxu0 0.0
        %842 = vmatprep.subr.mxu0 0.0
        %843 = vmatpush1.msra.mxu0 0.0
        %844 = vmatprep.subr.mxu0 0.0
        %845 = vmatpush1.msra.mxu0 0.0
        %846 = vmatprep.subr.mxu0 0.0
        %847 = vmatpush1.msra.mxu0 0.0
        %848 = vmatprep.subr.mxu0 0.0
        %849 = vmatpush1.msra.mxu0 0.0
        %850 = vmatprep.subr.mxu0 0.0
        %851 = vmatpush1.msra.mxu0 0.0
        %852 = vmatprep.subr.mxu0 0.0
        %853 = vmatpush1.msra.mxu0 0.0
        %854 = vmatprep.subr.mxu0 0.0
        %855 = vmatpush1.msra.mxu0 0.0
        %856 = vmatprep.subr.mxu0 0.0
        %857 = vmatpush1.msra.mxu0 0.0
        %858 = vmatprep.subr.mxu0 0.0
        %859 = vmatpush1.msra.mxu0 0.0
        %860 = vmatprep.subr.mxu0 0.0
        %861 = vmatpush1.msra.mxu0 0.0
        %862 = vmatprep.subr.mxu0 0.0
        %863 = vmatpush1.msra.mxu0 0.0
        %864 = vmatprep.subr.mxu0 0.0
        %865 = vmatpush1.msra.mxu0 0.0
        %866 = vmatprep.subr.mxu0 0.0
        %867 = vmatpush1.msra.mxu0 0.0
        %868 = vmatprep.subr.mxu0 0.0
        %869 = vmatpush1.msra.mxu0 0.0
        %870 = vmatprep.subr.mxu0 0.0
        %871 = vmatpush1.msra.mxu0 0.0
        %872 = vmatprep.subr.mxu0 0.0
        %873 = vmatpush1.msra.mxu0 0.0
        %874 = vmatprep.subr.mxu0 0.0
        %875 = vmatpush1.msra.mxu0 0.0
        %876 = vmatprep.subr.mxu0 0.0
        %877 = vmatpush1.msra.mxu0 0.0
        %878 = vmatprep.subr.mxu0 0.0
        %879 = vmatpush1.msra.mxu0 0.0
        %880 = vmatprep.subr.mxu0 0.0
        %881 = vmatpush1.msra.mxu0 0.0
        %882 = vmatprep.subr.mxu0 0.0
        %883 = vmatpush1.msra.mxu0 0.0
        %884 = vmatprep.mubr.f32.mxu0 0.0
        %885 = vmatmul.mubr.f32.gmra.mrb[0].mxu0 %v809
        %v886 = vpop.f32.mrb[0].mxu0
        %v887 = vadd.f32 0.0, %v886
        %v888 = vpop.f32.mrb[0].mxu0
        %889 = vmatprep.mubr.f32.mxu0 0.0
        %890 = vmatmul.mubr.f32.gmra.mrb[0].mxu0 %v812
        %v891 = vpop.f32.mrb[0].mxu0
        %v892 = vadd.f32 0.0, %v891
        %v893 = vpop.f32.mrb[0].mxu0
        %894 = vmatprep.mubr.f32.mxu0 0.0
        %895 = vmatmul.mubr.f32.gmra.mrb[0].mxu0 %v815
        %v896 = vpop.f32.mrb[0].mxu0
        %v897 = vadd.f32 0.0, %v896
        %v898 = vpop.f32.mrb[0].mxu0
        %899 = vmatprep.mubr.f32.mxu0 0.0
        %900 = vmatmul.mubr.f32.gmra.mrb[0].mxu0 %v818
        %v901 = vpop.f32.mrb[0].mxu0
        %v902 = vadd.f32 0.0, %v901
        %v903 = vpop.f32.mrb[0].mxu0
        %904 = vdwg.mxu0
        %907 = vrot.lane.b32.xlu0 %v887, 96
        %v908 = vpop.permute.xlu0 %907
        %909 = vrot.lane.b32.xlu0 %v892, 96
        %v910 = vpop.permute.xlu0 %909
        %v913 = vsel %vm264, %v887, %v908
        %v914 = vsel %vm265, %v892, %v910
        %v915 = vadd.f32 %v713, %v913
        %v916 = vadd.f32 %v714, %v914
        %v917 = vxor.u32 %v915, 2147483648
        %v918 = vxor.u32 %v916, 2147483648
        %v919 = vmul.f32 %v917, 1.442695
        %v920 = vpow.pop %v919
        %v921 = vmul.f32 %v918, 1.442695
        %v922 = vpow.pop %v921
        %v923 = vadd.f32 %v920, 1.0
        %v924 = vadd.f32 %v922, 1.0
        %v925 = vrcp.pop %v923
        %v926 = vmul.f32 1.0, %v925
        %v927 = vrcp.pop %v924
        %v928 = vmul.f32 1.0, %v927
        %931 = vrot.lane.b32.xlu0 %v897, 96
        %v932 = vpop.permute.xlu0 %931
        %933 = vrot.lane.b32.xlu0 %v902, 96
        %v934 = vpop.permute.xlu0 %933
        %v937 = vsel %vm264, %v897, %v932
        %v938 = vsel %vm265, %v902, %v934
        %941 = vrot.lane.b32.xlu0 %v937, 32
        %v942 = vpop.permute.xlu0 %941
        %943 = vrot.lane.b32.xlu0 %v938, 32
        %v944 = vpop.permute.xlu0 %943
        %v947 = vadd.f32 %v713, %v942
        %v948 = vadd.f32 %v714, %v944
        %v949 = vxor.u32 %v947, 2147483648
        %v950 = vxor.u32 %v948, 2147483648
        %v951 = vmul.f32 %v949, 1.442695
        %v952 = vpow.pop %v951
        %v953 = vmul.f32 %v950, 1.442695
        %v954 = vpow.pop %v953
        %v955 = vadd.f32 %v952, 1.0
        %v956 = vadd.f32 %v954, 1.0
        %v957 = vrcp.pop %v955
        %v958 = vmul.f32 1.0, %v957
        %v959 = vrcp.pop %v956
        %v960 = vmul.f32 1.0, %v959
        %v961 = vmul.f32 %v926, %v718
        %v962 = vmul.f32 %v928, %v720
        %963 = vmatprep.subr.mxu0 0.0
        %964 = vmatpush1.msra.mxu0 %v961
        %965 = vmatprep.subr.mxu0 0.0
        %966 = vmatpush1.msra.mxu0 %v962
        %967 = vmatprep.subr.mxu0 0.0
        %968 = vmatpush1.msra.mxu0 0.0
        %969 = vmatprep.subr.mxu0 0.0
        %970 = vmatpush1.msra.mxu0 0.0
        %971 = vmatprep.subr.mxu0 0.0
        %972 = vmatpush1.msra.mxu0 0.0
        %973 = vmatprep.subr.mxu0 0.0
        %974 = vmatpush1.msra.mxu0 0.0
        %975 = vmatprep.subr.mxu0 0.0
        %976 = vmatpush1.msra.mxu0 0.0
        %977 = vmatprep.subr.mxu0 0.0
        %978 = vmatpush1.msra.mxu0 0.0
        %979 = vmatprep.subr.mxu0 0.0
        %980 = vmatpush1.msra.mxu0 0.0
        %981 = vmatprep.subr.mxu0 0.0
        %982 = vmatpush1.msra.mxu0 0.0
        %983 = vmatprep.subr.mxu0 0.0
        %984 = vmatpush1.msra.mxu0 0.0
        %985 = vmatprep.subr.mxu0 0.0
        %986 = vmatpush1.msra.mxu0 0.0
        %987 = vmatprep.subr.mxu0 0.0
        %988 = vmatpush1.msra.mxu0 0.0
        %989 = vmatprep.subr.mxu0 0.0
        %990 = vmatpush1.msra.mxu0 0.0
        %991 = vmatprep.subr.mxu0 0.0
        %992 = vmatpush1.msra.mxu0 0.0
        %993 = vmatprep.subr.mxu0 0.0
        %994 = vmatpush1.msra.mxu0 0.0
        %995 = vmatprep.subr.mxu0 0.0
        %996 = vmatpush1.msra.mxu0 0.0
        %997 = vmatprep.subr.mxu0 0.0
        %998 = vmatpush1.msra.mxu0 0.0
        %999 = vmatprep.subr.mxu0 0.0
        %1000 = vmatpush1.msra.mxu0 0.0
        %1001 = vmatprep.subr.mxu0 0.0
        %1002 = vmatpush1.msra.mxu0 0.0
        %1003 = vmatprep.subr.mxu0 0.0
        %1004 = vmatpush1.msra.mxu0 0.0
        %1005 = vmatprep.subr.mxu0 0.0
        %1006 = vmatpush1.msra.mxu0 0.0
        %1007 = vmatprep.subr.mxu0 0.0
        %1008 = vmatpush1.msra.mxu0 0.0
        %1009 = vmatprep.subr.mxu0 0.0
        %1010 = vmatpush1.msra.mxu0 0.0
        %1011 = vmatprep.subr.mxu0 0.0
        %1012 = vmatpush1.msra.mxu0 0.0
        %1013 = vmatprep.subr.mxu0 0.0
        %1014 = vmatpush1.msra.mxu0 0.0
        %1015 = vmatprep.subr.mxu0 0.0
        %1016 = vmatpush1.msra.mxu0 0.0
        %1017 = vmatprep.subr.mxu0 0.0
        %1018 = vmatpush1.msra.mxu0 0.0
        %1019 = vmatprep.subr.mxu0 0.0
        %1020 = vmatpush1.msra.mxu0 0.0
        %1021 = vmatprep.subr.mxu0 0.0
        %1022 = vmatpush1.msra.mxu0 0.0
        %1023 = vmatprep.subr.mxu0 0.0
        %1024 = vmatpush1.msra.mxu0 0.0
        %1025 = vmatprep.subr.mxu0 0.0
        %1026 = vmatpush1.msra.mxu0 0.0
        %1027 = vmatprep.mubr.f32.mxu0 0.0
        %1028 = vmatmul.mubr.f32.gmra.mrb[0].mxu0 %v523
        %v1029 = vpop.f32.mrb[0].mxu0
        %v1030 = vadd.f32 0.0, %v1029
        %v1031 = vpop.f32.mrb[0].mxu0
        %1032 = vmatprep.mubr.f32.mxu0 0.0
        %1033 = vmatmul.mubr.f32.gmra.mrb[0].mxu0 %v526
        %v1034 = vpop.f32.mrb[0].mxu0
        %v1035 = vadd.f32 0.0, %v1034
        %v1036 = vpop.f32.mrb[0].mxu0
        %1037 = vdwg.mxu0
        %v1039 = vsel %vm366, %v1030, 0
        %v1042 = vsel %vm366, %v1035, 0
        %1044 = vmatprep.subr.mxu0 0.0
        %1045 = vmatpush1.msra.mxu0 %v233
        %1046 = vmatprep.subr.mxu0 0.0
        %1047 = vmatpush1.msra.mxu0 %v234
        %1048 = vmatprep.subr.mxu0 0.0
        %1049 = vmatpush1.msra.mxu0 %v235
        %1050 = vmatprep.subr.mxu0 0.0
        %1051 = vmatpush1.msra.mxu0 %v236
        %1052 = vmatprep.subr.mxu0 0.0
        %1053 = vmatpush1.msra.mxu0 0.0
        %1054 = vmatprep.subr.mxu0 0.0
        %1055 = vmatpush1.msra.mxu0 0.0
        %1056 = vmatprep.subr.mxu0 0.0
        %1057 = vmatpush1.msra.mxu0 0.0
        %1058 = vmatprep.subr.mxu0 0.0
        %1059 = vmatpush1.msra.mxu0 0.0
        %1060 = vmatprep.subr.mxu0 0.0
        %1061 = vmatpush1.msra.mxu0 0.0
        %1062 = vmatprep.subr.mxu0 0.0
        %1063 = vmatpush1.msra.mxu0 0.0
        %1064 = vmatprep.subr.mxu0 0.0
        %1065 = vmatpush1.msra.mxu0 0.0
        %1066 = vmatprep.subr.mxu0 0.0
        %1067 = vmatpush1.msra.mxu0 0.0
        %1068 = vmatprep.subr.mxu0 0.0
        %1069 = vmatpush1.msra.mxu0 0.0
        %1070 = vmatprep.subr.mxu0 0.0
        %1071 = vmatpush1.msra.mxu0 0.0
        %1072 = vmatprep.subr.mxu0 0.0
        %1073 = vmatpush1.msra.mxu0 0.0
        %1074 = vmatprep.subr.mxu0 0.0
        %1075 = vmatpush1.msra.mxu0 0.0
        %1076 = vmatprep.subr.mxu0 0.0
        %1077 = vmatpush1.msra.mxu0 0.0
        %1078 = vmatprep.subr.mxu0 0.0
        %1079 = vmatpush1.msra.mxu0 0.0
        %1080 = vmatprep.subr.mxu0 0.0
        %1081 = vmatpush1.msra.mxu0 0.0
        %1082 = vmatprep.subr.mxu0 0.0
        %1083 = vmatpush1.msra.mxu0 0.0
        %1084 = vmatprep.subr.mxu0 0.0
        %1085 = vmatpush1.msra.mxu0 0.0
        %1086 = vmatprep.subr.mxu0 0.0
        %1087 = vmatpush1.msra.mxu0 0.0
        %1088 = vmatprep.subr.mxu0 0.0
        %1089 = vmatpush1.msra.mxu0 0.0
        %1090 = vmatprep.subr.mxu0 0.0
        %1091 = vmatpush1.msra.mxu0 0.0
        %1092 = vmatprep.subr.mxu0 0.0
        %1093 = vmatpush1.msra.mxu0 0.0
        %1094 = vmatprep.subr.mxu0 0.0
        %1095 = vmatpush1.msra.mxu0 0.0
        %1096 = vmatprep.subr.mxu0 0.0
        %1097 = vmatpush1.msra.mxu0 0.0
        %1098 = vmatprep.subr.mxu0 0.0
        %1099 = vmatpush1.msra.mxu0 0.0
        %1100 = vmatprep.subr.mxu0 0.0
        %1101 = vmatpush1.msra.mxu0 0.0
        %1102 = vmatprep.subr.mxu0 0.0
        %1103 = vmatpush1.msra.mxu0 0.0
        %1104 = vmatprep.subr.mxu0 0.0
        %1105 = vmatpush1.msra.mxu0 0.0
        %1106 = vmatprep.subr.mxu0 0.0
        %1107 = vmatpush1.msra.mxu0 0.0
        %1108 = vmatprep.mubr.f32.mxu0 0.0
        %1109 = vmatmul.mubr.f32.gmra.mrb[0].mxu0 %v1039
        %v1110 = vpop.f32.mrb[0].mxu0
        %v1111 = vadd.f32 0.0, %v1110
        %v1112 = vpop.f32.mrb[0].mxu0
        %1113 = vmatprep.mubr.f32.mxu0 0.0
        %1114 = vmatmul.mubr.f32.gmra.mrb[0].mxu0 %v1042
        %v1115 = vpop.f32.mrb[0].mxu0
        %v1116 = vadd.f32 0.0, %v1115
        %v1117 = vpop.f32.mrb[0].mxu0
        %1118 = vdwg.mxu0
        %1121 = vrot.lane.b32.xlu0 %v1111, 64
        %v1122 = vpop.permute.xlu0 %1121
        %1123 = vrot.lane.b32.xlu0 %v1116, 64
        %v1124 = vpop.permute.xlu0 %1123
        %v1127 = vadd.f32 %v713, %v1122
        %v1128 = vadd.f32 %v714, %v1124
        %v1129 = vtanh.pop %v1127
        %v1130 = vtanh.pop %v1128
        %v1131 = vmul.f32 %v958, %v710
        %v1132 = vmul.f32 %v960, %v711
        %v1133 = vsub.f32 1.0, %v958
        %v1134 = vsub.f32 1.0, %v960
        %1137 = vrot.lane.b32.xlu0 %v1129, 96
        %v1138 = vpop.permute.xlu0 %1137
        %1139 = vrot.lane.b32.xlu0 %v1130, 96
        %v1140 = vpop.permute.xlu0 %1139
        %v1143 = vmul.f32 %v1133, %v1138
        %v1144 = vmul.f32 %v1134, %v1140
        %v1145 = vadd.f32 %v1131, %v1143
        %v1146 = vadd.f32 %v1132, %v1144
        %s1147 = scalar_lea.vmem %s222, 32
        %v1148 = vld [vmem:[%s1147] sm:$0xff]
        %v1149 = vld [vmem:[%s1147 + $0x8] sm:$0xff]
        %1152 = vrot.lane.b32.xlu0 %v1145, 96
        %v1153 = vpop.permute.xlu0 %1152
        %1154 = vrot.lane.b32.xlu0 %v1146, 96
        %v1155 = vpop.permute.xlu0 %1154
        %1158 = vmatprep.subr.mxu0 0.0
        %1159 = vmatpush1.msra.mxu0 %v1153
        %1160 = vmatprep.subr.mxu0 0.0
        %1161 = vmatpush1.msra.mxu0 %v1155
        %1162 = vmatprep.subr.mxu0 0.0
        %1163 = vmatpush1.msra.mxu0 0.0
        %1164 = vmatprep.subr.mxu0 0.0
        %1165 = vmatpush1.msra.mxu0 0.0
        %1166 = vmatprep.subr.mxu0 0.0
        %1167 = vmatpush1.msra.mxu0 0.0
        %1168 = vmatprep.subr.mxu0 0.0
        %1169 = vmatpush1.msra.mxu0 0.0
        %1170 = vmatprep.subr.mxu0 0.0
        %1171 = vmatpush1.msra.mxu0 0.0
        %1172 = vmatprep.subr.mxu0 0.0
        %1173 = vmatpush1.msra.mxu0 0.0
        %1174 = vmatprep.subr.mxu0 0.0
        %1175 = vmatpush1.msra.mxu0 0.0
        %1176 = vmatprep.subr.mxu0 0.0
        %1177 = vmatpush1.msra.mxu0 0.0
        %1178 = vmatprep.subr.mxu0 0.0
        %1179 = vmatpush1.msra.mxu0 0.0
        %1180 = vmatprep.subr.mxu0 0.0
        %1181 = vmatpush1.msra.mxu0 0.0
        %1182 = vmatprep.subr.mxu0 0.0
        %1183 = vmatpush1.msra.mxu0 0.0
        %1184 = vmatprep.subr.mxu0 0.0
        %1185 = vmatpush1.msra.mxu0 0.0
        %1186 = vmatprep.subr.mxu0 0.0
        %1187 = vmatpush1.msra.mxu0 0.0
        %1188 = vmatprep.subr.mxu0 0.0
        %1189 = vmatpush1.msra.mxu0 0.0
        %1190 = vmatprep.subr.mxu0 0.0
        %1191 = vmatpush1.msra.mxu0 0.0
        %1192 = vmatprep.subr.mxu0 0.0
        %1193 = vmatpush1.msra.mxu0 0.0
        %1194 = vmatprep.subr.mxu0 0.0
        %1195 = vmatpush1.msra.mxu0 0.0
        %1196 = vmatprep.subr.mxu0 0.0
        %1197 = vmatpush1.msra.mxu0 0.0
        %1198 = vmatprep.subr.mxu0 0.0
        %1199 = vmatpush1.msra.mxu0 0.0
        %1200 = vmatprep.subr.mxu0 0.0
        %1201 = vmatpush1.msra.mxu0 0.0
        %1202 = vmatprep.subr.mxu0 0.0
        %1203 = vmatpush1.msra.mxu0 0.0
        %1204 = vmatprep.subr.mxu0 0.0
        %1205 = vmatpush1.msra.mxu0 0.0
        %1206 = vmatprep.subr.mxu0 0.0
        %1207 = vmatpush1.msra.mxu0 0.0
        %1208 = vmatprep.subr.mxu0 0.0
        %1209 = vmatpush1.msra.mxu0 0.0
        %1210 = vmatprep.subr.mxu0 0.0
        %1211 = vmatpush1.msra.mxu0 0.0
        %1212 = vmatprep.subr.mxu0 0.0
        %1213 = vmatpush1.msra.mxu0 0.0
        %1214 = vmatprep.subr.mxu0 0.0
        %1215 = vmatpush1.msra.mxu0 0.0
        %1216 = vmatprep.subr.mxu0 0.0
        %1217 = vmatpush1.msra.mxu0 0.0
        %1218 = vmatprep.subr.mxu0 0.0
        %1219 = vmatpush1.msra.mxu0 0.0
        %1220 = vmatprep.subr.mxu0 0.0
        %1221 = vmatpush1.msra.mxu0 0.0
        %1222 = vmatprep.mubr.f32.mxu0 0.0
        %1223 = vmatmul.mubr.f32.gmra.mrb[0].mxu0 %v270
        %v1224 = vpop.f32.mrb[0].mxu0
        %v1225 = vadd.f32 0.0, %v1224
        %v1226 = vpop.f32.mrb[0].mxu0
        %1227 = vmatprep.mubr.f32.mxu0 0.0
        %1228 = vmatmul.mubr.f32.gmra.mrb[0].mxu0 %v273
        %v1229 = vpop.f32.mrb[0].mxu0
        %v1230 = vadd.f32 0.0, %v1229
        %v1231 = vpop.f32.mrb[0].mxu0
        %1232 = vmatprep.mubr.f32.mxu0 0.0
        %1233 = vmatmul.mubr.f32.gmra.mrb[0].mxu0 %v276
        %v1234 = vpop.f32.mrb[0].mxu0
        %v1235 = vadd.f32 0.0, %v1234
        %v1236 = vpop.f32.mrb[0].mxu0
        %1237 = vmatprep.mubr.f32.mxu0 0.0
        %1238 = vmatmul.mubr.f32.gmra.mrb[0].mxu0 %v279
        %v1239 = vpop.f32.mrb[0].mxu0
        %v1240 = vadd.f32 0.0, %v1239
        %v1241 = vpop.f32.mrb[0].mxu0
        %1242 = vdwg.mxu0
        %v1244 = vsel %vm366, %v1225, 0
        %v1247 = vsel %vm366, %v1230, 0
        %v1250 = vsel %vm366, %v1235, 0
        %v1253 = vsel %vm366, %v1240, 0
        %1255 = vmatprep.subr.mxu0 0.0
        %1256 = vmatpush1.msra.mxu0 %v229
        %1257 = vmatprep.subr.mxu0 0.0
        %1258 = vmatpush1.msra.mxu0 %v230
        %1259 = vmatprep.subr.mxu0 0.0
        %1260 = vmatpush1.msra.mxu0 %v231
        %1261 = vmatprep.subr.mxu0 0.0
        %1262 = vmatpush1.msra.mxu0 %v232
        %1263 = vmatprep.subr.mxu0 0.0
        %1264 = vmatpush1.msra.mxu0 0.0
        %1265 = vmatprep.subr.mxu0 0.0
        %1266 = vmatpush1.msra.mxu0 0.0
        %1267 = vmatprep.subr.mxu0 0.0
        %1268 = vmatpush1.msra.mxu0 0.0
        %1269 = vmatprep.subr.mxu0 0.0
        %1270 = vmatpush1.msra.mxu0 0.0
        %1271 = vmatprep.subr.mxu0 0.0
        %1272 = vmatpush1.msra.mxu0 0.0
        %1273 = vmatprep.subr.mxu0 0.0
        %1274 = vmatpush1.msra.mxu0 0.0
        %1275 = vmatprep.subr.mxu0 0.0
        %1276 = vmatpush1.msra.mxu0 0.0
        %1277 = vmatprep.subr.mxu0 0.0
        %1278 = vmatpush1.msra.mxu0 0.0
        %1279 = vmatprep.subr.mxu0 0.0
        %1280 = vmatpush1.msra.mxu0 0.0
        %1281 = vmatprep.subr.mxu0 0.0
        %1282 = vmatpush1.msra.mxu0 0.0
        %1283 = vmatprep.subr.mxu0 0.0
        %1284 = vmatpush1.msra.mxu0 0.0
        %1285 = vmatprep.subr.mxu0 0.0
        %1286 = vmatpush1.msra.mxu0 0.0
        %1287 = vmatprep.subr.mxu0 0.0
        %1288 = vmatpush1.msra.mxu0 0.0
        %1289 = vmatprep.subr.mxu0 0.0
        %1290 = vmatpush1.msra.mxu0 0.0
        %1291 = vmatprep.subr.mxu0 0.0
        %1292 = vmatpush1.msra.mxu0 0.0
        %1293 = vmatprep.subr.mxu0 0.0
        %1294 = vmatpush1.msra.mxu0 0.0
        %1295 = vmatprep.subr.mxu0 0.0
        %1296 = vmatpush1.msra.mxu0 0.0
        %1297 = vmatprep.subr.mxu0 0.0
        %1298 = vmatpush1.msra.mxu0 0.0
        %1299 = vmatprep.subr.mxu0 0.0
        %1300 = vmatpush1.msra.mxu0 0.0
        %1301 = vmatprep.subr.mxu0 0.0
        %1302 = vmatpush1.msra.mxu0 0.0
        %1303 = vmatprep.subr.mxu0 0.0
        %1304 = vmatpush1.msra.mxu0 0.0
        %1305 = vmatprep.subr.mxu0 0.0
        %1306 = vmatpush1.msra.mxu0 0.0
        %1307 = vmatprep.subr.mxu0 0.0
        %1308 = vmatpush1.msra.mxu0 0.0
        %1309 = vmatprep.subr.mxu0 0.0
        %1310 = vmatpush1.msra.mxu0 0.0
        %1311 = vmatprep.subr.mxu0 0.0
        %1312 = vmatpush1.msra.mxu0 0.0
        %1313 = vmatprep.subr.mxu0 0.0
        %1314 = vmatpush1.msra.mxu0 0.0
        %1315 = vmatprep.subr.mxu0 0.0
        %1316 = vmatpush1.msra.mxu0 0.0
        %1317 = vmatprep.subr.mxu0 0.0
        %1318 = vmatpush1.msra.mxu0 0.0
        %1319 = vmatprep.mubr.f32.mxu0 0.0
        %1320 = vmatmul.mubr.f32.gmra.mrb[0].mxu0 %v1244
        %v1321 = vpop.f32.mrb[0].mxu0
        %v1322 = vadd.f32 0.0, %v1321
        %v1323 = vpop.f32.mrb[0].mxu0
        %1324 = vmatprep.mubr.f32.mxu0 0.0
        %1325 = vmatmul.mubr.f32.gmra.mrb[0].mxu0 %v1247
        %v1326 = vpop.f32.mrb[0].mxu0
        %v1327 = vadd.f32 0.0, %v1326
        %v1328 = vpop.f32.mrb[0].mxu0
        %1329 = vmatprep.mubr.f32.mxu0 0.0
        %1330 = vmatmul.mubr.f32.gmra.mrb[0].mxu0 %v1250
        %v1331 = vpop.f32.mrb[0].mxu0
        %v1332 = vadd.f32 0.0, %v1331
        %v1333 = vpop.f32.mrb[0].mxu0
        %1334 = vmatprep.mubr.f32.mxu0 0.0
        %1335 = vmatmul.mubr.f32.gmra.mrb[0].mxu0 %v1253
        %v1336 = vpop.f32.mrb[0].mxu0
        %v1337 = vadd.f32 0.0, %v1336
        %v1338 = vpop.f32.mrb[0].mxu0
        %1339 = vdwg.mxu0
        %1342 = vrot.lane.b32.xlu0 %v1322, 96
        %v1343 = vpop.permute.xlu0 %1342
        %1344 = vrot.lane.b32.xlu0 %v1327, 96
        %v1345 = vpop.permute.xlu0 %1344
        %v1348 = vsel %vm264, %v1322, %v1343
        %v1349 = vsel %vm265, %v1327, %v1345
        %v1350 = vadd.f32 %v1148, %v1348
        %v1351 = vadd.f32 %v1149, %v1349
        %v1352 = vxor.u32 %v1350, 2147483648
        %v1353 = vxor.u32 %v1351, 2147483648
        %v1354 = vmul.f32 %v1352, 1.442695
        %v1355 = vpow.pop %v1354
        %v1356 = vmul.f32 %v1353, 1.442695
        %v1357 = vpow.pop %v1356
        %v1358 = vadd.f32 %v1355, 1.0
        %v1359 = vadd.f32 %v1357, 1.0
        %v1360 = vrcp.pop %v1358
        %v1361 = vmul.f32 1.0, %v1360
        %v1362 = vrcp.pop %v1359
        %v1363 = vmul.f32 1.0, %v1362
        %1366 = vrot.lane.b32.xlu0 %v1332, 96
        %v1367 = vpop.permute.xlu0 %1366
        %1368 = vrot.lane.b32.xlu0 %v1337, 96
        %v1369 = vpop.permute.xlu0 %1368
        %v1372 = vsel %vm264, %v1332, %v1367
        %v1373 = vsel %vm265, %v1337, %v1369
        %1376 = vrot.lane.b32.xlu0 %v1372, 32
        %v1377 = vpop.permute.xlu0 %1376
        %1378 = vrot.lane.b32.xlu0 %v1373, 32
        %v1379 = vpop.permute.xlu0 %1378
        %v1382 = vadd.f32 %v1148, %v1377
        %v1383 = vadd.f32 %v1149, %v1379
        %v1384 = vxor.u32 %v1382, 2147483648
        %v1385 = vxor.u32 %v1383, 2147483648
        %v1386 = vmul.f32 %v1384, 1.442695
        %v1387 = vpow.pop %v1386
        %v1388 = vmul.f32 %v1385, 1.442695
        %v1389 = vpow.pop %v1388
        %v1390 = vadd.f32 %v1387, 1.0
        %v1391 = vadd.f32 %v1389, 1.0
        %v1392 = vrcp.pop %v1390
        %v1393 = vmul.f32 1.0, %v1392
        %v1394 = vrcp.pop %v1391
        %v1395 = vmul.f32 1.0, %v1394
        %v1396 = vmul.f32 %v1361, %v1153
        %v1397 = vmul.f32 %v1363, %v1155
        %1398 = vmatprep.subr.mxu0 0.0
        %1399 = vmatpush1.msra.mxu0 %v1396
        %1400 = vmatprep.subr.mxu0 0.0
        %1401 = vmatpush1.msra.mxu0 %v1397
        %1402 = vmatprep.subr.mxu0 0.0
        %1403 = vmatpush1.msra.mxu0 0.0
        %1404 = vmatprep.subr.mxu0 0.0
        %1405 = vmatpush1.msra.mxu0 0.0
        %1406 = vmatprep.subr.mxu0 0.0
        %1407 = vmatpush1.msra.mxu0 0.0
        %1408 = vmatprep.subr.mxu0 0.0
        %1409 = vmatpush1.msra.mxu0 0.0
        %1410 = vmatprep.subr.mxu0 0.0
        %1411 = vmatpush1.msra.mxu0 0.0
        %1412 = vmatprep.subr.mxu0 0.0
        %1413 = vmatpush1.msra.mxu0 0.0
        %1414 = vmatprep.subr.mxu0 0.0
        %1415 = vmatpush1.msra.mxu0 0.0
        %1416 = vmatprep.subr.mxu0 0.0
        %1417 = vmatpush1.msra.mxu0 0.0
        %1418 = vmatprep.subr.mxu0 0.0
        %1419 = vmatpush1.msra.mxu0 0.0
        %1420 = vmatprep.subr.mxu0 0.0
        %1421 = vmatpush1.msra.mxu0 0.0
        %1422 = vmatprep.subr.mxu0 0.0
        %1423 = vmatpush1.msra.mxu0 0.0
        %1424 = vmatprep.subr.mxu0 0.0
        %1425 = vmatpush1.msra.mxu0 0.0
        %1426 = vmatprep.subr.mxu0 0.0
        %1427 = vmatpush1.msra.mxu0 0.0
        %1428 = vmatprep.subr.mxu0 0.0
        %1429 = vmatpush1.msra.mxu0 0.0
        %1430 = vmatprep.subr.mxu0 0.0
        %1431 = vmatpush1.msra.mxu0 0.0
        %1432 = vmatprep.subr.mxu0 0.0
        %1433 = vmatpush1.msra.mxu0 0.0
        %1434 = vmatprep.subr.mxu0 0.0
        %1435 = vmatpush1.msra.mxu0 0.0
        %1436 = vmatprep.subr.mxu0 0.0
        %1437 = vmatpush1.msra.mxu0 0.0
        %1438 = vmatprep.subr.mxu0 0.0
        %1439 = vmatpush1.msra.mxu0 0.0
        %1440 = vmatprep.subr.mxu0 0.0
        %1441 = vmatpush1.msra.mxu0 0.0
        %1442 = vmatprep.subr.mxu0 0.0
        %1443 = vmatpush1.msra.mxu0 0.0
        %1444 = vmatprep.subr.mxu0 0.0
        %1445 = vmatpush1.msra.mxu0 0.0
        %1446 = vmatprep.subr.mxu0 0.0
        %1447 = vmatpush1.msra.mxu0 0.0
        %1448 = vmatprep.subr.mxu0 0.0
        %1449 = vmatpush1.msra.mxu0 0.0
        %1450 = vmatprep.subr.mxu0 0.0
        %1451 = vmatpush1.msra.mxu0 0.0
        %1452 = vmatprep.subr.mxu0 0.0
        %1453 = vmatpush1.msra.mxu0 0.0
        %1454 = vmatprep.subr.mxu0 0.0
        %1455 = vmatpush1.msra.mxu0 0.0
        %1456 = vmatprep.subr.mxu0 0.0
        %1457 = vmatpush1.msra.mxu0 0.0
        %1458 = vmatprep.subr.mxu0 0.0
        %1459 = vmatpush1.msra.mxu0 0.0
        %1460 = vmatprep.subr.mxu0 0.0
        %1461 = vmatpush1.msra.mxu0 0.0
        %1462 = vmatprep.mubr.f32.mxu0 0.0
        %1463 = vmatmul.mubr.f32.gmra.mrb[0].mxu0 %v523
        %v1464 = vpop.f32.mrb[0].mxu0
        %v1465 = vadd.f32 0.0, %v1464
        %v1466 = vpop.f32.mrb[0].mxu0
        %1467 = vmatprep.mubr.f32.mxu0 0.0
        %1468 = vmatmul.mubr.f32.gmra.mrb[0].mxu0 %v526
        %v1469 = vpop.f32.mrb[0].mxu0
        %v1470 = vadd.f32 0.0, %v1469
        %v1471 = vpop.f32.mrb[0].mxu0
        %1472 = vdwg.mxu0
        %v1474 = vsel %vm366, %v1465, 0
        %v1477 = vsel %vm366, %v1470, 0
        %1479 = vmatprep.subr.mxu0 0.0
        %1480 = vmatpush1.msra.mxu0 %v233
        %1481 = vmatprep.subr.mxu0 0.0
        %1482 = vmatpush1.msra.mxu0 %v234
        %1483 = vmatprep.subr.mxu0 0.0
        %1484 = vmatpush1.msra.mxu0 %v235
        %1485 = vmatprep.subr.mxu0 0.0
        %1486 = vmatpush1.msra.mxu0 %v236
        %1487 = vmatprep.subr.mxu0 0.0
        %1488 = vmatpush1.msra.mxu0 0.0
        %1489 = vmatprep.subr.mxu0 0.0
        %1490 = vmatpush1.msra.mxu0 0.0
        %1491 = vmatprep.subr.mxu0 0.0
        %1492 = vmatpush1.msra.mxu0 0.0
        %1493 = vmatprep.subr.mxu0 0.0
        %1494 = vmatpush1.msra.mxu0 0.0
        %1495 = vmatprep.subr.mxu0 0.0
        %1496 = vmatpush1.msra.mxu0 0.0
        %1497 = vmatprep.subr.mxu0 0.0
        %1498 = vmatpush1.msra.mxu0 0.0
        %1499 = vmatprep.subr.mxu0 0.0
        %1500 = vmatpush1.msra.mxu0 0.0
        %1501 = vmatprep.subr.mxu0 0.0
        %1502 = vmatpush1.msra.mxu0 0.0
        %1503 = vmatprep.subr.mxu0 0.0
        %1504 = vmatpush1.msra.mxu0 0.0
        %1505 = vmatprep.subr.mxu0 0.0
        %1506 = vmatpush1.msra.mxu0 0.0
        %1507 = vmatprep.subr.mxu0 0.0
        %1508 = vmatpush1.msra.mxu0 0.0
        %1509 = vmatprep.subr.mxu0 0.0
        %1510 = vmatpush1.msra.mxu0 0.0
        %1511 = vmatprep.subr.mxu0 0.0
        %1512 = vmatpush1.msra.mxu0 0.0
        %1513 = vmatprep.subr.mxu0 0.0
        %1514 = vmatpush1.msra.mxu0 0.0
        %1515 = vmatprep.subr.mxu0 0.0
        %1516 = vmatpush1.msra.mxu0 0.0
        %1517 = vmatprep.subr.mxu0 0.0
        %1518 = vmatpush1.msra.mxu0 0.0
        %1519 = vmatprep.subr.mxu0 0.0
        %1520 = vmatpush1.msra.mxu0 0.0
        %1521 = vmatprep.subr.mxu0 0.0
        %1522 = vmatpush1.msra.mxu0 0.0
        %1523 = vmatprep.subr.mxu0 0.0
        %1524 = vmatpush1.msra.mxu0 0.0
        %1525 = vmatprep.subr.mxu0 0.0
        %1526 = vmatpush1.msra.mxu0 0.0
        %1527 = vmatprep.subr.mxu0 0.0
        %1528 = vmatpush1.msra.mxu0 0.0
        %1529 = vmatprep.subr.mxu0 0.0
        %1530 = vmatpush1.msra.mxu0 0.0
        %1531 = vmatprep.subr.mxu0 0.0
        %1532 = vmatpush1.msra.mxu0 0.0
        %1533 = vmatprep.subr.mxu0 0.0
        %1534 = vmatpush1.msra.mxu0 0.0
        %1535 = vmatprep.subr.mxu0 0.0
        %1536 = vmatpush1.msra.mxu0 0.0
        %1537 = vmatprep.subr.mxu0 0.0
        %1538 = vmatpush1.msra.mxu0 0.0
        %1539 = vmatprep.subr.mxu0 0.0
        %1540 = vmatpush1.msra.mxu0 0.0
        %1541 = vmatprep.subr.mxu0 0.0
        %1542 = vmatpush1.msra.mxu0 0.0
        %1543 = vmatprep.mubr.f32.mxu0 0.0
        %1544 = vmatmul.mubr.f32.gmra.mrb[0].mxu0 %v1474
        %v1545 = vpop.f32.mrb[0].mxu0
        %v1546 = vadd.f32 0.0, %v1545
        %v1547 = vpop.f32.mrb[0].mxu0
        %1548 = vmatprep.mubr.f32.mxu0 0.0
        %1549 = vmatmul.mubr.f32.gmra.mrb[0].mxu0 %v1477
        %v1550 = vpop.f32.mrb[0].mxu0
        %v1551 = vadd.f32 0.0, %v1550
        %v1552 = vpop.f32.mrb[0].mxu0
        %1553 = vdwg.mxu0
        %1556 = vrot.lane.b32.xlu0 %v1546, 64
        %v1557 = vpop.permute.xlu0 %1556
        %1558 = vrot.lane.b32.xlu0 %v1551, 64
        %v1559 = vpop.permute.xlu0 %1558
        %v1562 = vadd.f32 %v1148, %v1557
        %v1563 = vadd.f32 %v1149, %v1559
        %v1564 = vtanh.pop %v1562
        %v1565 = vtanh.pop %v1563
        %v1566 = vmul.f32 %v1393, %v1145
        %v1567 = vmul.f32 %v1395, %v1146
        %v1568 = vsub.f32 1.0, %v1393
        %v1569 = vsub.f32 1.0, %v1395
        %1572 = vrot.lane.b32.xlu0 %v1564, 96
        %v1573 = vpop.permute.xlu0 %1572
        %1574 = vrot.lane.b32.xlu0 %v1565, 96
        %v1575 = vpop.permute.xlu0 %1574
        %v1578 = vmul.f32 %v1568, %v1573
        %v1579 = vmul.f32 %v1569, %v1575
        %v1580 = vadd.f32 %v1566, %v1578
        %v1581 = vadd.f32 %v1567, %v1579
        %s1582 = scalar_lea.vmem %s222, 48
        %v1583 = vld [vmem:[%s1582] sm:$0xff]
        %v1584 = vld [vmem:[%s1582 + $0x8] sm:$0xff]
        %1587 = vrot.lane.b32.xlu0 %v1580, 96
        %v1588 = vpop.permute.xlu0 %1587
        %1589 = vrot.lane.b32.xlu0 %v1581, 96
        %v1590 = vpop.permute.xlu0 %1589
        %1593 = vmatprep.subr.mxu0 0.0
        %1594 = vmatpush1.msra.mxu0 %v1588
        %1595 = vmatprep.subr.mxu0 0.0
        %1596 = vmatpush1.msra.mxu0 %v1590
        %1597 = vmatprep.subr.mxu0 0.0
        %1598 = vmatpush1.msra.mxu0 0.0
        %1599 = vmatprep.subr.mxu0 0.0
        %1600 = vmatpush1.msra.mxu0 0.0
        %1601 = vmatprep.subr.mxu0 0.0
        %1602 = vmatpush1.msra.mxu0 0.0
        %1603 = vmatprep.subr.mxu0 0.0
        %1604 = vmatpush1.msra.mxu0 0.0
        %1605 = vmatprep.subr.mxu0 0.0
        %1606 = vmatpush1.msra.mxu0 0.0
        %1607 = vmatprep.subr.mxu0 0.0
        %1608 = vmatpush1.msra.mxu0 0.0
        %1609 = vmatprep.subr.mxu0 0.0
        %1610 = vmatpush1.msra.mxu0 0.0
        %1611 = vmatprep.subr.mxu0 0.0
        %1612 = vmatpush1.msra.mxu0 0.0
        %1613 = vmatprep.subr.mxu0 0.0
        %1614 = vmatpush1.msra.mxu0 0.0
        %1615 = vmatprep.subr.mxu0 0.0
        %1616 = vmatpush1.msra.mxu0 0.0
        %1617 = vmatprep.subr.mxu0 0.0
        %1618 = vmatpush1.msra.mxu0 0.0
        %1619 = vmatprep.subr.mxu0 0.0
        %1620 = vmatpush1.msra.mxu0 0.0
        %1621 = vmatprep.subr.mxu0 0.0
        %1622 = vmatpush1.msra.mxu0 0.0
        %1623 = vmatprep.subr.mxu0 0.0
        %1624 = vmatpush1.msra.mxu0 0.0
        %1625 = vmatprep.subr.mxu0 0.0
        %1626 = vmatpush1.msra.mxu0 0.0
        %1627 = vmatprep.subr.mxu0 0.0
        %1628 = vmatpush1.msra.mxu0 0.0
        %1629 = vmatprep.subr.mxu0 0.0
        %1630 = vmatpush1.msra.mxu0 0.0
        %1631 = vmatprep.subr.mxu0 0.0
        %1632 = vmatpush1.msra.mxu0 0.0
        %1633 = vmatprep.subr.mxu0 0.0
        %1634 = vmatpush1.msra.mxu0 0.0
        %1635 = vmatprep.subr.mxu0 0.0
        %1636 = vmatpush1.msra.mxu0 0.0
        %1637 = vmatprep.subr.mxu0 0.0
        %1638 = vmatpush1.msra.mxu0 0.0
        %1639 = vmatprep.subr.mxu0 0.0
        %1640 = vmatpush1.msra.mxu0 0.0
        %1641 = vmatprep.subr.mxu0 0.0
        %1642 = vmatpush1.msra.mxu0 0.0
        %1643 = vmatprep.subr.mxu0 0.0
        %1644 = vmatpush1.msra.mxu0 0.0
        %1645 = vmatprep.subr.mxu0 0.0
        %1646 = vmatpush1.msra.mxu0 0.0
        %1647 = vmatprep.subr.mxu0 0.0
        %1648 = vmatpush1.msra.mxu0 0.0
        %1649 = vmatprep.subr.mxu0 0.0
        %1650 = vmatpush1.msra.mxu0 0.0
        %1651 = vmatprep.subr.mxu0 0.0
        %1652 = vmatpush1.msra.mxu0 0.0
        %1653 = vmatprep.subr.mxu0 0.0
        %1654 = vmatpush1.msra.mxu0 0.0
        %1655 = vmatprep.subr.mxu0 0.0
        %1656 = vmatpush1.msra.mxu0 0.0
        %1657 = vmatprep.mubr.f32.mxu0 0.0
        %1658 = vmatmul.mubr.f32.gmra.mrb[0].mxu0 %v270
        %v1659 = vpop.f32.mrb[0].mxu0
        %v1660 = vadd.f32 0.0, %v1659
        %v1661 = vpop.f32.mrb[0].mxu0
        %1662 = vmatprep.mubr.f32.mxu0 0.0
        %1663 = vmatmul.mubr.f32.gmra.mrb[0].mxu0 %v273
        %v1664 = vpop.f32.mrb[0].mxu0
        %v1665 = vadd.f32 0.0, %v1664
        %v1666 = vpop.f32.mrb[0].mxu0
        %1667 = vmatprep.mubr.f32.mxu0 0.0
        %1668 = vmatmul.mubr.f32.gmra.mrb[0].mxu0 %v276
        %v1669 = vpop.f32.mrb[0].mxu0
        %v1670 = vadd.f32 0.0, %v1669
        %v1671 = vpop.f32.mrb[0].mxu0
        %1672 = vmatprep.mubr.f32.mxu0 0.0
        %1673 = vmatmul.mubr.f32.gmra.mrb[0].mxu0 %v279
        %v1674 = vpop.f32.mrb[0].mxu0
        %v1675 = vadd.f32 0.0, %v1674
        %v1676 = vpop.f32.mrb[0].mxu0
        %1677 = vdwg.mxu0
        %v1679 = vsel %vm366, %v1660, 0
        %v1682 = vsel %vm366, %v1665, 0
        %v1685 = vsel %vm366, %v1670, 0
        %v1688 = vsel %vm366, %v1675, 0
        %1690 = vmatprep.subr.mxu0 0.0
        %1691 = vmatpush1.msra.mxu0 %v229
        %1692 = vmatprep.subr.mxu0 0.0
        %1693 = vmatpush1.msra.mxu0 %v230
        %1694 = vmatprep.subr.mxu0 0.0
        %1695 = vmatpush1.msra.mxu0 %v231
        %1696 = vmatprep.subr.mxu0 0.0
        %1697 = vmatpush1.msra.mxu0 %v232
        %1698 = vmatprep.subr.mxu0 0.0
        %1699 = vmatpush1.msra.mxu0 0.0
        %1700 = vmatprep.subr.mxu0 0.0
        %1701 = vmatpush1.msra.mxu0 0.0
        %1702 = vmatprep.subr.mxu0 0.0
        %1703 = vmatpush1.msra.mxu0 0.0
        %1704 = vmatprep.subr.mxu0 0.0
        %1705 = vmatpush1.msra.mxu0 0.0
        %1706 = vmatprep.subr.mxu0 0.0
        %1707 = vmatpush1.msra.mxu0 0.0
        %1708 = vmatprep.subr.mxu0 0.0
        %1709 = vmatpush1.msra.mxu0 0.0
        %1710 = vmatprep.subr.mxu0 0.0
        %1711 = vmatpush1.msra.mxu0 0.0
        %1712 = vmatprep.subr.mxu0 0.0
        %1713 = vmatpush1.msra.mxu0 0.0
        %1714 = vmatprep.subr.mxu0 0.0
        %1715 = vmatpush1.msra.mxu0 0.0
        %1716 = vmatprep.subr.mxu0 0.0
        %1717 = vmatpush1.msra.mxu0 0.0
        %1718 = vmatprep.subr.mxu0 0.0
        %1719 = vmatpush1.msra.mxu0 0.0
        %1720 = vmatprep.subr.mxu0 0.0
        %1721 = vmatpush1.msra.mxu0 0.0
        %1722 = vmatprep.subr.mxu0 0.0
        %1723 = vmatpush1.msra.mxu0 0.0
        %1724 = vmatprep.subr.mxu0 0.0
        %1725 = vmatpush1.msra.mxu0 0.0
        %1726 = vmatprep.subr.mxu0 0.0
        %1727 = vmatpush1.msra.mxu0 0.0
        %1728 = vmatprep.subr.mxu0 0.0
        %1729 = vmatpush1.msra.mxu0 0.0
        %1730 = vmatprep.subr.mxu0 0.0
        %1731 = vmatpush1.msra.mxu0 0.0
        %1732 = vmatprep.subr.mxu0 0.0
        %1733 = vmatpush1.msra.mxu0 0.0
        %1734 = vmatprep.subr.mxu0 0.0
        %1735 = vmatpush1.msra.mxu0 0.0
        %1736 = vmatprep.subr.mxu0 0.0
        %1737 = vmatpush1.msra.mxu0 0.0
        %1738 = vmatprep.subr.mxu0 0.0
        %1739 = vmatpush1.msra.mxu0 0.0
        %1740 = vmatprep.subr.mxu0 0.0
        %1741 = vmatpush1.msra.mxu0 0.0
        %1742 = vmatprep.subr.mxu0 0.0
        %1743 = vmatpush1.msra.mxu0 0.0
        %1744 = vmatprep.subr.mxu0 0.0
        %1745 = vmatpush1.msra.mxu0 0.0
        %1746 = vmatprep.subr.mxu0 0.0
        %1747 = vmatpush1.msra.mxu0 0.0
        %1748 = vmatprep.subr.mxu0 0.0
        %1749 = vmatpush1.msra.mxu0 0.0
        %1750 = vmatprep.subr.mxu0 0.0
        %1751 = vmatpush1.msra.mxu0 0.0
        %1752 = vmatprep.subr.mxu0 0.0
        %1753 = vmatpush1.msra.mxu0 0.0
        %1754 = vmatprep.mubr.f32.mxu0 0.0
        %1755 = vmatmul.mubr.f32.gmra.mrb[0].mxu0 %v1679
        %v1756 = vpop.f32.mrb[0].mxu0
        %v1757 = vadd.f32 0.0, %v1756
        %v1758 = vpop.f32.mrb[0].mxu0
        %1759 = vmatprep.mubr.f32.mxu0 0.0
        %1760 = vmatmul.mubr.f32.gmra.mrb[0].mxu0 %v1682
        %v1761 = vpop.f32.mrb[0].mxu0
        %v1762 = vadd.f32 0.0, %v1761
        %v1763 = vpop.f32.mrb[0].mxu0
        %1764 = vmatprep.mubr.f32.mxu0 0.0
        %1765 = vmatmul.mubr.f32.gmra.mrb[0].mxu0 %v1685
        %v1766 = vpop.f32.mrb[0].mxu0
        %v1767 = vadd.f32 0.0, %v1766
        %v1768 = vpop.f32.mrb[0].mxu0
        %1769 = vmatprep.mubr.f32.mxu0 0.0
        %1770 = vmatmul.mubr.f32.gmra.mrb[0].mxu0 %v1688
        %v1771 = vpop.f32.mrb[0].mxu0
        %v1772 = vadd.f32 0.0, %v1771
        %v1773 = vpop.f32.mrb[0].mxu0
        %1774 = vdwg.mxu0
        %1777 = vrot.lane.b32.xlu0 %v1757, 96
        %v1778 = vpop.permute.xlu0 %1777
        %1779 = vrot.lane.b32.xlu0 %v1762, 96
        %v1780 = vpop.permute.xlu0 %1779
        %v1783 = vsel %vm264, %v1757, %v1778
        %v1784 = vsel %vm265, %v1762, %v1780
        %v1785 = vadd.f32 %v1583, %v1783
        %v1786 = vadd.f32 %v1584, %v1784
        %v1787 = vxor.u32 %v1785, 2147483648
        %v1788 = vxor.u32 %v1786, 2147483648
        %v1789 = vmul.f32 %v1787, 1.442695
        %v1790 = vpow.pop %v1789
        %v1791 = vmul.f32 %v1788, 1.442695
        %v1792 = vpow.pop %v1791
        %v1793 = vadd.f32 %v1790, 1.0
        %v1794 = vadd.f32 %v1792, 1.0
        %v1795 = vrcp.pop %v1793
        %v1796 = vmul.f32 1.0, %v1795
        %v1797 = vrcp.pop %v1794
        %v1798 = vmul.f32 1.0, %v1797
        %1801 = vrot.lane.b32.xlu0 %v1767, 96
        %v1802 = vpop.permute.xlu0 %1801
        %1803 = vrot.lane.b32.xlu0 %v1772, 96
        %v1804 = vpop.permute.xlu0 %1803
        %v1807 = vsel %vm264, %v1767, %v1802
        %v1808 = vsel %vm265, %v1772, %v1804
        %1811 = vrot.lane.b32.xlu0 %v1807, 32
        %v1812 = vpop.permute.xlu0 %1811
        %1813 = vrot.lane.b32.xlu0 %v1808, 32
        %v1814 = vpop.permute.xlu0 %1813
        %v1817 = vadd.f32 %v1583, %v1812
        %v1818 = vadd.f32 %v1584, %v1814
        %v1819 = vxor.u32 %v1817, 2147483648
        %v1820 = vxor.u32 %v1818, 2147483648
        %v1821 = vmul.f32 %v1819, 1.442695
        %v1822 = vpow.pop %v1821
        %v1823 = vmul.f32 %v1820, 1.442695
        %v1824 = vpow.pop %v1823
        %v1825 = vadd.f32 %v1822, 1.0
        %v1826 = vadd.f32 %v1824, 1.0
        %v1827 = vrcp.pop %v1825
        %v1828 = vmul.f32 1.0, %v1827
        %v1829 = vrcp.pop %v1826
        %v1830 = vmul.f32 1.0, %v1829
        %v1831 = vmul.f32 %v1796, %v1588
        %v1832 = vmul.f32 %v1798, %v1590
        %1833 = vmatprep.subr.mxu0 0.0
        %1834 = vmatpush1.msra.mxu0 %v1831
        %1835 = vmatprep.subr.mxu0 0.0
        %1836 = vmatpush1.msra.mxu0 %v1832
        %1837 = vmatprep.subr.mxu0 0.0
        %1838 = vmatpush1.msra.mxu0 0.0
        %1839 = vmatprep.subr.mxu0 0.0
        %1840 = vmatpush1.msra.mxu0 0.0
        %1841 = vmatprep.subr.mxu0 0.0
        %1842 = vmatpush1.msra.mxu0 0.0
        %1843 = vmatprep.subr.mxu0 0.0
        %1844 = vmatpush1.msra.mxu0 0.0
        %1845 = vmatprep.subr.mxu0 0.0
        %1846 = vmatpush1.msra.mxu0 0.0
        %1847 = vmatprep.subr.mxu0 0.0
        %1848 = vmatpush1.msra.mxu0 0.0
        %1849 = vmatprep.subr.mxu0 0.0
        %1850 = vmatpush1.msra.mxu0 0.0
        %1851 = vmatprep.subr.mxu0 0.0
        %1852 = vmatpush1.msra.mxu0 0.0
        %1853 = vmatprep.subr.mxu0 0.0
        %1854 = vmatpush1.msra.mxu0 0.0
        %1855 = vmatprep.subr.mxu0 0.0
        %1856 = vmatpush1.msra.mxu0 0.0
        %1857 = vmatprep.subr.mxu0 0.0
        %1858 = vmatpush1.msra.mxu0 0.0
        %1859 = vmatprep.subr.mxu0 0.0
        %1860 = vmatpush1.msra.mxu0 0.0
        %1861 = vmatprep.subr.mxu0 0.0
        %1862 = vmatpush1.msra.mxu0 0.0
        %1863 = vmatprep.subr.mxu0 0.0
        %1864 = vmatpush1.msra.mxu0 0.0
        %1865 = vmatprep.subr.mxu0 0.0
        %1866 = vmatpush1.msra.mxu0 0.0
        %1867 = vmatprep.subr.mxu0 0.0
        %1868 = vmatpush1.msra.mxu0 0.0
        %1869 = vmatprep.subr.mxu0 0.0
        %1870 = vmatpush1.msra.mxu0 0.0
        %1871 = vmatprep.subr.mxu0 0.0
        %1872 = vmatpush1.msra.mxu0 0.0
        %1873 = vmatprep.subr.mxu0 0.0
        %1874 = vmatpush1.msra.mxu0 0.0
        %1875 = vmatprep.subr.mxu0 0.0
        %1876 = vmatpush1.msra.mxu0 0.0
        %1877 = vmatprep.subr.mxu0 0.0
        %1878 = vmatpush1.msra.mxu0 0.0
        %1879 = vmatprep.subr.mxu0 0.0
        %1880 = vmatpush1.msra.mxu0 0.0
        %1881 = vmatprep.subr.mxu0 0.0
        %1882 = vmatpush1.msra.mxu0 0.0
        %1883 = vmatprep.subr.mxu0 0.0
        %1884 = vmatpush1.msra.mxu0 0.0
        %1885 = vmatprep.subr.mxu0 0.0
        %1886 = vmatpush1.msra.mxu0 0.0
        %1887 = vmatprep.subr.mxu0 0.0
        %1888 = vmatpush1.msra.mxu0 0.0
        %1889 = vmatprep.subr.mxu0 0.0
        %1890 = vmatpush1.msra.mxu0 0.0
        %1891 = vmatprep.subr.mxu0 0.0
        %1892 = vmatpush1.msra.mxu0 0.0
        %1893 = vmatprep.subr.mxu0 0.0
        %1894 = vmatpush1.msra.mxu0 0.0
        %1895 = vmatprep.subr.mxu0 0.0
        %1896 = vmatpush1.msra.mxu0 0.0
        %1897 = vmatprep.mubr.f32.mxu0 0.0
        %1898 = vmatmul.mubr.f32.gmra.mrb[0].mxu0 %v523
        %v1899 = vpop.f32.mrb[0].mxu0
        %v1900 = vadd.f32 0.0, %v1899
        %v1901 = vpop.f32.mrb[0].mxu0
        %1902 = vmatprep.mubr.f32.mxu0 0.0
        %1903 = vmatmul.mubr.f32.gmra.mrb[0].mxu0 %v526
        %v1904 = vpop.f32.mrb[0].mxu0
        %v1905 = vadd.f32 0.0, %v1904
        %v1906 = vpop.f32.mrb[0].mxu0
        %1907 = vdwg.mxu0
        %v1909 = vsel %vm366, %v1900, 0
        %v1912 = vsel %vm366, %v1905, 0
        %1914 = vmatprep.subr.mxu0 0.0
        %1915 = vmatpush1.msra.mxu0 %v233
        %1916 = vmatprep.subr.mxu0 0.0
        %1917 = vmatpush1.msra.mxu0 %v234
        %1918 = vmatprep.subr.mxu0 0.0
        %1919 = vmatpush1.msra.mxu0 %v235
        %1920 = vmatprep.subr.mxu0 0.0
        %1921 = vmatpush1.msra.mxu0 %v236
        %1922 = vmatprep.subr.mxu0 0.0
        %1923 = vmatpush1.msra.mxu0 0.0
        %1924 = vmatprep.subr.mxu0 0.0
        %1925 = vmatpush1.msra.mxu0 0.0
        %1926 = vmatprep.subr.mxu0 0.0
        %1927 = vmatpush1.msra.mxu0 0.0
        %1928 = vmatprep.subr.mxu0 0.0
        %1929 = vmatpush1.msra.mxu0 0.0
        %1930 = vmatprep.subr.mxu0 0.0
        %1931 = vmatpush1.msra.mxu0 0.0
        %1932 = vmatprep.subr.mxu0 0.0
        %1933 = vmatpush1.msra.mxu0 0.0
        %1934 = vmatprep.subr.mxu0 0.0
        %1935 = vmatpush1.msra.mxu0 0.0
        %1936 = vmatprep.subr.mxu0 0.0
        %1937 = vmatpush1.msra.mxu0 0.0
        %1938 = vmatprep.subr.mxu0 0.0
        %1939 = vmatpush1.msra.mxu0 0.0
        %1940 = vmatprep.subr.mxu0 0.0
        %1941 = vmatpush1.msra.mxu0 0.0
        %1942 = vmatprep.subr.mxu0 0.0
        %1943 = vmatpush1.msra.mxu0 0.0
        %1944 = vmatprep.subr.mxu0 0.0
        %1945 = vmatpush1.msra.mxu0 0.0
        %1946 = vmatprep.subr.mxu0 0.0
        %1947 = vmatpush1.msra.mxu0 0.0
        %1948 = vmatprep.subr.mxu0 0.0
        %1949 = vmatpush1.msra.mxu0 0.0
        %1950 = vmatprep.subr.mxu0 0.0
        %1951 = vmatpush1.msra.mxu0 0.0
        %1952 = vmatprep.subr.mxu0 0.0
        %1953 = vmatpush1.msra.mxu0 0.0
        %1954 = vmatprep.subr.mxu0 0.0
        %1955 = vmatpush1.msra.mxu0 0.0
        %1956 = vmatprep.subr.mxu0 0.0
        %1957 = vmatpush1.msra.mxu0 0.0
        %1958 = vmatprep.subr.mxu0 0.0
        %1959 = vmatpush1.msra.mxu0 0.0
        %1960 = vmatprep.subr.mxu0 0.0
        %1961 = vmatpush1.msra.mxu0 0.0
        %1962 = vmatprep.subr.mxu0 0.0
        %1963 = vmatpush1.msra.mxu0 0.0
        %1964 = vmatprep.subr.mxu0 0.0
        %1965 = vmatpush1.msra.mxu0 0.0
        %1966 = vmatprep.subr.mxu0 0.0
        %1967 = vmatpush1.msra.mxu0 0.0
        %1968 = vmatprep.subr.mxu0 0.0
        %1969 = vmatpush1.msra.mxu0 0.0
        %1970 = vmatprep.subr.mxu0 0.0
        %1971 = vmatpush1.msra.mxu0 0.0
        %1972 = vmatprep.subr.mxu0 0.0
        %1973 = vmatpush1.msra.mxu0 0.0
        %1974 = vmatprep.subr.mxu0 0.0
        %1975 = vmatpush1.msra.mxu0 0.0
        %1976 = vmatprep.subr.mxu0 0.0
        %1977 = vmatpush1.msra.mxu0 0.0
        %1978 = vmatprep.mubr.f32.mxu0 0.0
        %1979 = vmatmul.mubr.f32.gmra.mrb[0].mxu0 %v1909
        %v1980 = vpop.f32.mrb[0].mxu0
        %v1981 = vadd.f32 0.0, %v1980
        %v1982 = vpop.f32.mrb[0].mxu0
        %1983 = vmatprep.mubr.f32.mxu0 0.0
        %1984 = vmatmul.mubr.f32.gmra.mrb[0].mxu0 %v1912
        %v1985 = vpop.f32.mrb[0].mxu0
        %v1986 = vadd.f32 0.0, %v1985
        %v1987 = vpop.f32.mrb[0].mxu0
        %1988 = vdwg.mxu0
        %1991 = vrot.lane.b32.xlu0 %v1981, 64
        %v1992 = vpop.permute.xlu0 %1991
        %1993 = vrot.lane.b32.xlu0 %v1986, 64
        %v1994 = vpop.permute.xlu0 %1993
        %v1997 = vadd.f32 %v1583, %v1992
        %v1998 = vadd.f32 %v1584, %v1994
        %v1999 = vtanh.pop %v1997
        %v2000 = vtanh.pop %v1998
        %v2001 = vmul.f32 %v1828, %v1580
        %v2002 = vmul.f32 %v1830, %v1581
        %v2003 = vsub.f32 1.0, %v1828
        %v2004 = vsub.f32 1.0, %v1830
        %2007 = vrot.lane.b32.xlu0 %v1999, 96
        %v2008 = vpop.permute.xlu0 %2007
        %2009 = vrot.lane.b32.xlu0 %v2000, 96
        %v2010 = vpop.permute.xlu0 %2009
        %v2013 = vmul.f32 %v2003, %v2008
        %v2014 = vmul.f32 %v2004, %v2010
        %v2015 = vadd.f32 %v2001, %v2013
        %v2016 = vadd.f32 %v2002, %v2014
        %s2017 = scalar_lea.vmem %s222, 64
        %v2018 = vld [vmem:[%s2017] sm:$0xff]
        %v2019 = vld [vmem:[%s2017 + $0x8] sm:$0xff]
        %2022 = vrot.lane.b32.xlu0 %v2015, 96
        %v2023 = vpop.permute.xlu0 %2022
        %2024 = vrot.lane.b32.xlu0 %v2016, 96
        %v2025 = vpop.permute.xlu0 %2024
        %2028 = vmatprep.subr.mxu0 0.0
        %2029 = vmatpush1.msra.mxu0 %v2023
        %2030 = vmatprep.subr.mxu0 0.0
        %2031 = vmatpush1.msra.mxu0 %v2025
        %2032 = vmatprep.subr.mxu0 0.0
        %2033 = vmatpush1.msra.mxu0 0.0
        %2034 = vmatprep.subr.mxu0 0.0
        %2035 = vmatpush1.msra.mxu0 0.0
        %2036 = vmatprep.subr.mxu0 0.0
        %2037 = vmatpush1.msra.mxu0 0.0
        %2038 = vmatprep.subr.mxu0 0.0
        %2039 = vmatpush1.msra.mxu0 0.0
        %2040 = vmatprep.subr.mxu0 0.0
        %2041 = vmatpush1.msra.mxu0 0.0
        %2042 = vmatprep.subr.mxu0 0.0
        %2043 = vmatpush1.msra.mxu0 0.0
        %2044 = vmatprep.subr.mxu0 0.0
        %2045 = vmatpush1.msra.mxu0 0.0
        %2046 = vmatprep.subr.mxu0 0.0
        %2047 = vmatpush1.msra.mxu0 0.0
        %2048 = vmatprep.subr.mxu0 0.0
        %2049 = vmatpush1.msra.mxu0 0.0
        %2050 = vmatprep.subr.mxu0 0.0
        %2051 = vmatpush1.msra.mxu0 0.0
        %2052 = vmatprep.subr.mxu0 0.0
        %2053 = vmatpush1.msra.mxu0 0.0
        %2054 = vmatprep.subr.mxu0 0.0
        %2055 = vmatpush1.msra.mxu0 0.0
        %2056 = vmatprep.subr.mxu0 0.0
        %2057 = vmatpush1.msra.mxu0 0.0
        %2058 = vmatprep.subr.mxu0 0.0
        %2059 = vmatpush1.msra.mxu0 0.0
        %2060 = vmatprep.subr.mxu0 0.0
        %2061 = vmatpush1.msra.mxu0 0.0
        %2062 = vmatprep.subr.mxu0 0.0
        %2063 = vmatpush1.msra.mxu0 0.0
        %2064 = vmatprep.subr.mxu0 0.0
        %2065 = vmatpush1.msra.mxu0 0.0
        %2066 = vmatprep.subr.mxu0 0.0
        %2067 = vmatpush1.msra.mxu0 0.0
        %2068 = vmatprep.subr.mxu0 0.0
        %2069 = vmatpush1.msra.mxu0 0.0
        %2070 = vmatprep.subr.mxu0 0.0
        %2071 = vmatpush1.msra.mxu0 0.0
        %2072 = vmatprep.subr.mxu0 0.0
        %2073 = vmatpush1.msra.mxu0 0.0
        %2074 = vmatprep.subr.mxu0 0.0
        %2075 = vmatpush1.msra.mxu0 0.0
        %2076 = vmatprep.subr.mxu0 0.0
        %2077 = vmatpush1.msra.mxu0 0.0
        %2078 = vmatprep.subr.mxu0 0.0
        %2079 = vmatpush1.msra.mxu0 0.0
        %2080 = vmatprep.subr.mxu0 0.0
        %2081 = vmatpush1.msra.mxu0 0.0
        %2082 = vmatprep.subr.mxu0 0.0
        %2083 = vmatpush1.msra.mxu0 0.0
        %2084 = vmatprep.subr.mxu0 0.0
        %2085 = vmatpush1.msra.mxu0 0.0
        %2086 = vmatprep.subr.mxu0 0.0
        %2087 = vmatpush1.msra.mxu0 0.0
        %2088 = vmatprep.subr.mxu0 0.0
        %2089 = vmatpush1.msra.mxu0 0.0
        %2090 = vmatprep.subr.mxu0 0.0
        %2091 = vmatpush1.msra.mxu0 0.0
        %2092 = vmatprep.mubr.f32.mxu0 0.0
        %2093 = vmatmul.mubr.f32.gmra.mrb[0].mxu0 %v270
        %v2094 = vpop.f32.mrb[0].mxu0
        %v2095 = vadd.f32 0.0, %v2094
        %v2096 = vpop.f32.mrb[0].mxu0
        %2097 = vmatprep.mubr.f32.mxu0 0.0
        %2098 = vmatmul.mubr.f32.gmra.mrb[0].mxu0 %v273
        %v2099 = vpop.f32.mrb[0].mxu0
        %v2100 = vadd.f32 0.0, %v2099
        %v2101 = vpop.f32.mrb[0].mxu0
        %2102 = vmatprep.mubr.f32.mxu0 0.0
        %2103 = vmatmul.mubr.f32.gmra.mrb[0].mxu0 %v276
        %v2104 = vpop.f32.mrb[0].mxu0
        %v2105 = vadd.f32 0.0, %v2104
        %v2106 = vpop.f32.mrb[0].mxu0
        %2107 = vmatprep.mubr.f32.mxu0 0.0
        %2108 = vmatmul.mubr.f32.gmra.mrb[0].mxu0 %v279
        %v2109 = vpop.f32.mrb[0].mxu0
        %v2110 = vadd.f32 0.0, %v2109
        %v2111 = vpop.f32.mrb[0].mxu0
        %2112 = vdwg.mxu0
        %v2114 = vsel %vm366, %v2095, 0
        %v2117 = vsel %vm366, %v2100, 0
        %v2120 = vsel %vm366, %v2105, 0
        %v2123 = vsel %vm366, %v2110, 0
        %2125 = vmatprep.subr.mxu0 0.0
        %2126 = vmatpush1.msra.mxu0 %v229
        %2127 = vmatprep.subr.mxu0 0.0
        %2128 = vmatpush1.msra.mxu0 %v230
        %2129 = vmatprep.subr.mxu0 0.0
        %2130 = vmatpush1.msra.mxu0 %v231
        %2131 = vmatprep.subr.mxu0 0.0
        %2132 = vmatpush1.msra.mxu0 %v232
        %2133 = vmatprep.subr.mxu0 0.0
        %2134 = vmatpush1.msra.mxu0 0.0
        %2135 = vmatprep.subr.mxu0 0.0
        %2136 = vmatpush1.msra.mxu0 0.0
        %2137 = vmatprep.subr.mxu0 0.0
        %2138 = vmatpush1.msra.mxu0 0.0
        %2139 = vmatprep.subr.mxu0 0.0
        %2140 = vmatpush1.msra.mxu0 0.0
        %2141 = vmatprep.subr.mxu0 0.0
        %2142 = vmatpush1.msra.mxu0 0.0
        %2143 = vmatprep.subr.mxu0 0.0
        %2144 = vmatpush1.msra.mxu0 0.0
        %2145 = vmatprep.subr.mxu0 0.0
        %2146 = vmatpush1.msra.mxu0 0.0
        %2147 = vmatprep.subr.mxu0 0.0
        %2148 = vmatpush1.msra.mxu0 0.0
        %2149 = vmatprep.subr.mxu0 0.0
        %2150 = vmatpush1.msra.mxu0 0.0
        %2151 = vmatprep.subr.mxu0 0.0
        %2152 = vmatpush1.msra.mxu0 0.0
        %2153 = vmatprep.subr.mxu0 0.0
        %2154 = vmatpush1.msra.mxu0 0.0
        %2155 = vmatprep.subr.mxu0 0.0
        %2156 = vmatpush1.msra.mxu0 0.0
        %2157 = vmatprep.subr.mxu0 0.0
        %2158 = vmatpush1.msra.mxu0 0.0
        %2159 = vmatprep.subr.mxu0 0.0
        %2160 = vmatpush1.msra.mxu0 0.0
        %2161 = vmatprep.subr.mxu0 0.0
        %2162 = vmatpush1.msra.mxu0 0.0
        %2163 = vmatprep.subr.mxu0 0.0
        %2164 = vmatpush1.msra.mxu0 0.0
        %2165 = vmatprep.subr.mxu0 0.0
        %2166 = vmatpush1.msra.mxu0 0.0
        %2167 = vmatprep.subr.mxu0 0.0
        %2168 = vmatpush1.msra.mxu0 0.0
        %2169 = vmatprep.subr.mxu0 0.0
        %2170 = vmatpush1.msra.mxu0 0.0
        %2171 = vmatprep.subr.mxu0 0.0
        %2172 = vmatpush1.msra.mxu0 0.0
        %2173 = vmatprep.subr.mxu0 0.0
        %2174 = vmatpush1.msra.mxu0 0.0
        %2175 = vmatprep.subr.mxu0 0.0
        %2176 = vmatpush1.msra.mxu0 0.0
        %2177 = vmatprep.subr.mxu0 0.0
        %2178 = vmatpush1.msra.mxu0 0.0
        %2179 = vmatprep.subr.mxu0 0.0
        %2180 = vmatpush1.msra.mxu0 0.0
        %2181 = vmatprep.subr.mxu0 0.0
        %2182 = vmatpush1.msra.mxu0 0.0
        %2183 = vmatprep.subr.mxu0 0.0
        %2184 = vmatpush1.msra.mxu0 0.0
        %2185 = vmatprep.subr.mxu0 0.0
        %2186 = vmatpush1.msra.mxu0 0.0
        %2187 = vmatprep.subr.mxu0 0.0
        %2188 = vmatpush1.msra.mxu0 0.0
        %2189 = vmatprep.mubr.f32.mxu0 0.0
        %2190 = vmatmul.mubr.f32.gmra.mrb[0].mxu0 %v2114
        %v2191 = vpop.f32.mrb[0].mxu0
        %v2192 = vadd.f32 0.0, %v2191
        %v2193 = vpop.f32.mrb[0].mxu0
        %2194 = vmatprep.mubr.f32.mxu0 0.0
        %2195 = vmatmul.mubr.f32.gmra.mrb[0].mxu0 %v2117
        %v2196 = vpop.f32.mrb[0].mxu0
        %v2197 = vadd.f32 0.0, %v2196
        %v2198 = vpop.f32.mrb[0].mxu0
        %2199 = vmatprep.mubr.f32.mxu0 0.0
        %2200 = vmatmul.mubr.f32.gmra.mrb[0].mxu0 %v2120
        %v2201 = vpop.f32.mrb[0].mxu0
        %v2202 = vadd.f32 0.0, %v2201
        %v2203 = vpop.f32.mrb[0].mxu0
        %2204 = vmatprep.mubr.f32.mxu0 0.0
        %2205 = vmatmul.mubr.f32.gmra.mrb[0].mxu0 %v2123
        %v2206 = vpop.f32.mrb[0].mxu0
        %v2207 = vadd.f32 0.0, %v2206
        %v2208 = vpop.f32.mrb[0].mxu0
        %2209 = vdwg.mxu0
        %2212 = vrot.lane.b32.xlu0 %v2192, 96
        %v2213 = vpop.permute.xlu0 %2212
        %2214 = vrot.lane.b32.xlu0 %v2197, 96
        %v2215 = vpop.permute.xlu0 %2214
        %v2218 = vsel %vm264, %v2192, %v2213
        %v2219 = vsel %vm265, %v2197, %v2215
        %v2220 = vadd.f32 %v2018, %v2218
        %v2221 = vadd.f32 %v2019, %v2219
        %v2222 = vxor.u32 %v2220, 2147483648
        %v2223 = vxor.u32 %v2221, 2147483648
        %v2224 = vmul.f32 %v2222, 1.442695
        %v2225 = vpow.pop %v2224
        %v2226 = vmul.f32 %v2223, 1.442695
        %v2227 = vpow.pop %v2226
        %v2228 = vadd.f32 %v2225, 1.0
        %v2229 = vadd.f32 %v2227, 1.0
        %v2230 = vrcp.pop %v2228
        %v2231 = vmul.f32 1.0, %v2230
        %v2232 = vrcp.pop %v2229
        %v2233 = vmul.f32 1.0, %v2232
        %2236 = vrot.lane.b32.xlu0 %v2202, 96
        %v2237 = vpop.permute.xlu0 %2236
        %2238 = vrot.lane.b32.xlu0 %v2207, 96
        %v2239 = vpop.permute.xlu0 %2238
        %v2242 = vsel %vm264, %v2202, %v2237
        %v2243 = vsel %vm265, %v2207, %v2239
        %2246 = vrot.lane.b32.xlu0 %v2242, 32
        %v2247 = vpop.permute.xlu0 %2246
        %2248 = vrot.lane.b32.xlu0 %v2243, 32
        %v2249 = vpop.permute.xlu0 %2248
        %v2252 = vadd.f32 %v2018, %v2247
        %v2253 = vadd.f32 %v2019, %v2249
        %v2254 = vxor.u32 %v2252, 2147483648
        %v2255 = vxor.u32 %v2253, 2147483648
        %v2256 = vmul.f32 %v2254, 1.442695
        %v2257 = vpow.pop %v2256
        %v2258 = vmul.f32 %v2255, 1.442695
        %v2259 = vpow.pop %v2258
        %v2260 = vadd.f32 %v2257, 1.0
        %v2261 = vadd.f32 %v2259, 1.0
        %v2262 = vrcp.pop %v2260
        %v2263 = vmul.f32 1.0, %v2262
        %v2264 = vrcp.pop %v2261
        %v2265 = vmul.f32 1.0, %v2264
        %v2266 = vmul.f32 %v2231, %v2023
        %v2267 = vmul.f32 %v2233, %v2025
        %2268 = vmatprep.subr.mxu0 0.0
        %2269 = vmatpush1.msra.mxu0 %v2266
        %2270 = vmatprep.subr.mxu0 0.0
        %2271 = vmatpush1.msra.mxu0 %v2267
        %2272 = vmatprep.subr.mxu0 0.0
        %2273 = vmatpush1.msra.mxu0 0.0
        %2274 = vmatprep.subr.mxu0 0.0
        %2275 = vmatpush1.msra.mxu0 0.0
        %2276 = vmatprep.subr.mxu0 0.0
        %2277 = vmatpush1.msra.mxu0 0.0
        %2278 = vmatprep.subr.mxu0 0.0
        %2279 = vmatpush1.msra.mxu0 0.0
        %2280 = vmatprep.subr.mxu0 0.0
        %2281 = vmatpush1.msra.mxu0 0.0
        %2282 = vmatprep.subr.mxu0 0.0
        %2283 = vmatpush1.msra.mxu0 0.0
        %2284 = vmatprep.subr.mxu0 0.0
        %2285 = vmatpush1.msra.mxu0 0.0
        %2286 = vmatprep.subr.mxu0 0.0
        %2287 = vmatpush1.msra.mxu0 0.0
        %2288 = vmatprep.subr.mxu0 0.0
        %2289 = vmatpush1.msra.mxu0 0.0
        %2290 = vmatprep.subr.mxu0 0.0
        %2291 = vmatpush1.msra.mxu0 0.0
        %2292 = vmatprep.subr.mxu0 0.0
        %2293 = vmatpush1.msra.mxu0 0.0
        %2294 = vmatprep.subr.mxu0 0.0
        %2295 = vmatpush1.msra.mxu0 0.0
        %2296 = vmatprep.subr.mxu0 0.0
        %2297 = vmatpush1.msra.mxu0 0.0
        %2298 = vmatprep.subr.mxu0 0.0
        %2299 = vmatpush1.msra.mxu0 0.0
        %2300 = vmatprep.subr.mxu0 0.0
        %2301 = vmatpush1.msra.mxu0 0.0
        %2302 = vmatprep.subr.mxu0 0.0
        %2303 = vmatpush1.msra.mxu0 0.0
        %2304 = vmatprep.subr.mxu0 0.0
        %2305 = vmatpush1.msra.mxu0 0.0
        %2306 = vmatprep.subr.mxu0 0.0
        %2307 = vmatpush1.msra.mxu0 0.0
        %2308 = vmatprep.subr.mxu0 0.0
        %2309 = vmatpush1.msra.mxu0 0.0
        %2310 = vmatprep.subr.mxu0 0.0
        %2311 = vmatpush1.msra.mxu0 0.0
        %2312 = vmatprep.subr.mxu0 0.0
        %2313 = vmatpush1.msra.mxu0 0.0
        %2314 = vmatprep.subr.mxu0 0.0
        %2315 = vmatpush1.msra.mxu0 0.0
        %2316 = vmatprep.subr.mxu0 0.0
        %2317 = vmatpush1.msra.mxu0 0.0
        %2318 = vmatprep.subr.mxu0 0.0
        %2319 = vmatpush1.msra.mxu0 0.0
        %2320 = vmatprep.subr.mxu0 0.0
        %2321 = vmatpush1.msra.mxu0 0.0
        %2322 = vmatprep.subr.mxu0 0.0
        %2323 = vmatpush1.msra.mxu0 0.0
        %2324 = vmatprep.subr.mxu0 0.0
        %2325 = vmatpush1.msra.mxu0 0.0
        %2326 = vmatprep.subr.mxu0 0.0
        %2327 = vmatpush1.msra.mxu0 0.0
        %2328 = vmatprep.subr.mxu0 0.0
        %2329 = vmatpush1.msra.mxu0 0.0
        %2330 = vmatprep.subr.mxu0 0.0
        %2331 = vmatpush1.msra.mxu0 0.0
        %2332 = vmatprep.mubr.f32.mxu0 0.0
        %2333 = vmatmul.mubr.f32.gmra.mrb[0].mxu0 %v523
        %v2334 = vpop.f32.mrb[0].mxu0
        %v2335 = vadd.f32 0.0, %v2334
        %v2336 = vpop.f32.mrb[0].mxu0
        %2337 = vmatprep.mubr.f32.mxu0 0.0
        %2338 = vmatmul.mubr.f32.gmra.mrb[0].mxu0 %v526
        %v2339 = vpop.f32.mrb[0].mxu0
        %v2340 = vadd.f32 0.0, %v2339
        %v2341 = vpop.f32.mrb[0].mxu0
        %2342 = vdwg.mxu0
        %v2344 = vsel %vm366, %v2335, 0
        %v2347 = vsel %vm366, %v2340, 0
        %2349 = vmatprep.subr.mxu0 0.0
        %2350 = vmatpush1.msra.mxu0 %v233
        %2351 = vmatprep.subr.mxu0 0.0
        %2352 = vmatpush1.msra.mxu0 %v234
        %2353 = vmatprep.subr.mxu0 0.0
        %2354 = vmatpush1.msra.mxu0 %v235
        %2355 = vmatprep.subr.mxu0 0.0
        %2356 = vmatpush1.msra.mxu0 %v236
        %2357 = vmatprep.subr.mxu0 0.0
        %2358 = vmatpush1.msra.mxu0 0.0
        %2359 = vmatprep.subr.mxu0 0.0
        %2360 = vmatpush1.msra.mxu0 0.0
        %2361 = vmatprep.subr.mxu0 0.0
        %2362 = vmatpush1.msra.mxu0 0.0
        %2363 = vmatprep.subr.mxu0 0.0
        %2364 = vmatpush1.msra.mxu0 0.0
        %2365 = vmatprep.subr.mxu0 0.0
        %2366 = vmatpush1.msra.mxu0 0.0
        %2367 = vmatprep.subr.mxu0 0.0
        %2368 = vmatpush1.msra.mxu0 0.0
        %2369 = vmatprep.subr.mxu0 0.0
        %2370 = vmatpush1.msra.mxu0 0.0
        %2371 = vmatprep.subr.mxu0 0.0
        %2372 = vmatpush1.msra.mxu0 0.0
        %2373 = vmatprep.subr.mxu0 0.0
        %2374 = vmatpush1.msra.mxu0 0.0
        %2375 = vmatprep.subr.mxu0 0.0
        %2376 = vmatpush1.msra.mxu0 0.0
        %2377 = vmatprep.subr.mxu0 0.0
        %2378 = vmatpush1.msra.mxu0 0.0
        %2379 = vmatprep.subr.mxu0 0.0
        %2380 = vmatpush1.msra.mxu0 0.0
        %2381 = vmatprep.subr.mxu0 0.0
        %2382 = vmatpush1.msra.mxu0 0.0
        %2383 = vmatprep.subr.mxu0 0.0
        %2384 = vmatpush1.msra.mxu0 0.0
        %2385 = vmatprep.subr.mxu0 0.0
        %2386 = vmatpush1.msra.mxu0 0.0
        %2387 = vmatprep.subr.mxu0 0.0
        %2388 = vmatpush1.msra.mxu0 0.0
        %2389 = vmatprep.subr.mxu0 0.0
        %2390 = vmatpush1.msra.mxu0 0.0
        %2391 = vmatprep.subr.mxu0 0.0
        %2392 = vmatpush1.msra.mxu0 0.0
        %2393 = vmatprep.subr.mxu0 0.0
        %2394 = vmatpush1.msra.mxu0 0.0
        %2395 = vmatprep.subr.mxu0 0.0
        %2396 = vmatpush1.msra.mxu0 0.0
        %2397 = vmatprep.subr.mxu0 0.0
        %2398 = vmatpush1.msra.mxu0 0.0
        %2399 = vmatprep.subr.mxu0 0.0
        %2400 = vmatpush1.msra.mxu0 0.0
        %2401 = vmatprep.subr.mxu0 0.0
        %2402 = vmatpush1.msra.mxu0 0.0
        %2403 = vmatprep.subr.mxu0 0.0
        %2404 = vmatpush1.msra.mxu0 0.0
        %2405 = vmatprep.subr.mxu0 0.0
        %2406 = vmatpush1.msra.mxu0 0.0
        %2407 = vmatprep.subr.mxu0 0.0
        %2408 = vmatpush1.msra.mxu0 0.0
        %2409 = vmatprep.subr.mxu0 0.0
        %2410 = vmatpush1.msra.mxu0 0.0
        %2411 = vmatprep.subr.mxu0 0.0
        %2412 = vmatpush1.msra.mxu0 0.0
        %2413 = vmatprep.mubr.f32.mxu0 0.0
        %2414 = vmatmul.mubr.f32.gmra.mrb[0].mxu0 %v2344
        %v2415 = vpop.f32.mrb[0].mxu0
        %v2416 = vadd.f32 0.0, %v2415
        %v2417 = vpop.f32.mrb[0].mxu0
        %2418 = vmatprep.mubr.f32.mxu0 0.0
        %2419 = vmatmul.mubr.f32.gmra.mrb[0].mxu0 %v2347
        %v2420 = vpop.f32.mrb[0].mxu0
        %v2421 = vadd.f32 0.0, %v2420
        %v2422 = vpop.f32.mrb[0].mxu0
        %2423 = vdwg.mxu0
        %2426 = vrot.lane.b32.xlu0 %v2416, 64
        %v2427 = vpop.permute.xlu0 %2426
        %2428 = vrot.lane.b32.xlu0 %v2421, 64
        %v2429 = vpop.permute.xlu0 %2428
        %v2432 = vadd.f32 %v2018, %v2427
        %v2433 = vadd.f32 %v2019, %v2429
        %v2434 = vtanh.pop %v2432
        %v2435 = vtanh.pop %v2433
        %v2436 = vmul.f32 %v2263, %v2015
        %v2437 = vmul.f32 %v2265, %v2016
        %v2438 = vsub.f32 1.0, %v2263
        %v2439 = vsub.f32 1.0, %v2265
        %2442 = vrot.lane.b32.xlu0 %v2434, 96
        %v2443 = vpop.permute.xlu0 %2442
        %2444 = vrot.lane.b32.xlu0 %v2435, 96
        %v2445 = vpop.permute.xlu0 %2444
        %v2448 = vmul.f32 %v2438, %v2443
        %v2449 = vmul.f32 %v2439, %v2445
        %v2450 = vadd.f32 %v2436, %v2448
        %v2451 = vadd.f32 %v2437, %v2449
        %s2452 = scalar_lea.vmem %s222, 80
        %v2453 = vld [vmem:[%s2452] sm:$0xff]
        %v2454 = vld [vmem:[%s2452 + $0x8] sm:$0xff]
        %2457 = vrot.lane.b32.xlu0 %v2450, 96
        %v2458 = vpop.permute.xlu0 %2457
        %2459 = vrot.lane.b32.xlu0 %v2451, 96
        %v2460 = vpop.permute.xlu0 %2459
        %2463 = vmatprep.subr.mxu0 0.0
        %2464 = vmatpush1.msra.mxu0 %v2458
        %2465 = vmatprep.subr.mxu0 0.0
        %2466 = vmatpush1.msra.mxu0 %v2460
        %2467 = vmatprep.subr.mxu0 0.0
        %2468 = vmatpush1.msra.mxu0 0.0
        %2469 = vmatprep.subr.mxu0 0.0
        %2470 = vmatpush1.msra.mxu0 0.0
        %2471 = vmatprep.subr.mxu0 0.0
        %2472 = vmatpush1.msra.mxu0 0.0
        %2473 = vmatprep.subr.mxu0 0.0
        %2474 = vmatpush1.msra.mxu0 0.0
        %2475 = vmatprep.subr.mxu0 0.0
        %2476 = vmatpush1.msra.mxu0 0.0
        %2477 = vmatprep.subr.mxu0 0.0
        %2478 = vmatpush1.msra.mxu0 0.0
        %2479 = vmatprep.subr.mxu0 0.0
        %2480 = vmatpush1.msra.mxu0 0.0
        %2481 = vmatprep.subr.mxu0 0.0
        %2482 = vmatpush1.msra.mxu0 0.0
        %2483 = vmatprep.subr.mxu0 0.0
        %2484 = vmatpush1.msra.mxu0 0.0
        %2485 = vmatprep.subr.mxu0 0.0
        %2486 = vmatpush1.msra.mxu0 0.0
        %2487 = vmatprep.subr.mxu0 0.0
        %2488 = vmatpush1.msra.mxu0 0.0
        %2489 = vmatprep.subr.mxu0 0.0
        %2490 = vmatpush1.msra.mxu0 0.0
        %2491 = vmatprep.subr.mxu0 0.0
        %2492 = vmatpush1.msra.mxu0 0.0
        %2493 = vmatprep.subr.mxu0 0.0
        %2494 = vmatpush1.msra.mxu0 0.0
        %2495 = vmatprep.subr.mxu0 0.0
        %2496 = vmatpush1.msra.mxu0 0.0
        %2497 = vmatprep.subr.mxu0 0.0
        %2498 = vmatpush1.msra.mxu0 0.0
        %2499 = vmatprep.subr.mxu0 0.0
        %2500 = vmatpush1.msra.mxu0 0.0
        %2501 = vmatprep.subr.mxu0 0.0
        %2502 = vmatpush1.msra.mxu0 0.0
        %2503 = vmatprep.subr.mxu0 0.0
        %2504 = vmatpush1.msra.mxu0 0.0
        %2505 = vmatprep.subr.mxu0 0.0
        %2506 = vmatpush1.msra.mxu0 0.0
        %2507 = vmatprep.subr.mxu0 0.0
        %2508 = vmatpush1.msra.mxu0 0.0
        %2509 = vmatprep.subr.mxu0 0.0
        %2510 = vmatpush1.msra.mxu0 0.0
        %2511 = vmatprep.subr.mxu0 0.0
        %2512 = vmatpush1.msra.mxu0 0.0
        %2513 = vmatprep.subr.mxu0 0.0
        %2514 = vmatpush1.msra.mxu0 0.0
        %2515 = vmatprep.subr.mxu0 0.0
        %2516 = vmatpush1.msra.mxu0 0.0
        %2517 = vmatprep.subr.mxu0 0.0
        %2518 = vmatpush1.msra.mxu0 0.0
        %2519 = vmatprep.subr.mxu0 0.0
        %2520 = vmatpush1.msra.mxu0 0.0
        %2521 = vmatprep.subr.mxu0 0.0
        %2522 = vmatpush1.msra.mxu0 0.0
        %2523 = vmatprep.subr.mxu0 0.0
        %2524 = vmatpush1.msra.mxu0 0.0
        %2525 = vmatprep.subr.mxu0 0.0
        %2526 = vmatpush1.msra.mxu0 0.0
        %2527 = vmatprep.mubr.f32.mxu0 0.0
        %2528 = vmatmul.mubr.f32.gmra.mrb[0].mxu0 %v270
        %v2529 = vpop.f32.mrb[0].mxu0
        %v2530 = vadd.f32 0.0, %v2529
        %v2531 = vpop.f32.mrb[0].mxu0
        %2532 = vmatprep.mubr.f32.mxu0 0.0
        %2533 = vmatmul.mubr.f32.gmra.mrb[0].mxu0 %v273
        %v2534 = vpop.f32.mrb[0].mxu0
        %v2535 = vadd.f32 0.0, %v2534
        %v2536 = vpop.f32.mrb[0].mxu0
        %2537 = vmatprep.mubr.f32.mxu0 0.0
        %2538 = vmatmul.mubr.f32.gmra.mrb[0].mxu0 %v276
        %v2539 = vpop.f32.mrb[0].mxu0
        %v2540 = vadd.f32 0.0, %v2539
        %v2541 = vpop.f32.mrb[0].mxu0
        %2542 = vmatprep.mubr.f32.mxu0 0.0
        %2543 = vmatmul.mubr.f32.gmra.mrb[0].mxu0 %v279
        %v2544 = vpop.f32.mrb[0].mxu0
        %v2545 = vadd.f32 0.0, %v2544
        %v2546 = vpop.f32.mrb[0].mxu0
        %2547 = vdwg.mxu0
        %v2549 = vsel %vm366, %v2530, 0
        %v2552 = vsel %vm366, %v2535, 0
        %v2555 = vsel %vm366, %v2540, 0
        %v2558 = vsel %vm366, %v2545, 0
        %2560 = vmatprep.subr.mxu0 0.0
        %2561 = vmatpush1.msra.mxu0 %v229
        %2562 = vmatprep.subr.mxu0 0.0
        %2563 = vmatpush1.msra.mxu0 %v230
        %2564 = vmatprep.subr.mxu0 0.0
        %2565 = vmatpush1.msra.mxu0 %v231
        %2566 = vmatprep.subr.mxu0 0.0
        %2567 = vmatpush1.msra.mxu0 %v232
        %2568 = vmatprep.subr.mxu0 0.0
        %2569 = vmatpush1.msra.mxu0 0.0
        %2570 = vmatprep.subr.mxu0 0.0
        %2571 = vmatpush1.msra.mxu0 0.0
        %2572 = vmatprep.subr.mxu0 0.0
        %2573 = vmatpush1.msra.mxu0 0.0
        %2574 = vmatprep.subr.mxu0 0.0
        %2575 = vmatpush1.msra.mxu0 0.0
        %2576 = vmatprep.subr.mxu0 0.0
        %2577 = vmatpush1.msra.mxu0 0.0
        %2578 = vmatprep.subr.mxu0 0.0
        %2579 = vmatpush1.msra.mxu0 0.0
        %2580 = vmatprep.subr.mxu0 0.0
        %2581 = vmatpush1.msra.mxu0 0.0
        %2582 = vmatprep.subr.mxu0 0.0
        %2583 = vmatpush1.msra.mxu0 0.0
        %2584 = vmatprep.subr.mxu0 0.0
        %2585 = vmatpush1.msra.mxu0 0.0
        %2586 = vmatprep.subr.mxu0 0.0
        %2587 = vmatpush1.msra.mxu0 0.0
        %2588 = vmatprep.subr.mxu0 0.0
        %2589 = vmatpush1.msra.mxu0 0.0
        %2590 = vmatprep.subr.mxu0 0.0
        %2591 = vmatpush1.msra.mxu0 0.0
        %2592 = vmatprep.subr.mxu0 0.0
        %2593 = vmatpush1.msra.mxu0 0.0
        %2594 = vmatprep.subr.mxu0 0.0
        %2595 = vmatpush1.msra.mxu0 0.0
        %2596 = vmatprep.subr.mxu0 0.0
        %2597 = vmatpush1.msra.mxu0 0.0
        %2598 = vmatprep.subr.mxu0 0.0
        %2599 = vmatpush1.msra.mxu0 0.0
        %2600 = vmatprep.subr.mxu0 0.0
        %2601 = vmatpush1.msra.mxu0 0.0
        %2602 = vmatprep.subr.mxu0 0.0
        %2603 = vmatpush1.msra.mxu0 0.0
        %2604 = vmatprep.subr.mxu0 0.0
        %2605 = vmatpush1.msra.mxu0 0.0
        %2606 = vmatprep.subr.mxu0 0.0
        %2607 = vmatpush1.msra.mxu0 0.0
        %2608 = vmatprep.subr.mxu0 0.0
        %2609 = vmatpush1.msra.mxu0 0.0
        %2610 = vmatprep.subr.mxu0 0.0
        %2611 = vmatpush1.msra.mxu0 0.0
        %2612 = vmatprep.subr.mxu0 0.0
        %2613 = vmatpush1.msra.mxu0 0.0
        %2614 = vmatprep.subr.mxu0 0.0
        %2615 = vmatpush1.msra.mxu0 0.0
        %2616 = vmatprep.subr.mxu0 0.0
        %2617 = vmatpush1.msra.mxu0 0.0
        %2618 = vmatprep.subr.mxu0 0.0
        %2619 = vmatpush1.msra.mxu0 0.0
        %2620 = vmatprep.subr.mxu0 0.0
        %2621 = vmatpush1.msra.mxu0 0.0
        %2622 = vmatprep.subr.mxu0 0.0
        %2623 = vmatpush1.msra.mxu0 0.0
        %2624 = vmatprep.mubr.f32.mxu0 0.0
        %2625 = vmatmul.mubr.f32.gmra.mrb[0].mxu0 %v2549
        %v2626 = vpop.f32.mrb[0].mxu0
        %v2627 = vadd.f32 0.0, %v2626
        %v2628 = vpop.f32.mrb[0].mxu0
        %2629 = vmatprep.mubr.f32.mxu0 0.0
        %2630 = vmatmul.mubr.f32.gmra.mrb[0].mxu0 %v2552
        %v2631 = vpop.f32.mrb[0].mxu0
        %v2632 = vadd.f32 0.0, %v2631
        %v2633 = vpop.f32.mrb[0].mxu0
        %2634 = vmatprep.mubr.f32.mxu0 0.0
        %2635 = vmatmul.mubr.f32.gmra.mrb[0].mxu0 %v2555
        %v2636 = vpop.f32.mrb[0].mxu0
        %v2637 = vadd.f32 0.0, %v2636
        %v2638 = vpop.f32.mrb[0].mxu0
        %2639 = vmatprep.mubr.f32.mxu0 0.0
        %2640 = vmatmul.mubr.f32.gmra.mrb[0].mxu0 %v2558
        %v2641 = vpop.f32.mrb[0].mxu0
        %v2642 = vadd.f32 0.0, %v2641
        %v2643 = vpop.f32.mrb[0].mxu0
        %2644 = vdwg.mxu0
        %2647 = vrot.lane.b32.xlu0 %v2627, 96
        %v2648 = vpop.permute.xlu0 %2647
        %2649 = vrot.lane.b32.xlu0 %v2632, 96
        %v2650 = vpop.permute.xlu0 %2649
        %v2653 = vsel %vm264, %v2627, %v2648
        %v2654 = vsel %vm265, %v2632, %v2650
        %v2655 = vadd.f32 %v2453, %v2653
        %v2656 = vadd.f32 %v2454, %v2654
        %v2657 = vxor.u32 %v2655, 2147483648
        %v2658 = vxor.u32 %v2656, 2147483648
        %v2659 = vmul.f32 %v2657, 1.442695
        %v2660 = vpow.pop %v2659
        %v2661 = vmul.f32 %v2658, 1.442695
        %v2662 = vpow.pop %v2661
        %v2663 = vadd.f32 %v2660, 1.0
        %v2664 = vadd.f32 %v2662, 1.0
        %v2665 = vrcp.pop %v2663
        %v2666 = vmul.f32 1.0, %v2665
        %v2667 = vrcp.pop %v2664
        %v2668 = vmul.f32 1.0, %v2667
        %2671 = vrot.lane.b32.xlu0 %v2637, 96
        %v2672 = vpop.permute.xlu0 %2671
        %2673 = vrot.lane.b32.xlu0 %v2642, 96
        %v2674 = vpop.permute.xlu0 %2673
        %v2677 = vsel %vm264, %v2637, %v2672
        %v2678 = vsel %vm265, %v2642, %v2674
        %2681 = vrot.lane.b32.xlu0 %v2677, 32
        %v2682 = vpop.permute.xlu0 %2681
        %2683 = vrot.lane.b32.xlu0 %v2678, 32
        %v2684 = vpop.permute.xlu0 %2683
        %v2687 = vadd.f32 %v2453, %v2682
        %v2688 = vadd.f32 %v2454, %v2684
        %v2689 = vxor.u32 %v2687, 2147483648
        %v2690 = vxor.u32 %v2688, 2147483648
        %v2691 = vmul.f32 %v2689, 1.442695
        %v2692 = vpow.pop %v2691
        %v2693 = vmul.f32 %v2690, 1.442695
        %v2694 = vpow.pop %v2693
        %v2695 = vadd.f32 %v2692, 1.0
        %v2696 = vadd.f32 %v2694, 1.0
        %v2697 = vrcp.pop %v2695
        %v2698 = vmul.f32 1.0, %v2697
        %v2699 = vrcp.pop %v2696
        %v2700 = vmul.f32 1.0, %v2699
        %v2701 = vmul.f32 %v2666, %v2458
        %v2702 = vmul.f32 %v2668, %v2460
        %2703 = vmatprep.subr.mxu0 0.0
        %2704 = vmatpush1.msra.mxu0 %v2701
        %2705 = vmatprep.subr.mxu0 0.0
        %2706 = vmatpush1.msra.mxu0 %v2702
        %2707 = vmatprep.subr.mxu0 0.0
        %2708 = vmatpush1.msra.mxu0 0.0
        %2709 = vmatprep.subr.mxu0 0.0
        %2710 = vmatpush1.msra.mxu0 0.0
        %2711 = vmatprep.subr.mxu0 0.0
        %2712 = vmatpush1.msra.mxu0 0.0
        %2713 = vmatprep.subr.mxu0 0.0
        %2714 = vmatpush1.msra.mxu0 0.0
        %2715 = vmatprep.subr.mxu0 0.0
        %2716 = vmatpush1.msra.mxu0 0.0
        %2717 = vmatprep.subr.mxu0 0.0
        %2718 = vmatpush1.msra.mxu0 0.0
        %2719 = vmatprep.subr.mxu0 0.0
        %2720 = vmatpush1.msra.mxu0 0.0
        %2721 = vmatprep.subr.mxu0 0.0
        %2722 = vmatpush1.msra.mxu0 0.0
        %2723 = vmatprep.subr.mxu0 0.0
        %2724 = vmatpush1.msra.mxu0 0.0
        %2725 = vmatprep.subr.mxu0 0.0
        %2726 = vmatpush1.msra.mxu0 0.0
        %2727 = vmatprep.subr.mxu0 0.0
        %2728 = vmatpush1.msra.mxu0 0.0
        %2729 = vmatprep.subr.mxu0 0.0
        %2730 = vmatpush1.msra.mxu0 0.0
        %2731 = vmatprep.subr.mxu0 0.0
        %2732 = vmatpush1.msra.mxu0 0.0
        %2733 = vmatprep.subr.mxu0 0.0
        %2734 = vmatpush1.msra.mxu0 0.0
        %2735 = vmatprep.subr.mxu0 0.0
        %2736 = vmatpush1.msra.mxu0 0.0
        %2737 = vmatprep.subr.mxu0 0.0
        %2738 = vmatpush1.msra.mxu0 0.0
        %2739 = vmatprep.subr.mxu0 0.0
        %2740 = vmatpush1.msra.mxu0 0.0
        %2741 = vmatprep.subr.mxu0 0.0
        %2742 = vmatpush1.msra.mxu0 0.0
        %2743 = vmatprep.subr.mxu0 0.0
        %2744 = vmatpush1.msra.mxu0 0.0
        %2745 = vmatprep.subr.mxu0 0.0
        %2746 = vmatpush1.msra.mxu0 0.0
        %2747 = vmatprep.subr.mxu0 0.0
        %2748 = vmatpush1.msra.mxu0 0.0
        %2749 = vmatprep.subr.mxu0 0.0
        %2750 = vmatpush1.msra.mxu0 0.0
        %2751 = vmatprep.subr.mxu0 0.0
        %2752 = vmatpush1.msra.mxu0 0.0
        %2753 = vmatprep.subr.mxu0 0.0
        %2754 = vmatpush1.msra.mxu0 0.0
        %2755 = vmatprep.subr.mxu0 0.0
        %2756 = vmatpush1.msra.mxu0 0.0
        %2757 = vmatprep.subr.mxu0 0.0
        %2758 = vmatpush1.msra.mxu0 0.0
        %2759 = vmatprep.subr.mxu0 0.0
        %2760 = vmatpush1.msra.mxu0 0.0
        %2761 = vmatprep.subr.mxu0 0.0
        %2762 = vmatpush1.msra.mxu0 0.0
        %2763 = vmatprep.subr.mxu0 0.0
        %2764 = vmatpush1.msra.mxu0 0.0
        %2765 = vmatprep.subr.mxu0 0.0
        %2766 = vmatpush1.msra.mxu0 0.0
        %2767 = vmatprep.mubr.f32.mxu0 0.0
        %2768 = vmatmul.mubr.f32.gmra.mrb[0].mxu0 %v523
        %v2769 = vpop.f32.mrb[0].mxu0
        %v2770 = vadd.f32 0.0, %v2769
        %v2771 = vpop.f32.mrb[0].mxu0
        %2772 = vmatprep.mubr.f32.mxu0 0.0
        %2773 = vmatmul.mubr.f32.gmra.mrb[0].mxu0 %v526
        %v2774 = vpop.f32.mrb[0].mxu0
        %v2775 = vadd.f32 0.0, %v2774
        %v2776 = vpop.f32.mrb[0].mxu0
        %2777 = vdwg.mxu0
        %v2779 = vsel %vm366, %v2770, 0
        %v2782 = vsel %vm366, %v2775, 0
        %2784 = vmatprep.subr.mxu0 0.0
        %2785 = vmatpush1.msra.mxu0 %v233
        %2786 = vmatprep.subr.mxu0 0.0
        %2787 = vmatpush1.msra.mxu0 %v234
        %2788 = vmatprep.subr.mxu0 0.0
        %2789 = vmatpush1.msra.mxu0 %v235
        %2790 = vmatprep.subr.mxu0 0.0
        %2791 = vmatpush1.msra.mxu0 %v236
        %2792 = vmatprep.subr.mxu0 0.0
        %2793 = vmatpush1.msra.mxu0 0.0
        %2794 = vmatprep.subr.mxu0 0.0
        %2795 = vmatpush1.msra.mxu0 0.0
        %2796 = vmatprep.subr.mxu0 0.0
        %2797 = vmatpush1.msra.mxu0 0.0
        %2798 = vmatprep.subr.mxu0 0.0
        %2799 = vmatpush1.msra.mxu0 0.0
        %2800 = vmatprep.subr.mxu0 0.0
        %2801 = vmatpush1.msra.mxu0 0.0
        %2802 = vmatprep.subr.mxu0 0.0
        %2803 = vmatpush1.msra.mxu0 0.0
        %2804 = vmatprep.subr.mxu0 0.0
        %2805 = vmatpush1.msra.mxu0 0.0
        %2806 = vmatprep.subr.mxu0 0.0
        %2807 = vmatpush1.msra.mxu0 0.0
        %2808 = vmatprep.subr.mxu0 0.0
        %2809 = vmatpush1.msra.mxu0 0.0
        %2810 = vmatprep.subr.mxu0 0.0
        %2811 = vmatpush1.msra.mxu0 0.0
        %2812 = vmatprep.subr.mxu0 0.0
        %2813 = vmatpush1.msra.mxu0 0.0
        %2814 = vmatprep.subr.mxu0 0.0
        %2815 = vmatpush1.msra.mxu0 0.0
        %2816 = vmatprep.subr.mxu0 0.0
        %2817 = vmatpush1.msra.mxu0 0.0
        %2818 = vmatprep.subr.mxu0 0.0
        %2819 = vmatpush1.msra.mxu0 0.0
        %2820 = vmatprep.subr.mxu0 0.0
        %2821 = vmatpush1.msra.mxu0 0.0
        %2822 = vmatprep.subr.mxu0 0.0
        %2823 = vmatpush1.msra.mxu0 0.0
        %2824 = vmatprep.subr.mxu0 0.0
        %2825 = vmatpush1.msra.mxu0 0.0
        %2826 = vmatprep.subr.mxu0 0.0
        %2827 = vmatpush1.msra.mxu0 0.0
        %2828 = vmatprep.subr.mxu0 0.0
        %2829 = vmatpush1.msra.mxu0 0.0
        %2830 = vmatprep.subr.mxu0 0.0
        %2831 = vmatpush1.msra.mxu0 0.0
        %2832 = vmatprep.subr.mxu0 0.0
        %2833 = vmatpush1.msra.mxu0 0.0
        %2834 = vmatprep.subr.mxu0 0.0
        %2835 = vmatpush1.msra.mxu0 0.0
        %2836 = vmatprep.subr.mxu0 0.0
        %2837 = vmatpush1.msra.mxu0 0.0
        %2838 = vmatprep.subr.mxu0 0.0
        %2839 = vmatpush1.msra.mxu0 0.0
        %2840 = vmatprep.subr.mxu0 0.0
        %2841 = vmatpush1.msra.mxu0 0.0
        %2842 = vmatprep.subr.mxu0 0.0
        %2843 = vmatpush1.msra.mxu0 0.0
        %2844 = vmatprep.subr.mxu0 0.0
        %2845 = vmatpush1.msra.mxu0 0.0
        %2846 = vmatprep.subr.mxu0 0.0
        %2847 = vmatpush1.msra.mxu0 0.0
        %2848 = vmatprep.mubr.f32.mxu0 0.0
        %2849 = vmatmul.mubr.f32.gmra.mrb[0].mxu0 %v2779
        %v2850 = vpop.f32.mrb[0].mxu0
        %v2851 = vadd.f32 0.0, %v2850
        %v2852 = vpop.f32.mrb[0].mxu0
        %2853 = vmatprep.mubr.f32.mxu0 0.0
        %2854 = vmatmul.mubr.f32.gmra.mrb[0].mxu0 %v2782
        %v2855 = vpop.f32.mrb[0].mxu0
        %v2856 = vadd.f32 0.0, %v2855
        %v2857 = vpop.f32.mrb[0].mxu0
        %2858 = vdwg.mxu0
        %2861 = vrot.lane.b32.xlu0 %v2851, 64
        %v2862 = vpop.permute.xlu0 %2861
        %2863 = vrot.lane.b32.xlu0 %v2856, 64
        %v2864 = vpop.permute.xlu0 %2863
        %v2867 = vadd.f32 %v2453, %v2862
        %v2868 = vadd.f32 %v2454, %v2864
        %v2869 = vtanh.pop %v2867
        %v2870 = vtanh.pop %v2868
        %v2871 = vmul.f32 %v2698, %v2450
        %v2872 = vmul.f32 %v2700, %v2451
        %v2873 = vsub.f32 1.0, %v2698
        %v2874 = vsub.f32 1.0, %v2700
        %2877 = vrot.lane.b32.xlu0 %v2869, 96
        %v2878 = vpop.permute.xlu0 %2877
        %2879 = vrot.lane.b32.xlu0 %v2870, 96
        %v2880 = vpop.permute.xlu0 %2879
        %v2883 = vmul.f32 %v2873, %v2878
        %v2884 = vmul.f32 %v2874, %v2880
        %v2885 = vadd.f32 %v2871, %v2883
        %v2886 = vadd.f32 %v2872, %v2884
        %s2887 = scalar_lea.vmem %s222, 96
        %v2888 = vld [vmem:[%s2887] sm:$0xff]
        %v2889 = vld [vmem:[%s2887 + $0x8] sm:$0xff]
        %2892 = vrot.lane.b32.xlu0 %v2885, 96
        %v2893 = vpop.permute.xlu0 %2892
        %2894 = vrot.lane.b32.xlu0 %v2886, 96
        %v2895 = vpop.permute.xlu0 %2894
        %2898 = vmatprep.subr.mxu0 0.0
        %2899 = vmatpush1.msra.mxu0 %v2893
        %2900 = vmatprep.subr.mxu0 0.0
        %2901 = vmatpush1.msra.mxu0 %v2895
        %2902 = vmatprep.subr.mxu0 0.0
        %2903 = vmatpush1.msra.mxu0 0.0
        %2904 = vmatprep.subr.mxu0 0.0
        %2905 = vmatpush1.msra.mxu0 0.0
        %2906 = vmatprep.subr.mxu0 0.0
        %2907 = vmatpush1.msra.mxu0 0.0
        %2908 = vmatprep.subr.mxu0 0.0
        %2909 = vmatpush1.msra.mxu0 0.0
        %2910 = vmatprep.subr.mxu0 0.0
        %2911 = vmatpush1.msra.mxu0 0.0
        %2912 = vmatprep.subr.mxu0 0.0
        %2913 = vmatpush1.msra.mxu0 0.0
        %2914 = vmatprep.subr.mxu0 0.0
        %2915 = vmatpush1.msra.mxu0 0.0
        %2916 = vmatprep.subr.mxu0 0.0
        %2917 = vmatpush1.msra.mxu0 0.0
        %2918 = vmatprep.subr.mxu0 0.0
        %2919 = vmatpush1.msra.mxu0 0.0
        %2920 = vmatprep.subr.mxu0 0.0
        %2921 = vmatpush1.msra.mxu0 0.0
        %2922 = vmatprep.subr.mxu0 0.0
        %2923 = vmatpush1.msra.mxu0 0.0
        %2924 = vmatprep.subr.mxu0 0.0
        %2925 = vmatpush1.msra.mxu0 0.0
        %2926 = vmatprep.subr.mxu0 0.0
        %2927 = vmatpush1.msra.mxu0 0.0
        %2928 = vmatprep.subr.mxu0 0.0
        %2929 = vmatpush1.msra.mxu0 0.0
        %2930 = vmatprep.subr.mxu0 0.0
        %2931 = vmatpush1.msra.mxu0 0.0
        %2932 = vmatprep.subr.mxu0 0.0
        %2933 = vmatpush1.msra.mxu0 0.0
        %2934 = vmatprep.subr.mxu0 0.0
        %2935 = vmatpush1.msra.mxu0 0.0
        %2936 = vmatprep.subr.mxu0 0.0
        %2937 = vmatpush1.msra.mxu0 0.0
        %2938 = vmatprep.subr.mxu0 0.0
        %2939 = vmatpush1.msra.mxu0 0.0
        %2940 = vmatprep.subr.mxu0 0.0
        %2941 = vmatpush1.msra.mxu0 0.0
        %2942 = vmatprep.subr.mxu0 0.0
        %2943 = vmatpush1.msra.mxu0 0.0
        %2944 = vmatprep.subr.mxu0 0.0
        %2945 = vmatpush1.msra.mxu0 0.0
        %2946 = vmatprep.subr.mxu0 0.0
        %2947 = vmatpush1.msra.mxu0 0.0
        %2948 = vmatprep.subr.mxu0 0.0
        %2949 = vmatpush1.msra.mxu0 0.0
        %2950 = vmatprep.subr.mxu0 0.0
        %2951 = vmatpush1.msra.mxu0 0.0
        %2952 = vmatprep.subr.mxu0 0.0
        %2953 = vmatpush1.msra.mxu0 0.0
        %2954 = vmatprep.subr.mxu0 0.0
        %2955 = vmatpush1.msra.mxu0 0.0
        %2956 = vmatprep.subr.mxu0 0.0
        %2957 = vmatpush1.msra.mxu0 0.0
        %2958 = vmatprep.subr.mxu0 0.0
        %2959 = vmatpush1.msra.mxu0 0.0
        %2960 = vmatprep.subr.mxu0 0.0
        %2961 = vmatpush1.msra.mxu0 0.0
        %2962 = vmatprep.mubr.f32.mxu0 0.0
        %2963 = vmatmul.mubr.f32.gmra.mrb[0].mxu0 %v270
        %v2964 = vpop.f32.mrb[0].mxu0
        %v2965 = vadd.f32 0.0, %v2964
        %v2966 = vpop.f32.mrb[0].mxu0
        %2967 = vmatprep.mubr.f32.mxu0 0.0
        %2968 = vmatmul.mubr.f32.gmra.mrb[0].mxu0 %v273
        %v2969 = vpop.f32.mrb[0].mxu0
        %v2970 = vadd.f32 0.0, %v2969
        %v2971 = vpop.f32.mrb[0].mxu0
        %2972 = vmatprep.mubr.f32.mxu0 0.0
        %2973 = vmatmul.mubr.f32.gmra.mrb[0].mxu0 %v276
        %v2974 = vpop.f32.mrb[0].mxu0
        %v2975 = vadd.f32 0.0, %v2974
        %v2976 = vpop.f32.mrb[0].mxu0
        %2977 = vmatprep.mubr.f32.mxu0 0.0
        %2978 = vmatmul.mubr.f32.gmra.mrb[0].mxu0 %v279
        %v2979 = vpop.f32.mrb[0].mxu0
        %v2980 = vadd.f32 0.0, %v2979
        %v2981 = vpop.f32.mrb[0].mxu0
        %2982 = vdwg.mxu0
        %v2984 = vsel %vm366, %v2965, 0
        %v2987 = vsel %vm366, %v2970, 0
        %v2990 = vsel %vm366, %v2975, 0
        %v2993 = vsel %vm366, %v2980, 0
        %2995 = vmatprep.subr.mxu0 0.0
        %2996 = vmatpush1.msra.mxu0 %v229
        %2997 = vmatprep.subr.mxu0 0.0
        %2998 = vmatpush1.msra.mxu0 %v230
        %2999 = vmatprep.subr.mxu0 0.0
        %3000 = vmatpush1.msra.mxu0 %v231
        %3001 = vmatprep.subr.mxu0 0.0
        %3002 = vmatpush1.msra.mxu0 %v232
        %3003 = vmatprep.subr.mxu0 0.0
        %3004 = vmatpush1.msra.mxu0 0.0
        %3005 = vmatprep.subr.mxu0 0.0
        %3006 = vmatpush1.msra.mxu0 0.0
        %3007 = vmatprep.subr.mxu0 0.0
        %3008 = vmatpush1.msra.mxu0 0.0
        %3009 = vmatprep.subr.mxu0 0.0
        %3010 = vmatpush1.msra.mxu0 0.0
        %3011 = vmatprep.subr.mxu0 0.0
        %3012 = vmatpush1.msra.mxu0 0.0
        %3013 = vmatprep.subr.mxu0 0.0
        %3014 = vmatpush1.msra.mxu0 0.0
        %3015 = vmatprep.subr.mxu0 0.0
        %3016 = vmatpush1.msra.mxu0 0.0
        %3017 = vmatprep.subr.mxu0 0.0
        %3018 = vmatpush1.msra.mxu0 0.0
        %3019 = vmatprep.subr.mxu0 0.0
        %3020 = vmatpush1.msra.mxu0 0.0
        %3021 = vmatprep.subr.mxu0 0.0
        %3022 = vmatpush1.msra.mxu0 0.0
        %3023 = vmatprep.subr.mxu0 0.0
        %3024 = vmatpush1.msra.mxu0 0.0
        %3025 = vmatprep.subr.mxu0 0.0
        %3026 = vmatpush1.msra.mxu0 0.0
        %3027 = vmatprep.subr.mxu0 0.0
        %3028 = vmatpush1.msra.mxu0 0.0
        %3029 = vmatprep.subr.mxu0 0.0
        %3030 = vmatpush1.msra.mxu0 0.0
        %3031 = vmatprep.subr.mxu0 0.0
        %3032 = vmatpush1.msra.mxu0 0.0
        %3033 = vmatprep.subr.mxu0 0.0
        %3034 = vmatpush1.msra.mxu0 0.0
        %3035 = vmatprep.subr.mxu0 0.0
        %3036 = vmatpush1.msra.mxu0 0.0
        %3037 = vmatprep.subr.mxu0 0.0
        %3038 = vmatpush1.msra.mxu0 0.0
        %3039 = vmatprep.subr.mxu0 0.0
        %3040 = vmatpush1.msra.mxu0 0.0
        %3041 = vmatprep.subr.mxu0 0.0
        %3042 = vmatpush1.msra.mxu0 0.0
        %3043 = vmatprep.subr.mxu0 0.0
        %3044 = vmatpush1.msra.mxu0 0.0
        %3045 = vmatprep.subr.mxu0 0.0
        %3046 = vmatpush1.msra.mxu0 0.0
        %3047 = vmatprep.subr.mxu0 0.0
        %3048 = vmatpush1.msra.mxu0 0.0
        %3049 = vmatprep.subr.mxu0 0.0
        %3050 = vmatpush1.msra.mxu0 0.0
        %3051 = vmatprep.subr.mxu0 0.0
        %3052 = vmatpush1.msra.mxu0 0.0
        %3053 = vmatprep.subr.mxu0 0.0
        %3054 = vmatpush1.msra.mxu0 0.0
        %3055 = vmatprep.subr.mxu0 0.0
        %3056 = vmatpush1.msra.mxu0 0.0
        %3057 = vmatprep.subr.mxu0 0.0
        %3058 = vmatpush1.msra.mxu0 0.0
        %3059 = vmatprep.mubr.f32.mxu0 0.0
        %3060 = vmatmul.mubr.f32.gmra.mrb[0].mxu0 %v2984
        %v3061 = vpop.f32.mrb[0].mxu0
        %v3062 = vadd.f32 0.0, %v3061
        %v3063 = vpop.f32.mrb[0].mxu0
        %3064 = vmatprep.mubr.f32.mxu0 0.0
        %3065 = vmatmul.mubr.f32.gmra.mrb[0].mxu0 %v2987
        %v3066 = vpop.f32.mrb[0].mxu0
        %v3067 = vadd.f32 0.0, %v3066
        %v3068 = vpop.f32.mrb[0].mxu0
        %3069 = vmatprep.mubr.f32.mxu0 0.0
        %3070 = vmatmul.mubr.f32.gmra.mrb[0].mxu0 %v2990
        %v3071 = vpop.f32.mrb[0].mxu0
        %v3072 = vadd.f32 0.0, %v3071
        %v3073 = vpop.f32.mrb[0].mxu0
        %3074 = vmatprep.mubr.f32.mxu0 0.0
        %3075 = vmatmul.mubr.f32.gmra.mrb[0].mxu0 %v2993
        %v3076 = vpop.f32.mrb[0].mxu0
        %v3077 = vadd.f32 0.0, %v3076
        %v3078 = vpop.f32.mrb[0].mxu0
        %3079 = vdwg.mxu0
        %3082 = vrot.lane.b32.xlu0 %v3062, 96
        %v3083 = vpop.permute.xlu0 %3082
        %3084 = vrot.lane.b32.xlu0 %v3067, 96
        %v3085 = vpop.permute.xlu0 %3084
        %v3088 = vsel %vm264, %v3062, %v3083
        %v3089 = vsel %vm265, %v3067, %v3085
        %v3090 = vadd.f32 %v2888, %v3088
        %v3091 = vadd.f32 %v2889, %v3089
        %v3092 = vxor.u32 %v3090, 2147483648
        %v3093 = vxor.u32 %v3091, 2147483648
        %v3094 = vmul.f32 %v3092, 1.442695
        %v3095 = vpow.pop %v3094
        %v3096 = vmul.f32 %v3093, 1.442695
        %v3097 = vpow.pop %v3096
        %v3098 = vadd.f32 %v3095, 1.0
        %v3099 = vadd.f32 %v3097, 1.0
        %v3100 = vrcp.pop %v3098
        %v3101 = vmul.f32 1.0, %v3100
        %v3102 = vrcp.pop %v3099
        %v3103 = vmul.f32 1.0, %v3102
        %3106 = vrot.lane.b32.xlu0 %v3072, 96
        %v3107 = vpop.permute.xlu0 %3106
        %3108 = vrot.lane.b32.xlu0 %v3077, 96
        %v3109 = vpop.permute.xlu0 %3108
        %v3112 = vsel %vm264, %v3072, %v3107
        %v3113 = vsel %vm265, %v3077, %v3109
        %3116 = vrot.lane.b32.xlu0 %v3112, 32
        %v3117 = vpop.permute.xlu0 %3116
        %3118 = vrot.lane.b32.xlu0 %v3113, 32
        %v3119 = vpop.permute.xlu0 %3118
        %v3122 = vadd.f32 %v2888, %v3117
        %v3123 = vadd.f32 %v2889, %v3119
        %v3124 = vxor.u32 %v3122, 2147483648
        %v3125 = vxor.u32 %v3123, 2147483648
        %v3126 = vmul.f32 %v3124, 1.442695
        %v3127 = vpow.pop %v3126
        %v3128 = vmul.f32 %v3125, 1.442695
        %v3129 = vpow.pop %v3128
        %v3130 = vadd.f32 %v3127, 1.0
        %v3131 = vadd.f32 %v3129, 1.0
        %v3132 = vrcp.pop %v3130
        %v3133 = vmul.f32 1.0, %v3132
        %v3134 = vrcp.pop %v3131
        %v3135 = vmul.f32 1.0, %v3134
        %v3136 = vmul.f32 %v3101, %v2893
        %v3137 = vmul.f32 %v3103, %v2895
        %3138 = vmatprep.subr.mxu0 0.0
        %3139 = vmatpush1.msra.mxu0 %v3136
        %3140 = vmatprep.subr.mxu0 0.0
        %3141 = vmatpush1.msra.mxu0 %v3137
        %3142 = vmatprep.subr.mxu0 0.0
        %3143 = vmatpush1.msra.mxu0 0.0
        %3144 = vmatprep.subr.mxu0 0.0
        %3145 = vmatpush1.msra.mxu0 0.0
        %3146 = vmatprep.subr.mxu0 0.0
        %3147 = vmatpush1.msra.mxu0 0.0
        %3148 = vmatprep.subr.mxu0 0.0
        %3149 = vmatpush1.msra.mxu0 0.0
        %3150 = vmatprep.subr.mxu0 0.0
        %3151 = vmatpush1.msra.mxu0 0.0
        %3152 = vmatprep.subr.mxu0 0.0
        %3153 = vmatpush1.msra.mxu0 0.0
        %3154 = vmatprep.subr.mxu0 0.0
        %3155 = vmatpush1.msra.mxu0 0.0
        %3156 = vmatprep.subr.mxu0 0.0
        %3157 = vmatpush1.msra.mxu0 0.0
        %3158 = vmatprep.subr.mxu0 0.0
        %3159 = vmatpush1.msra.mxu0 0.0
        %3160 = vmatprep.subr.mxu0 0.0
        %3161 = vmatpush1.msra.mxu0 0.0
        %3162 = vmatprep.subr.mxu0 0.0
        %3163 = vmatpush1.msra.mxu0 0.0
        %3164 = vmatprep.subr.mxu0 0.0
        %3165 = vmatpush1.msra.mxu0 0.0
        %3166 = vmatprep.subr.mxu0 0.0
        %3167 = vmatpush1.msra.mxu0 0.0
        %3168 = vmatprep.subr.mxu0 0.0
        %3169 = vmatpush1.msra.mxu0 0.0
        %3170 = vmatprep.subr.mxu0 0.0
        %3171 = vmatpush1.msra.mxu0 0.0
        %3172 = vmatprep.subr.mxu0 0.0
        %3173 = vmatpush1.msra.mxu0 0.0
        %3174 = vmatprep.subr.mxu0 0.0
        %3175 = vmatpush1.msra.mxu0 0.0
        %3176 = vmatprep.subr.mxu0 0.0
        %3177 = vmatpush1.msra.mxu0 0.0
        %3178 = vmatprep.subr.mxu0 0.0
        %3179 = vmatpush1.msra.mxu0 0.0
        %3180 = vmatprep.subr.mxu0 0.0
        %3181 = vmatpush1.msra.mxu0 0.0
        %3182 = vmatprep.subr.mxu0 0.0
        %3183 = vmatpush1.msra.mxu0 0.0
        %3184 = vmatprep.subr.mxu0 0.0
        %3185 = vmatpush1.msra.mxu0 0.0
        %3186 = vmatprep.subr.mxu0 0.0
        %3187 = vmatpush1.msra.mxu0 0.0
        %3188 = vmatprep.subr.mxu0 0.0
        %3189 = vmatpush1.msra.mxu0 0.0
        %3190 = vmatprep.subr.mxu0 0.0
        %3191 = vmatpush1.msra.mxu0 0.0
        %3192 = vmatprep.subr.mxu0 0.0
        %3193 = vmatpush1.msra.mxu0 0.0
        %3194 = vmatprep.subr.mxu0 0.0
        %3195 = vmatpush1.msra.mxu0 0.0
        %3196 = vmatprep.subr.mxu0 0.0
        %3197 = vmatpush1.msra.mxu0 0.0
        %3198 = vmatprep.subr.mxu0 0.0
        %3199 = vmatpush1.msra.mxu0 0.0
        %3200 = vmatprep.subr.mxu0 0.0
        %3201 = vmatpush1.msra.mxu0 0.0
        %3202 = vmatprep.mubr.f32.mxu0 0.0
        %3203 = vmatmul.mubr.f32.gmra.mrb[0].mxu0 %v523
        %v3204 = vpop.f32.mrb[0].mxu0
        %v3205 = vadd.f32 0.0, %v3204
        %v3206 = vpop.f32.mrb[0].mxu0
        %3207 = vmatprep.mubr.f32.mxu0 0.0
        %3208 = vmatmul.mubr.f32.gmra.mrb[0].mxu0 %v526
        %v3209 = vpop.f32.mrb[0].mxu0
        %v3210 = vadd.f32 0.0, %v3209
        %v3211 = vpop.f32.mrb[0].mxu0
        %3212 = vdwg.mxu0
        %v3214 = vsel %vm366, %v3205, 0
        %v3217 = vsel %vm366, %v3210, 0
        %3219 = vmatprep.subr.mxu0 0.0
        %3220 = vmatpush1.msra.mxu0 %v233
        %3221 = vmatprep.subr.mxu0 0.0
        %3222 = vmatpush1.msra.mxu0 %v234
        %3223 = vmatprep.subr.mxu0 0.0
        %3224 = vmatpush1.msra.mxu0 %v235
        %3225 = vmatprep.subr.mxu0 0.0
        %3226 = vmatpush1.msra.mxu0 %v236
        %3227 = vmatprep.subr.mxu0 0.0
        %3228 = vmatpush1.msra.mxu0 0.0
        %3229 = vmatprep.subr.mxu0 0.0
        %3230 = vmatpush1.msra.mxu0 0.0
        %3231 = vmatprep.subr.mxu0 0.0
        %3232 = vmatpush1.msra.mxu0 0.0
        %3233 = vmatprep.subr.mxu0 0.0
        %3234 = vmatpush1.msra.mxu0 0.0
        %3235 = vmatprep.subr.mxu0 0.0
        %3236 = vmatpush1.msra.mxu0 0.0
        %3237 = vmatprep.subr.mxu0 0.0
        %3238 = vmatpush1.msra.mxu0 0.0
        %3239 = vmatprep.subr.mxu0 0.0
        %3240 = vmatpush1.msra.mxu0 0.0
        %3241 = vmatprep.subr.mxu0 0.0
        %3242 = vmatpush1.msra.mxu0 0.0
        %3243 = vmatprep.subr.mxu0 0.0
        %3244 = vmatpush1.msra.mxu0 0.0
        %3245 = vmatprep.subr.mxu0 0.0
        %3246 = vmatpush1.msra.mxu0 0.0
        %3247 = vmatprep.subr.mxu0 0.0
        %3248 = vmatpush1.msra.mxu0 0.0
        %3249 = vmatprep.subr.mxu0 0.0
        %3250 = vmatpush1.msra.mxu0 0.0
        %3251 = vmatprep.subr.mxu0 0.0
        %3252 = vmatpush1.msra.mxu0 0.0
        %3253 = vmatprep.subr.mxu0 0.0
        %3254 = vmatpush1.msra.mxu0 0.0
        %3255 = vmatprep.subr.mxu0 0.0
        %3256 = vmatpush1.msra.mxu0 0.0
        %3257 = vmatprep.subr.mxu0 0.0
        %3258 = vmatpush1.msra.mxu0 0.0
        %3259 = vmatprep.subr.mxu0 0.0
        %3260 = vmatpush1.msra.mxu0 0.0
        %3261 = vmatprep.subr.mxu0 0.0
        %3262 = vmatpush1.msra.mxu0 0.0
        %3263 = vmatprep.subr.mxu0 0.0
        %3264 = vmatpush1.msra.mxu0 0.0
        %3265 = vmatprep.subr.mxu0 0.0
        %3266 = vmatpush1.msra.mxu0 0.0
        %3267 = vmatprep.subr.mxu0 0.0
        %3268 = vmatpush1.msra.mxu0 0.0
        %3269 = vmatprep.subr.mxu0 0.0
        %3270 = vmatpush1.msra.mxu0 0.0
        %3271 = vmatprep.subr.mxu0 0.0
        %3272 = vmatpush1.msra.mxu0 0.0
        %3273 = vmatprep.subr.mxu0 0.0
        %3274 = vmatpush1.msra.mxu0 0.0
        %3275 = vmatprep.subr.mxu0 0.0
        %3276 = vmatpush1.msra.mxu0 0.0
        %3277 = vmatprep.subr.mxu0 0.0
        %3278 = vmatpush1.msra.mxu0 0.0
        %3279 = vmatprep.subr.mxu0 0.0
        %3280 = vmatpush1.msra.mxu0 0.0
        %3281 = vmatprep.subr.mxu0 0.0
        %3282 = vmatpush1.msra.mxu0 0.0
        %3283 = vmatprep.mubr.f32.mxu0 0.0
        %3284 = vmatmul.mubr.f32.gmra.mrb[0].mxu0 %v3214
        %v3285 = vpop.f32.mrb[0].mxu0
        %v3286 = vadd.f32 0.0, %v3285
        %v3287 = vpop.f32.mrb[0].mxu0
        %3288 = vmatprep.mubr.f32.mxu0 0.0
        %3289 = vmatmul.mubr.f32.gmra.mrb[0].mxu0 %v3217
        %v3290 = vpop.f32.mrb[0].mxu0
        %v3291 = vadd.f32 0.0, %v3290
        %v3292 = vpop.f32.mrb[0].mxu0
        %3293 = vdwg.mxu0
        %3296 = vrot.lane.b32.xlu0 %v3286, 64
        %v3297 = vpop.permute.xlu0 %3296
        %3298 = vrot.lane.b32.xlu0 %v3291, 64
        %v3299 = vpop.permute.xlu0 %3298
        %v3302 = vadd.f32 %v2888, %v3297
        %v3303 = vadd.f32 %v2889, %v3299
        %v3304 = vtanh.pop %v3302
        %v3305 = vtanh.pop %v3303
        %v3306 = vmul.f32 %v3133, %v2885
        %v3307 = vmul.f32 %v3135, %v2886
        %v3308 = vsub.f32 1.0, %v3133
        %v3309 = vsub.f32 1.0, %v3135
        %3312 = vrot.lane.b32.xlu0 %v3304, 96
        %v3313 = vpop.permute.xlu0 %3312
        %3314 = vrot.lane.b32.xlu0 %v3305, 96
        %v3315 = vpop.permute.xlu0 %3314
        %v3318 = vmul.f32 %v3308, %v3313
        %v3319 = vmul.f32 %v3309, %v3315
        %v3320 = vadd.f32 %v3306, %v3318
        %v3321 = vadd.f32 %v3307, %v3319
        %s3322 = scalar_lea.vmem %s222, 112
        %v3323 = vld [vmem:[%s3322] sm:$0xff]
        %v3324 = vld [vmem:[%s3322 + $0x8] sm:$0xff]
        %3327 = vrot.lane.b32.xlu0 %v3320, 96
        %v3328 = vpop.permute.xlu0 %3327
        %3329 = vrot.lane.b32.xlu0 %v3321, 96
        %v3330 = vpop.permute.xlu0 %3329
        %3333 = vmatprep.subr.mxu0 0.0
        %3334 = vmatpush1.msra.mxu0 %v3328
        %3335 = vmatprep.subr.mxu0 0.0
        %3336 = vmatpush1.msra.mxu0 %v3330
        %3337 = vmatprep.subr.mxu0 0.0
        %3338 = vmatpush1.msra.mxu0 0.0
        %3339 = vmatprep.subr.mxu0 0.0
        %3340 = vmatpush1.msra.mxu0 0.0
        %3341 = vmatprep.subr.mxu0 0.0
        %3342 = vmatpush1.msra.mxu0 0.0
        %3343 = vmatprep.subr.mxu0 0.0
        %3344 = vmatpush1.msra.mxu0 0.0
        %3345 = vmatprep.subr.mxu0 0.0
        %3346 = vmatpush1.msra.mxu0 0.0
        %3347 = vmatprep.subr.mxu0 0.0
        %3348 = vmatpush1.msra.mxu0 0.0
        %3349 = vmatprep.subr.mxu0 0.0
        %3350 = vmatpush1.msra.mxu0 0.0
        %3351 = vmatprep.subr.mxu0 0.0
        %3352 = vmatpush1.msra.mxu0 0.0
        %3353 = vmatprep.subr.mxu0 0.0
        %3354 = vmatpush1.msra.mxu0 0.0
        %3355 = vmatprep.subr.mxu0 0.0
        %3356 = vmatpush1.msra.mxu0 0.0
        %3357 = vmatprep.subr.mxu0 0.0
        %3358 = vmatpush1.msra.mxu0 0.0
        %3359 = vmatprep.subr.mxu0 0.0
        %3360 = vmatpush1.msra.mxu0 0.0
        %3361 = vmatprep.subr.mxu0 0.0
        %3362 = vmatpush1.msra.mxu0 0.0
        %3363 = vmatprep.subr.mxu0 0.0
        %3364 = vmatpush1.msra.mxu0 0.0
        %3365 = vmatprep.subr.mxu0 0.0
        %3366 = vmatpush1.msra.mxu0 0.0
        %3367 = vmatprep.subr.mxu0 0.0
        %3368 = vmatpush1.msra.mxu0 0.0
        %3369 = vmatprep.subr.mxu0 0.0
        %3370 = vmatpush1.msra.mxu0 0.0
        %3371 = vmatprep.subr.mxu0 0.0
        %3372 = vmatpush1.msra.mxu0 0.0
        %3373 = vmatprep.subr.mxu0 0.0
        %3374 = vmatpush1.msra.mxu0 0.0
        %3375 = vmatprep.subr.mxu0 0.0
        %3376 = vmatpush1.msra.mxu0 0.0
        %3377 = vmatprep.subr.mxu0 0.0
        %3378 = vmatpush1.msra.mxu0 0.0
        %3379 = vmatprep.subr.mxu0 0.0
        %3380 = vmatpush1.msra.mxu0 0.0
        %3381 = vmatprep.subr.mxu0 0.0
        %3382 = vmatpush1.msra.mxu0 0.0
        %3383 = vmatprep.subr.mxu0 0.0
        %3384 = vmatpush1.msra.mxu0 0.0
        %3385 = vmatprep.subr.mxu0 0.0
        %3386 = vmatpush1.msra.mxu0 0.0
        %3387 = vmatprep.subr.mxu0 0.0
        %3388 = vmatpush1.msra.mxu0 0.0
        %3389 = vmatprep.subr.mxu0 0.0
        %3390 = vmatpush1.msra.mxu0 0.0
        %3391 = vmatprep.subr.mxu0 0.0
        %3392 = vmatpush1.msra.mxu0 0.0
        %3393 = vmatprep.subr.mxu0 0.0
        %3394 = vmatpush1.msra.mxu0 0.0
        %3395 = vmatprep.subr.mxu0 0.0
        %3396 = vmatpush1.msra.mxu0 0.0
        %3397 = vmatprep.mubr.f32.mxu0 0.0
        %3398 = vmatmul.mubr.f32.gmra.mrb[0].mxu0 %v270
        %v3399 = vpop.f32.mrb[0].mxu0
        %v3400 = vadd.f32 0.0, %v3399
        %v3401 = vpop.f32.mrb[0].mxu0
        %3402 = vmatprep.mubr.f32.mxu0 0.0
        %3403 = vmatmul.mubr.f32.gmra.mrb[0].mxu0 %v273
        %v3404 = vpop.f32.mrb[0].mxu0
        %v3405 = vadd.f32 0.0, %v3404
        %v3406 = vpop.f32.mrb[0].mxu0
        %3407 = vmatprep.mubr.f32.mxu0 0.0
        %3408 = vmatmul.mubr.f32.gmra.mrb[0].mxu0 %v276
        %v3409 = vpop.f32.mrb[0].mxu0
        %v3410 = vadd.f32 0.0, %v3409
        %v3411 = vpop.f32.mrb[0].mxu0
        %3412 = vmatprep.mubr.f32.mxu0 0.0
        %3413 = vmatmul.mubr.f32.gmra.mrb[0].mxu0 %v279
        %v3414 = vpop.f32.mrb[0].mxu0
        %v3415 = vadd.f32 0.0, %v3414
        %v3416 = vpop.f32.mrb[0].mxu0
        %3417 = vdwg.mxu0
        %v3419 = vsel %vm366, %v3400, 0
        %v3422 = vsel %vm366, %v3405, 0
        %v3425 = vsel %vm366, %v3410, 0
        %v3428 = vsel %vm366, %v3415, 0
        %3430 = vmatprep.subr.mxu0 0.0
        %3431 = vmatpush1.msra.mxu0 %v229
        %3432 = vmatprep.subr.mxu0 0.0
        %3433 = vmatpush1.msra.mxu0 %v230
        %3434 = vmatprep.subr.mxu0 0.0
        %3435 = vmatpush1.msra.mxu0 %v231
        %3436 = vmatprep.subr.mxu0 0.0
        %3437 = vmatpush1.msra.mxu0 %v232
        %3438 = vmatprep.subr.mxu0 0.0
        %3439 = vmatpush1.msra.mxu0 0.0
        %3440 = vmatprep.subr.mxu0 0.0
        %3441 = vmatpush1.msra.mxu0 0.0
        %3442 = vmatprep.subr.mxu0 0.0
        %3443 = vmatpush1.msra.mxu0 0.0
        %3444 = vmatprep.subr.mxu0 0.0
        %3445 = vmatpush1.msra.mxu0 0.0
        %3446 = vmatprep.subr.mxu0 0.0
        %3447 = vmatpush1.msra.mxu0 0.0
        %3448 = vmatprep.subr.mxu0 0.0
        %3449 = vmatpush1.msra.mxu0 0.0
        %3450 = vmatprep.subr.mxu0 0.0
        %3451 = vmatpush1.msra.mxu0 0.0
        %3452 = vmatprep.subr.mxu0 0.0
        %3453 = vmatpush1.msra.mxu0 0.0
        %3454 = vmatprep.subr.mxu0 0.0
        %3455 = vmatpush1.msra.mxu0 0.0
        %3456 = vmatprep.subr.mxu0 0.0
        %3457 = vmatpush1.msra.mxu0 0.0
        %3458 = vmatprep.subr.mxu0 0.0
        %3459 = vmatpush1.msra.mxu0 0.0
        %3460 = vmatprep.subr.mxu0 0.0
        %3461 = vmatpush1.msra.mxu0 0.0
        %3462 = vmatprep.subr.mxu0 0.0
        %3463 = vmatpush1.msra.mxu0 0.0
        %3464 = vmatprep.subr.mxu0 0.0
        %3465 = vmatpush1.msra.mxu0 0.0
        %3466 = vmatprep.subr.mxu0 0.0
        %3467 = vmatpush1.msra.mxu0 0.0
        %3468 = vmatprep.subr.mxu0 0.0
        %3469 = vmatpush1.msra.mxu0 0.0
        %3470 = vmatprep.subr.mxu0 0.0
        %3471 = vmatpush1.msra.mxu0 0.0
        %3472 = vmatprep.subr.mxu0 0.0
        %3473 = vmatpush1.msra.mxu0 0.0
        %3474 = vmatprep.subr.mxu0 0.0
        %3475 = vmatpush1.msra.mxu0 0.0
        %3476 = vmatprep.subr.mxu0 0.0
        %3477 = vmatpush1.msra.mxu0 0.0
        %3478 = vmatprep.subr.mxu0 0.0
        %3479 = vmatpush1.msra.mxu0 0.0
        %3480 = vmatprep.subr.mxu0 0.0
        %3481 = vmatpush1.msra.mxu0 0.0
        %3482 = vmatprep.subr.mxu0 0.0
        %3483 = vmatpush1.msra.mxu0 0.0
        %3484 = vmatprep.subr.mxu0 0.0
        %3485 = vmatpush1.msra.mxu0 0.0
        %3486 = vmatprep.subr.mxu0 0.0
        %3487 = vmatpush1.msra.mxu0 0.0
        %3488 = vmatprep.subr.mxu0 0.0
        %3489 = vmatpush1.msra.mxu0 0.0
        %3490 = vmatprep.subr.mxu0 0.0
        %3491 = vmatpush1.msra.mxu0 0.0
        %3492 = vmatprep.subr.mxu0 0.0
        %3493 = vmatpush1.msra.mxu0 0.0
        %3494 = vmatprep.mubr.f32.mxu0 0.0
        %3495 = vmatmul.mubr.f32.gmra.mrb[0].mxu0 %v3419
        %v3496 = vpop.f32.mrb[0].mxu0
        %v3497 = vadd.f32 0.0, %v3496
        %v3498 = vpop.f32.mrb[0].mxu0
        %3499 = vmatprep.mubr.f32.mxu0 0.0
        %3500 = vmatmul.mubr.f32.gmra.mrb[0].mxu0 %v3422
        %v3501 = vpop.f32.mrb[0].mxu0
        %v3502 = vadd.f32 0.0, %v3501
        %v3503 = vpop.f32.mrb[0].mxu0
        %3504 = vmatprep.mubr.f32.mxu0 0.0
        %3505 = vmatmul.mubr.f32.gmra.mrb[0].mxu0 %v3425
        %v3506 = vpop.f32.mrb[0].mxu0
        %v3507 = vadd.f32 0.0, %v3506
        %v3508 = vpop.f32.mrb[0].mxu0
        %3509 = vmatprep.mubr.f32.mxu0 0.0
        %3510 = vmatmul.mubr.f32.gmra.mrb[0].mxu0 %v3428
        %v3511 = vpop.f32.mrb[0].mxu0
        %v3512 = vadd.f32 0.0, %v3511
        %v3513 = vpop.f32.mrb[0].mxu0
        %3514 = vdwg.mxu0
        %3517 = vrot.lane.b32.xlu0 %v3497, 96
        %v3518 = vpop.permute.xlu0 %3517
        %3519 = vrot.lane.b32.xlu0 %v3502, 96
        %v3520 = vpop.permute.xlu0 %3519
        %v3523 = vsel %vm264, %v3497, %v3518
        %v3524 = vsel %vm265, %v3502, %v3520
        %v3525 = vadd.f32 %v3323, %v3523
        %v3526 = vadd.f32 %v3324, %v3524
        %v3527 = vxor.u32 %v3525, 2147483648
        %v3528 = vxor.u32 %v3526, 2147483648
        %v3529 = vmul.f32 %v3527, 1.442695
        %v3530 = vpow.pop %v3529
        %v3531 = vmul.f32 %v3528, 1.442695
        %v3532 = vpow.pop %v3531
        %v3533 = vadd.f32 %v3530, 1.0
        %v3534 = vadd.f32 %v3532, 1.0
        %v3535 = vrcp.pop %v3533
        %v3536 = vmul.f32 1.0, %v3535
        %v3537 = vrcp.pop %v3534
        %v3538 = vmul.f32 1.0, %v3537
        %3541 = vrot.lane.b32.xlu0 %v3507, 96
        %v3542 = vpop.permute.xlu0 %3541
        %3543 = vrot.lane.b32.xlu0 %v3512, 96
        %v3544 = vpop.permute.xlu0 %3543
        %v3547 = vsel %vm264, %v3507, %v3542
        %v3548 = vsel %vm265, %v3512, %v3544
        %3551 = vrot.lane.b32.xlu0 %v3547, 32
        %v3552 = vpop.permute.xlu0 %3551
        %3553 = vrot.lane.b32.xlu0 %v3548, 32
        %v3554 = vpop.permute.xlu0 %3553
        %v3557 = vadd.f32 %v3323, %v3552
        %v3558 = vadd.f32 %v3324, %v3554
        %v3559 = vxor.u32 %v3557, 2147483648
        %v3560 = vxor.u32 %v3558, 2147483648
        %v3561 = vmul.f32 %v3559, 1.442695
        %v3562 = vpow.pop %v3561
        %v3563 = vmul.f32 %v3560, 1.442695
        %v3564 = vpow.pop %v3563
        %v3565 = vadd.f32 %v3562, 1.0
        %v3566 = vadd.f32 %v3564, 1.0
        %v3567 = vrcp.pop %v3565
        %v3568 = vmul.f32 1.0, %v3567
        %v3569 = vrcp.pop %v3566
        %v3570 = vmul.f32 1.0, %v3569
        %v3571 = vmul.f32 %v3536, %v3328
        %v3572 = vmul.f32 %v3538, %v3330
        %3573 = vmatprep.subr.mxu0 0.0
        %3574 = vmatpush1.msra.mxu0 %v3571
        %3575 = vmatprep.subr.mxu0 0.0
        %3576 = vmatpush1.msra.mxu0 %v3572
        %3577 = vmatprep.subr.mxu0 0.0
        %3578 = vmatpush1.msra.mxu0 0.0
        %3579 = vmatprep.subr.mxu0 0.0
        %3580 = vmatpush1.msra.mxu0 0.0
        %3581 = vmatprep.subr.mxu0 0.0
        %3582 = vmatpush1.msra.mxu0 0.0
        %3583 = vmatprep.subr.mxu0 0.0
        %3584 = vmatpush1.msra.mxu0 0.0
        %3585 = vmatprep.subr.mxu0 0.0
        %3586 = vmatpush1.msra.mxu0 0.0
        %3587 = vmatprep.subr.mxu0 0.0
        %3588 = vmatpush1.msra.mxu0 0.0
        %3589 = vmatprep.subr.mxu0 0.0
        %3590 = vmatpush1.msra.mxu0 0.0
        %3591 = vmatprep.subr.mxu0 0.0
        %3592 = vmatpush1.msra.mxu0 0.0
        %3593 = vmatprep.subr.mxu0 0.0
        %3594 = vmatpush1.msra.mxu0 0.0
        %3595 = vmatprep.subr.mxu0 0.0
        %3596 = vmatpush1.msra.mxu0 0.0
        %3597 = vmatprep.subr.mxu0 0.0
        %3598 = vmatpush1.msra.mxu0 0.0
        %3599 = vmatprep.subr.mxu0 0.0
        %3600 = vmatpush1.msra.mxu0 0.0
        %3601 = vmatprep.subr.mxu0 0.0
        %3602 = vmatpush1.msra.mxu0 0.0
        %3603 = vmatprep.subr.mxu0 0.0
        %3604 = vmatpush1.msra.mxu0 0.0
        %3605 = vmatprep.subr.mxu0 0.0
        %3606 = vmatpush1.msra.mxu0 0.0
        %3607 = vmatprep.subr.mxu0 0.0
        %3608 = vmatpush1.msra.mxu0 0.0
        %3609 = vmatprep.subr.mxu0 0.0
        %3610 = vmatpush1.msra.mxu0 0.0
        %3611 = vmatprep.subr.mxu0 0.0
        %3612 = vmatpush1.msra.mxu0 0.0
        %3613 = vmatprep.subr.mxu0 0.0
        %3614 = vmatpush1.msra.mxu0 0.0
        %3615 = vmatprep.subr.mxu0 0.0
        %3616 = vmatpush1.msra.mxu0 0.0
        %3617 = vmatprep.subr.mxu0 0.0
        %3618 = vmatpush1.msra.mxu0 0.0
        %3619 = vmatprep.subr.mxu0 0.0
        %3620 = vmatpush1.msra.mxu0 0.0
        %3621 = vmatprep.subr.mxu0 0.0
        %3622 = vmatpush1.msra.mxu0 0.0
        %3623 = vmatprep.subr.mxu0 0.0
        %3624 = vmatpush1.msra.mxu0 0.0
        %3625 = vmatprep.subr.mxu0 0.0
        %3626 = vmatpush1.msra.mxu0 0.0
        %3627 = vmatprep.subr.mxu0 0.0
        %3628 = vmatpush1.msra.mxu0 0.0
        %3629 = vmatprep.subr.mxu0 0.0
        %3630 = vmatpush1.msra.mxu0 0.0
        %3631 = vmatprep.subr.mxu0 0.0
        %3632 = vmatpush1.msra.mxu0 0.0
        %3633 = vmatprep.subr.mxu0 0.0
        %3634 = vmatpush1.msra.mxu0 0.0
        %3635 = vmatprep.subr.mxu0 0.0
        %3636 = vmatpush1.msra.mxu0 0.0
        %3637 = vmatprep.mubr.f32.mxu0 0.0
        %3638 = vmatmul.mubr.f32.gmra.mrb[0].mxu0 %v523
        %v3639 = vpop.f32.mrb[0].mxu0
        %v3640 = vadd.f32 0.0, %v3639
        %v3641 = vpop.f32.mrb[0].mxu0
        %3642 = vmatprep.mubr.f32.mxu0 0.0
        %3643 = vmatmul.mubr.f32.gmra.mrb[0].mxu0 %v526
        %v3644 = vpop.f32.mrb[0].mxu0
        %v3645 = vadd.f32 0.0, %v3644
        %v3646 = vpop.f32.mrb[0].mxu0
        %3647 = vdwg.mxu0
        %v3649 = vsel %vm366, %v3640, 0
        %v3652 = vsel %vm366, %v3645, 0
        %3654 = vmatprep.subr.mxu0 0.0
        %3655 = vmatpush1.msra.mxu0 %v233
        %3656 = vmatprep.subr.mxu0 0.0
        %3657 = vmatpush1.msra.mxu0 %v234
        %3658 = vmatprep.subr.mxu0 0.0
        %3659 = vmatpush1.msra.mxu0 %v235
        %3660 = vmatprep.subr.mxu0 0.0
        %3661 = vmatpush1.msra.mxu0 %v236
        %3662 = vmatprep.subr.mxu0 0.0
        %3663 = vmatpush1.msra.mxu0 0.0
        %3664 = vmatprep.subr.mxu0 0.0
        %3665 = vmatpush1.msra.mxu0 0.0
        %3666 = vmatprep.subr.mxu0 0.0
        %3667 = vmatpush1.msra.mxu0 0.0
        %3668 = vmatprep.subr.mxu0 0.0
        %3669 = vmatpush1.msra.mxu0 0.0
        %3670 = vmatprep.subr.mxu0 0.0
        %3671 = vmatpush1.msra.mxu0 0.0
        %3672 = vmatprep.subr.mxu0 0.0
        %3673 = vmatpush1.msra.mxu0 0.0
        %3674 = vmatprep.subr.mxu0 0.0
        %3675 = vmatpush1.msra.mxu0 0.0
        %3676 = vmatprep.subr.mxu0 0.0
        %3677 = vmatpush1.msra.mxu0 0.0
        %3678 = vmatprep.subr.mxu0 0.0
        %3679 = vmatpush1.msra.mxu0 0.0
        %3680 = vmatprep.subr.mxu0 0.0
        %3681 = vmatpush1.msra.mxu0 0.0
        %3682 = vmatprep.subr.mxu0 0.0
        %3683 = vmatpush1.msra.mxu0 0.0
        %3684 = vmatprep.subr.mxu0 0.0
        %3685 = vmatpush1.msra.mxu0 0.0
        %3686 = vmatprep.subr.mxu0 0.0
        %3687 = vmatpush1.msra.mxu0 0.0
        %3688 = vmatprep.subr.mxu0 0.0
        %3689 = vmatpush1.msra.mxu0 0.0
        %3690 = vmatprep.subr.mxu0 0.0
        %3691 = vmatpush1.msra.mxu0 0.0
        %3692 = vmatprep.subr.mxu0 0.0
        %3693 = vmatpush1.msra.mxu0 0.0
        %3694 = vmatprep.subr.mxu0 0.0
        %3695 = vmatpush1.msra.mxu0 0.0
        %3696 = vmatprep.subr.mxu0 0.0
        %3697 = vmatpush1.msra.mxu0 0.0
        %3698 = vmatprep.subr.mxu0 0.0
        %3699 = vmatpush1.msra.mxu0 0.0
        %3700 = vmatprep.subr.mxu0 0.0
        %3701 = vmatpush1.msra.mxu0 0.0
        %3702 = vmatprep.subr.mxu0 0.0
        %3703 = vmatpush1.msra.mxu0 0.0
        %3704 = vmatprep.subr.mxu0 0.0
        %3705 = vmatpush1.msra.mxu0 0.0
        %3706 = vmatprep.subr.mxu0 0.0
        %3707 = vmatpush1.msra.mxu0 0.0
        %3708 = vmatprep.subr.mxu0 0.0
        %3709 = vmatpush1.msra.mxu0 0.0
        %3710 = vmatprep.subr.mxu0 0.0
        %3711 = vmatpush1.msra.mxu0 0.0
        %3712 = vmatprep.subr.mxu0 0.0
        %3713 = vmatpush1.msra.mxu0 0.0
        %3714 = vmatprep.subr.mxu0 0.0
        %3715 = vmatpush1.msra.mxu0 0.0
        %3716 = vmatprep.subr.mxu0 0.0
        %3717 = vmatpush1.msra.mxu0 0.0
        %3718 = vmatprep.mubr.f32.mxu0 0.0
        %3719 = vmatmul.mubr.f32.gmra.mrb[0].mxu0 %v3649
        %v3720 = vpop.f32.mrb[0].mxu0
        %v3721 = vadd.f32 0.0, %v3720
        %v3722 = vpop.f32.mrb[0].mxu0
        %3723 = vmatprep.mubr.f32.mxu0 0.0
        %3724 = vmatmul.mubr.f32.gmra.mrb[0].mxu0 %v3652
        %v3725 = vpop.f32.mrb[0].mxu0
        %v3726 = vadd.f32 0.0, %v3725
        %v3727 = vpop.f32.mrb[0].mxu0
        %3728 = vdwg.mxu0
        %3731 = vrot.lane.b32.xlu0 %v3721, 64
        %v3732 = vpop.permute.xlu0 %3731
        %3733 = vrot.lane.b32.xlu0 %v3726, 64
        %v3734 = vpop.permute.xlu0 %3733
        %v3737 = vadd.f32 %v3323, %v3732
        %v3738 = vadd.f32 %v3324, %v3734
        %v3739 = vtanh.pop %v3737
        %v3740 = vtanh.pop %v3738
        %v3741 = vmul.f32 %v3568, %v3320
        %v3742 = vmul.f32 %v3570, %v3321
        %v3743 = vsub.f32 1.0, %v3568
        %v3744 = vsub.f32 1.0, %v3570
        %3747 = vrot.lane.b32.xlu0 %v3739, 96
        %v3748 = vpop.permute.xlu0 %3747
        %3749 = vrot.lane.b32.xlu0 %v3740, 96
        %v3750 = vpop.permute.xlu0 %3749
        %v3753 = vmul.f32 %v3743, %v3748
        %v3754 = vmul.f32 %v3744, %v3750
        %v3755 = vadd.f32 %v3741, %v3753
        %v3756 = vadd.f32 %v3742, %v3754
        %3759 = vrot.lane.b32.xlu0 %v3755, 96
        %v3760 = vpop.permute.xlu0 %3759
        %3761 = vrot.lane.b32.xlu0 %v3756, 96
        %v3762 = vpop.permute.xlu0 %3761
        %3765 = vst.msk [vmem:[%s217] sm:$0xff] %vm366, %v3760
        %3766 = vst.msk [vmem:[%s217 + $0x8] sm:$0xff] %vm366, %v3762
        %s3767 = sand.u32 %s137, 1
        %s3768 = scalar_lea.sflag [#allocation3], %s3767
        %s3769 = sand.u32 %s137, 1
        %s3770 = smul.addr %s3769, 16
        %s3771 = scalar_lea.vmem [#allocation2], %s3770
        // Predicated region
        $region41: #{tgcn_forward.1} parent=39 // pred_check
          %p3772 = pneg %p147
        $region42: #{tgcn_forward.1} parent=39 // pred_check_branch
          %3774 = sbr.rel (%p3772) target = $region44
        $region43: #{tgcn_forward.1} parent=39 // pred_region
          %s3776 = ssub.s32 256, 256
          %3777 = vsyncadd %s3768, %s3776
          %s3778 = smul.addr %s19, 2
          %s3779 = smul.addr %s3778, 128
          %s3780 = scalar_lea.hbm %s5, %s3779
          %s3781 = sshll.u32 %s3771, 4
          %s3782 = int_to_ptr.vmem [resolvable:$true] %s3781
          %3787 = dma.vmem_to_hbm [thread:$0]  %s3782, 256, %s3780, %s3768, 128, 128, 8
        $region44: #{tgcn_forward.1} parent=39 // pred_fallthru
          _
      $region40: #{tgcn_forward.1} parent=5 // pred_fallthru
        _
      %p3788 = scmp.le.s32.totalorder 2, %s14
      // Predicated region
      $region45: #{tgcn_forward.1} parent=5 // pred_check
        %p3789 = pneg %p3788
      $region46: #{tgcn_forward.1} parent=5 // pred_check_branch
        %3791 = sbr.rel (%p3789) target = $region48
      $region47: #{tgcn_forward.1} parent=5 // pred_region
        %s3792 = ssub.s32 %s14, 2
        // Predicated region
        $region49: #{tgcn_forward.1} parent=47 // pred_check
          %p3793 = pneg %p153
        $region50: #{tgcn_forward.1} parent=47 // pred_check_branch
          %3795 = sbr.rel (%p3793) target = $region52
        $region51: #{tgcn_forward.1} parent=47 // pred_region
          %s3796 = sand.u32 %s138, 1
          %s3797 = scalar_lea.sflag [#allocation3], %s3796
          %s3798 = sand.u32 %s138, 1
          %s3799 = smul.addr %s3798, 16
          %s3800 = scalar_lea.vmem [#allocation2], %s3799
          %3801 = dma.done %s3797, 256
        $region52: #{tgcn_forward.1} parent=47 // pred_fallthru
          _
      $region48: #{tgcn_forward.1} parent=5 // pred_fallthru
        _
    $region6: #{tgcn_forward.1} parent=1 // loop_footer
      %s18 = sadd.s32 1, %s14
    $region7: #{tgcn_forward.1} parent=1 // loop_footer_branch
      %13 = sbr.rel target = $region3
    $region8: #{tgcn_forward.1} parent=1 // loop_exit
      _
    %3802 = vsyncpa [#allocation3], 1
    %s3803 = scalar_lea.sflag [#allocation3], 1
    %3804 = vsyncpa %s3803, 1

</llo_original>
